<compile_context>
chip_gen: v6e
topology: v6e:2x2x1
jax: 0.10.0
libtpu: 0.0.40
codegen_flags: <defaults>
</compile_context>

<pallas_src>
import jax
import jax.numpy as jnp
from jax.experimental import pallas as pl
from jax.experimental.pallas import tpu as pltpu

HIDDEN = 50       # nn.LSTM(hidden_size=50)
HP = 128          # hidden padded to one full 128-lane group per gate
G4 = 4 * HP       # padded width of the stacked (i, f, g, o) gate axis
B_TILE = 8        # f32 sublane count; batch rows per grid step


def lstm_model_kernel(x_ref, wih1_ref, whh1_ref, b1_ref, w2_ref, b2_ref,
                      wfc_ref, bfc_ref, out_ref):
    """One batch tile.

    x_ref:    (T*B_TILE, D)   bf16, time-major rows (row = t*B_TILE + b)
    wih1_ref: (D, 4*HP)       bf16, gate-padded layer-1 input weights
    whh1_ref: (HP, 4*HP)      bf16, gate-padded layer-1 recurrent weights
    b1_ref:   (1, 4*HP)       f32,  combined b_ih1 + b_hh1 (gate-padded)
    w2_ref:   (2*HP, 4*HP)    bf16, vstack([W_ih2, W_hh2]) gate-padded
    b2_ref:   (1, 4*HP)       f32,  combined b_ih2 + b_hh2 (gate-padded)
    wfc_ref:  (1, HP)         f32,  fc weight row (padded lanes zero)
    bfc_ref:  (1, 1)          f32
    out_ref:  (B_TILE, 1)     f32
    """
    BP = out_ref.shape[0]
    T = x_ref.shape[0] // BP

    # ---- hoisted layer-1 input projection for all timesteps (one MXU pass) ----
    pre1x = jnp.dot(x_ref[...], wih1_ref[...],
                    preferred_element_type=jnp.float32) + b1_ref[...]

    whh1 = whh1_ref[...]                              # (HP, 4*HP) bf16
    w2 = w2_ref[...]                                  # (2*HP, 4*HP) bf16
    b2 = jnp.broadcast_to(b2_ref[...], (BP, G4))      # hoisted broadcast

    def gates(pre):
        # PyTorch gate order i, f, g, o; each block is a full 128-lane slice.
        i = jax.nn.sigmoid(pre[:, 0 * HP:1 * HP])
        f = jax.nn.sigmoid(pre[:, 1 * HP:2 * HP])
        g = jnp.tanh(pre[:, 2 * HP:3 * HP])
        o = jax.nn.sigmoid(pre[:, 3 * HP:4 * HP])
        return i, f, g, o

    zeros = jnp.zeros((BP, HP), jnp.float32)
    h1, c1, h2, c2 = zeros, zeros, zeros, zeros

    # T is small and static -> fully specialized / unrolled time loop.
    for t in range(T):
        # ---- LSTM layer 1: only the recurrent matmul remains in the loop ----
        pre1 = pre1x[t * BP:(t + 1) * BP, :] + jnp.dot(
            h1.astype(jnp.bfloat16), whh1, preferred_element_type=jnp.float32)
        i1, f1, g1, o1 = gates(pre1)
        c1 = f1 * c1 + i1 * g1
        h1 = o1 * jnp.tanh(c1)

        # ---- LSTM layer 2: input + recurrent matmuls fused along K ----
        hcat = jnp.concatenate([h1, h2], axis=-1).astype(jnp.bfloat16)
        pre2 = jnp.dot(hcat, w2, preferred_element_type=jnp.float32) + b2
        i2, f2, g2, o2 = gates(pre2)
        c2 = f2 * c2 + i2 * g2
        h2 = o2 * jnp.tanh(c2)

    # relu(last h2) -> Linear(50, 1) as VPU multiply + lane reduce -> sigmoid
    y = jnp.maximum(h2, 0.0)
    logits = jnp.sum(y * wfc_ref[...], axis=-1, keepdims=True) + bfc_ref[...]
    out_ref[...] = jax.nn.sigmoid(logits)


# ---------------------------- wrapper / param prep ----------------------------
def _pad_gate_cols(w_t):
    """(in, 4H) -> (in, 4*HP): gate g occupies lanes [g*HP, g*HP + H)."""
    out = jnp.zeros((w_t.shape[0], G4), jnp.float32)
    for g in range(4):
        out = out.at[:, g * HP:g * HP + HIDDEN].set(
            w_t[:, g * HIDDEN:(g + 1) * HIDDEN])
    return out


def _pad_gate_bias(b):
    """(4H,) -> (1, 4*HP) with the same gate layout."""
    out = jnp.zeros((G4,), jnp.float32)
    for g in range(4):
        out = out.at[g * HP:g * HP + HIDDEN].set(b[g * HIDDEN:(g + 1) * HIDDEN])
    return out.reshape(1, G4)


def _pad_rows(w, rows):
    return jnp.zeros((rows, w.shape[1]), jnp.float32).at[:w.shape[0]].set(w)


def lstm_model_forward(x, params):
    """x: (B, T, D) batch-first float32, like the PyTorch module. Returns (B, 1)."""
    B, T, D = x.shape
    (w_ih1, w_hh1, b_ih1, b_hh1,
     w_ih2, w_hh2, b_ih2, b_hh2,
     w_fc, b_fc) = [p.astype(jnp.float32) for p in params]

    # Weights: transpose, pad gates to 128-lane boundaries, fuse layer-2 K.
    wih1_p = _pad_gate_cols(w_ih1.T)                         # (D, 4*HP)
    whh1_p = _pad_rows(_pad_gate_cols(w_hh1.T), HP)          # (HP, 4*HP)
    b1_p = _pad_gate_bias(b_ih1 + b_hh1)                     # (1, 4*HP)

    wih2_p = _pad_rows(_pad_gate_cols(w_ih2.T), HP)          # (HP, 4*HP)
    whh2_p = _pad_rows(_pad_gate_cols(w_hh2.T), HP)          # (HP, 4*HP)
    w2_p = jnp.concatenate([wih2_p, whh2_p], axis=0)         # (2*HP, 4*HP)
    b2_p = _pad_gate_bias(b_ih2 + b_hh2)                     # (1, 4*HP)

    wfc_p = jnp.zeros((1, HP), jnp.float32).at[0, :HIDDEN].set(w_fc.reshape(-1))
    bfc_p = b_fc.reshape(1, 1)

    # Batch padded to full 8-row sublane tiles; time-major flatten per tile.
    BP = ((B + B_TILE - 1) // B_TILE) * B_TILE
    n_tiles = BP // B_TILE
    x_p = jnp.zeros((BP, T, D), jnp.float32).at[:B].set(x.astype(jnp.float32))
    x_tiles = (x_p.reshape(n_tiles, B_TILE, T, D)
               .transpose(0, 2, 1, 3)
               .reshape(n_tiles, T * B_TILE, D)
               .astype(jnp.bfloat16))

    def _full(shape):
        return pl.BlockSpec(shape, lambda c: (0,) * len(shape))

    out = pl.pallas_call(
        lstm_model_kernel,
        out_shape=jax.ShapeDtypeStruct((n_tiles, B_TILE, 1), jnp.float32),
        grid=(n_tiles,),
        in_specs=[
            pl.BlockSpec((None, T * B_TILE, D), lambda c: (c, 0, 0)),
            _full((D, G4)),
            _full((HP, G4)),
            _full((1, G4)),
            _full((2 * HP, G4)),
            _full((1, G4)),
            _full((1, HP)),
            _full((1, 1)),
        ],
        out_specs=pl.BlockSpec((None, B_TILE, 1), lambda c: (c, 0, 0)),
        compiler_params=pltpu.CompilerParams(
            dimension_semantics=("parallel",)),
    )(x_tiles, wih1_p.astype(jnp.bfloat16), whh1_p.astype(jnp.bfloat16), b1_p,
      w2_p.astype(jnp.bfloat16), b2_p, wfc_p, bfc_p)

    return out.reshape(BP, 1)[:B]


# ------------------------------ init + reference ------------------------------
def init_params(key, input_size, hidden=HIDDEN):
    """Deterministic parameter init mirroring nn.LSTM / nn.Linear shapes."""
    ks = jax.random.split(key, 10)
    scale = 1.0 / jnp.sqrt(hidden)

    def u(k, shape):
        return jax.random.uniform(k, shape, jnp.float32, -scale, scale)

    w_ih1 = u(ks[0], (4 * hidden, input_size))
    w_hh1 = u(ks[1], (4 * hidden, hidden))
    b_ih1 = u(ks[2], (4 * hidden,))
    b_hh1 = u(ks[3], (4 * hidden,))
    w_ih2 = u(ks[4], (4 * hidden, hidden))
    w_hh2 = u(ks[5], (4 * hidden, hidden))
    b_ih2 = u(ks[6], (4 * hidden,))
    b_hh2 = u(ks[7], (4 * hidden,))
    w_fc = u(ks[8], (1, hidden))
    b_fc = u(ks[9], (1,))
    return (w_ih1, w_hh1, b_ih1, b_hh1,
            w_ih2, w_hh2, b_ih2, b_hh2,
            w_fc, b_fc)


def lstm_model_reference(x, params):
    """Pure-JAX f32 reference of the PyTorch forward."""
    (w_ih1, w_hh1, b_ih1, b_hh1,
     w_ih2, w_hh2, b_ih2, b_hh2,
     w_fc, b_fc) = params
    B, T, D = x.shape
    H = HIDDEN

    def cell(x_t, h, c, w_ih, w_hh, b_ih, b_hh):
        pre = x_t @ w_ih.T + b_ih + h @ w_hh.T + b_hh
        i = jax.nn.sigmoid(pre[:, 0 * H:1 * H])
        f = jax.nn.sigmoid(pre[:, 1 * H:2 * H])
        g = jnp.tanh(pre[:, 2 * H:3 * H])
        o = jax.nn.sigmoid(pre[:, 3 * H:4 * H])
        c = f * c + i * g
        h = o * jnp.tanh(c)
        return h, c

    h1 = c1 = h2 = c2 = jnp.zeros((B, H), jnp.float32)
    for t in range(T):
        h1, c1 = cell(x[:, t, :], h1, c1, w_ih1, w_hh1, b_ih1, b_hh1)
        h2, c2 = cell(h1, h2, c2, w_ih2, w_hh2, b_ih2, b_hh2)
    y = jnp.maximum(h2, 0.0)
    return jax.nn.sigmoid(y @ w_fc.T + b_fc)


if __name__ == "__main__":
    B, T, D = 2, 8, 16  # batch=2, seq=8, input_size=16
    key = jax.random.PRNGKey(0)
    kx, kp = jax.random.split(key)
    x = jax.random.normal(kx, (B, T, D), jnp.float32)
    params = init_params(kp, D)

    out = lstm_model_forward(x, params)
    out = jax.block_until_ready(out)

    ref = lstm_model_reference(x, params)
    assert out.shape == (B, 1)
    # bf16 MXU operands (f32 accumulate) -> loosened tolerance per review.
    assert jnp.allclose(out, ref, rtol=2e-2, atol=2e-2), (out, ref)

    print("KERNEL_OK")
</pallas_src>

<mosaic_0001>
module attributes {stable_mosaic.version = 11 : i64} {
  func.func @lstm_model_kernel(%arg0: i32, %arg1: memref<1x64x16xbf16, #tpu.memory_space<vmem>>, %arg2: memref<16x512xbf16, #tpu.memory_space<vmem>>, %arg3: memref<128x512xbf16, #tpu.memory_space<vmem>>, %arg4: memref<1x512xf32, #tpu.memory_space<vmem>>, %arg5: memref<256x512xbf16, #tpu.memory_space<vmem>>, %arg6: memref<1x512xf32, #tpu.memory_space<vmem>>, %arg7: memref<1x128xf32, #tpu.memory_space<vmem>>, %arg8: memref<1x1xf32, #tpu.memory_space<vmem>>, %arg9: memref<1x8x1xf32, #tpu.memory_space<vmem>>) attributes {dimension_semantics = [#tpu.dimension_semantics<parallel>], iteration_bounds = array<i64: 1>, scalar_prefetch = 0 : i64, scratch_operands = 0 : i64, tpu.core_type = #tpu.core_type<tc>, window_params = [{transform_indices = @transform_0, window_bounds = array<i64: 1, 64, 16>}, {pipeline_mode = #tpu.pipeline_mode<synchronous>, transform_indices = @transform_1, window_bounds = array<i64: 16, 512>}, {pipeline_mode = #tpu.pipeline_mode<synchronous>, transform_indices = @transform_2, window_bounds = array<i64: 128, 512>}, {pipeline_mode = #tpu.pipeline_mode<synchronous>, transform_indices = @transform_3, window_bounds = array<i64: 1, 512>}, {pipeline_mode = #tpu.pipeline_mode<synchronous>, transform_indices = @transform_4, window_bounds = array<i64: 256, 512>}, {pipeline_mode = #tpu.pipeline_mode<synchronous>, transform_indices = @transform_5, window_bounds = array<i64: 1, 512>}, {pipeline_mode = #tpu.pipeline_mode<synchronous>, transform_indices = @transform_6, window_bounds = array<i64: 1, 128>}, {pipeline_mode = #tpu.pipeline_mode<synchronous>, transform_indices = @transform_7, window_bounds = array<i64: 1, 1>}, {transform_indices = @transform_8, window_bounds = array<i64: 1, 8, 1>}]} {
    %c0 = arith.constant 0 : index
    %c0_0 = arith.constant 0 : index
    %c0_1 = arith.constant 0 : index
    %0 = vector.load %arg1[%c0, %c0_0, %c0_1] : memref<1x64x16xbf16, #tpu.memory_space<vmem>>, vector<1x64x16xbf16>
    %1 = vector.shape_cast %0 : vector<1x64x16xbf16> to vector<64x16xbf16>
    %c0_2 = arith.constant 0 : index
    %c0_3 = arith.constant 0 : index
    %2 = vector.load %arg2[%c0_2, %c0_3] : memref<16x512xbf16, #tpu.memory_space<vmem>>, vector<16x512xbf16>
    %cst = arith.constant dense<0.000000e+00> : vector<64x512xf32>
    %3 = tpu.matmul %1, %2, %cst {dimension_numbers = #tpu.dot_dimension_numbers<[1], [0], [0], [1], [0, 0, 1, 1], [], []>} : vector<64x16xbf16>, vector<16x512xbf16>, vector<64x512xf32> -> vector<64x512xf32>
    %c0_4 = arith.constant 0 : index
    %c0_5 = arith.constant 0 : index
    %4 = vector.load %arg4[%c0_4, %c0_5] : memref<1x512xf32, #tpu.memory_space<vmem>>, vector<1x512xf32>
    %5 = vector.broadcast %4 : vector<1x512xf32> to vector<64x512xf32>
    %6 = arith.addf %3, %5 : vector<64x512xf32>
    %c0_6 = arith.constant 0 : index
    %c0_7 = arith.constant 0 : index
    %7 = vector.load %arg3[%c0_6, %c0_7] : memref<128x512xbf16, #tpu.memory_space<vmem>>, vector<128x512xbf16>
    %c0_8 = arith.constant 0 : index
    %c0_9 = arith.constant 0 : index
    %8 = vector.load %arg5[%c0_8, %c0_9] : memref<256x512xbf16, #tpu.memory_space<vmem>>, vector<256x512xbf16>
    %c0_10 = arith.constant 0 : index
    %c0_11 = arith.constant 0 : index
    %9 = vector.load %arg6[%c0_10, %c0_11] : memref<1x512xf32, #tpu.memory_space<vmem>>, vector<1x512xf32>
    %10 = vector.shape_cast %9 : vector<1x512xf32> to vector<1x512xf32>
    %11 = vector.broadcast %10 : vector<1x512xf32> to vector<8x512xf32>
    %cst_12 = arith.constant 0.000000e+00 : f32
    %12 = vector.broadcast %cst_12 : f32 to vector<8x128xf32>
    %13 = vector.extract_strided_slice %6 {offsets = [0, 0], sizes = [8, 512], strides = [1, 1]} : vector<64x512xf32> to vector<8x512xf32>
    %14 = arith.truncf %12 : vector<8x128xf32> to vector<8x128xbf16>
    %cst_13 = arith.constant dense<0.000000e+00> : vector<8x512xf32>
    %15 = tpu.matmul %14, %7, %cst_13 {dimension_numbers = #tpu.dot_dimension_numbers<[1], [0], [0], [1], [0, 0, 1, 1], [], []>} : vector<8x128xbf16>, vector<128x512xbf16>, vector<8x512xf32> -> vector<8x512xf32>
    %16 = arith.addf %13, %15 : vector<8x512xf32>
    %17 = vector.extract_strided_slice %16 {offsets = [0, 0], sizes = [8, 128], strides = [1, 1]} : vector<8x512xf32> to vector<8x128xf32>
    %18 = arith.negf %17 : vector<8x128xf32>
    %19 = math.exp %18 : vector<8x128xf32>
    %cst_14 = arith.constant 1.000000e+00 : f32
    %20 = vector.broadcast %cst_14 : f32 to vector<8x128xf32>
    %21 = arith.addf %20, %19 : vector<8x128xf32>
    %22 = arith.divf %20, %21 : vector<8x128xf32>
    %23 = vector.extract_strided_slice %16 {offsets = [0, 128], sizes = [8, 128], strides = [1, 1]} : vector<8x512xf32> to vector<8x128xf32>
    %24 = arith.negf %23 : vector<8x128xf32>
    %25 = math.exp %24 : vector<8x128xf32>
    %cst_15 = arith.constant 1.000000e+00 : f32
    %26 = vector.broadcast %cst_15 : f32 to vector<8x128xf32>
    %27 = arith.addf %26, %25 : vector<8x128xf32>
    %28 = arith.divf %26, %27 : vector<8x128xf32>
    %29 = vector.extract_strided_slice %16 {offsets = [0, 256], sizes = [8, 128], strides = [1, 1]} : vector<8x512xf32> to vector<8x128xf32>
    %30 = math.tanh %29 : vector<8x128xf32>
    %31 = vector.extract_strided_slice %16 {offsets = [0, 384], sizes = [8, 128], strides = [1, 1]} : vector<8x512xf32> to vector<8x128xf32>
    %32 = arith.negf %31 : vector<8x128xf32>
    %33 = math.exp %32 : vector<8x128xf32>
    %cst_16 = arith.constant 1.000000e+00 : f32
    %34 = vector.broadcast %cst_16 : f32 to vector<8x128xf32>
    %35 = arith.addf %34, %33 : vector<8x128xf32>
    %36 = arith.divf %34, %35 : vector<8x128xf32>
    %37 = arith.mulf %28, %12 : vector<8x128xf32>
    %38 = arith.mulf %22, %30 : vector<8x128xf32>
    %39 = arith.addf %37, %38 : vector<8x128xf32>
    %40 = math.tanh %39 : vector<8x128xf32>
    %41 = arith.mulf %36, %40 : vector<8x128xf32>
    %42 = tpu.concatenate %41, %12 in 1 : vector<8x128xf32>, vector<8x128xf32> -> vector<8x256xf32>
    %43 = arith.truncf %42 : vector<8x256xf32> to vector<8x256xbf16>
    %cst_17 = arith.constant dense<0.000000e+00> : vector<8x512xf32>
    %44 = tpu.matmul %43, %8, %cst_17 {dimension_numbers = #tpu.dot_dimension_numbers<[1], [0], [0], [1], [0, 0, 1, 1], [], []>} : vector<8x256xbf16>, vector<256x512xbf16>, vector<8x512xf32> -> vector<8x512xf32>
    %45 = arith.addf %44, %11 : vector<8x512xf32>
    %46 = vector.extract_strided_slice %45 {offsets = [0, 0], sizes = [8, 128], strides = [1, 1]} : vector<8x512xf32> to vector<8x128xf32>
    %47 = arith.negf %46 : vector<8x128xf32>
    %48 = math.exp %47 : vector<8x128xf32>
    %cst_18 = arith.constant 1.000000e+00 : f32
    %49 = vector.broadcast %cst_18 : f32 to vector<8x128xf32>
    %50 = arith.addf %49, %48 : vector<8x128xf32>
    %51 = arith.divf %49, %50 : vector<8x128xf32>
    %52 = vector.extract_strided_slice %45 {offsets = [0, 128], sizes = [8, 128], strides = [1, 1]} : vector<8x512xf32> to vector<8x128xf32>
    %53 = arith.negf %52 : vector<8x128xf32>
    %54 = math.exp %53 : vector<8x128xf32>
    %cst_19 = arith.constant 1.000000e+00 : f32
    %55 = vector.broadcast %cst_19 : f32 to vector<8x128xf32>
    %56 = arith.addf %55, %54 : vector<8x128xf32>
    %57 = arith.divf %55, %56 : vector<8x128xf32>
    %58 = vector.extract_strided_slice %45 {offsets = [0, 256], sizes = [8, 128], strides = [1, 1]} : vector<8x512xf32> to vector<8x128xf32>
    %59 = math.tanh %58 : vector<8x128xf32>
    %60 = vector.extract_strided_slice %45 {offsets = [0, 384], sizes = [8, 128], strides = [1, 1]} : vector<8x512xf32> to vector<8x128xf32>
    %61 = arith.negf %60 : vector<8x128xf32>
    %62 = math.exp %61 : vector<8x128xf32>
    %cst_20 = arith.constant 1.000000e+00 : f32
    %63 = vector.broadcast %cst_20 : f32 to vector<8x128xf32>
    %64 = arith.addf %63, %62 : vector<8x128xf32>
    %65 = arith.divf %63, %64 : vector<8x128xf32>
    %66 = arith.mulf %57, %12 : vector<8x128xf32>
    %67 = arith.mulf %51, %59 : vector<8x128xf32>
    %68 = arith.addf %66, %67 : vector<8x128xf32>
    %69 = math.tanh %68 : vector<8x128xf32>
    %70 = arith.mulf %65, %69 : vector<8x128xf32>
    %71 = vector.extract_strided_slice %6 {offsets = [8, 0], sizes = [8, 512], strides = [1, 1]} : vector<64x512xf32> to vector<8x512xf32>
    %72 = arith.truncf %41 : vector<8x128xf32> to vector<8x128xbf16>
    %cst_21 = arith.constant dense<0.000000e+00> : vector<8x512xf32>
    %73 = tpu.matmul %72, %7, %cst_21 {dimension_numbers = #tpu.dot_dimension_numbers<[1], [0], [0], [1], [0, 0, 1, 1], [], []>} : vector<8x128xbf16>, vector<128x512xbf16>, vector<8x512xf32> -> vector<8x512xf32>
    %74 = arith.addf %71, %73 : vector<8x512xf32>
    %75 = vector.extract_strided_slice %74 {offsets = [0, 0], sizes = [8, 128], strides = [1, 1]} : vector<8x512xf32> to vector<8x128xf32>
    %76 = arith.negf %75 : vector<8x128xf32>
    %77 = math.exp %76 : vector<8x128xf32>
    %cst_22 = arith.constant 1.000000e+00 : f32
    %78 = vector.broadcast %cst_22 : f32 to vector<8x128xf32>
    %79 = arith.addf %78, %77 : vector<8x128xf32>
    %80 = arith.divf %78, %79 : vector<8x128xf32>
    %81 = vector.extract_strided_slice %74 {offsets = [0, 128], sizes = [8, 128], strides = [1, 1]} : vector<8x512xf32> to vector<8x128xf32>
    %82 = arith.negf %81 : vector<8x128xf32>
    %83 = math.exp %82 : vector<8x128xf32>
    %cst_23 = arith.constant 1.000000e+00 : f32
    %84 = vector.broadcast %cst_23 : f32 to vector<8x128xf32>
    %85 = arith.addf %84, %83 : vector<8x128xf32>
    %86 = arith.divf %84, %85 : vector<8x128xf32>
    %87 = vector.extract_strided_slice %74 {offsets = [0, 256], sizes = [8, 128], strides = [1, 1]} : vector<8x512xf32> to vector<8x128xf32>
    %88 = math.tanh %87 : vector<8x128xf32>
    %89 = vector.extract_strided_slice %74 {offsets = [0, 384], sizes = [8, 128], strides = [1, 1]} : vector<8x512xf32> to vector<8x128xf32>
    %90 = arith.negf %89 : vector<8x128xf32>
    %91 = math.exp %90 : vector<8x128xf32>
    %cst_24 = arith.constant 1.000000e+00 : f32
    %92 = vector.broadcast %cst_24 : f32 to vector<8x128xf32>
    %93 = arith.addf %92, %91 : vector<8x128xf32>
    %94 = arith.divf %92, %93 : vector<8x128xf32>
    %95 = arith.mulf %86, %39 : vector<8x128xf32>
    %96 = arith.mulf %80, %88 : vector<8x128xf32>
    %97 = arith.addf %95, %96 : vector<8x128xf32>
    %98 = math.tanh %97 : vector<8x128xf32>
    %99 = arith.mulf %94, %98 : vector<8x128xf32>
    %100 = tpu.concatenate %99, %70 in 1 : vector<8x128xf32>, vector<8x128xf32> -> vector<8x256xf32>
    %101 = arith.truncf %100 : vector<8x256xf32> to vector<8x256xbf16>
    %cst_25 = arith.constant dense<0.000000e+00> : vector<8x512xf32>
    %102 = tpu.matmul %101, %8, %cst_25 {dimension_numbers = #tpu.dot_dimension_numbers<[1], [0], [0], [1], [0, 0, 1, 1], [], []>} : vector<8x256xbf16>, vector<256x512xbf16>, vector<8x512xf32> -> vector<8x512xf32>
    %103 = arith.addf %102, %11 : vector<8x512xf32>
    %104 = vector.extract_strided_slice %103 {offsets = [0, 0], sizes = [8, 128], strides = [1, 1]} : vector<8x512xf32> to vector<8x128xf32>
    %105 = arith.negf %104 : vector<8x128xf32>
    %106 = math.exp %105 : vector<8x128xf32>
    %cst_26 = arith.constant 1.000000e+00 : f32
    %107 = vector.broadcast %cst_26 : f32 to vector<8x128xf32>
    %108 = arith.addf %107, %106 : vector<8x128xf32>
    %109 = arith.divf %107, %108 : vector<8x128xf32>
    %110 = vector.extract_strided_slice %103 {offsets = [0, 128], sizes = [8, 128], strides = [1, 1]} : vector<8x512xf32> to vector<8x128xf32>
    %111 = arith.negf %110 : vector<8x128xf32>
    %112 = math.exp %111 : vector<8x128xf32>
    %cst_27 = arith.constant 1.000000e+00 : f32
    %113 = vector.broadcast %cst_27 : f32 to vector<8x128xf32>
    %114 = arith.addf %113, %112 : vector<8x128xf32>
    %115 = arith.divf %113, %114 : vector<8x128xf32>
    %116 = vector.extract_strided_slice %103 {offsets = [0, 256], sizes = [8, 128], strides = [1, 1]} : vector<8x512xf32> to vector<8x128xf32>
    %117 = math.tanh %116 : vector<8x128xf32>
    %118 = vector.extract_strided_slice %103 {offsets = [0, 384], sizes = [8, 128], strides = [1, 1]} : vector<8x512xf32> to vector<8x128xf32>
    %119 = arith.negf %118 : vector<8x128xf32>
    %120 = math.exp %119 : vector<8x128xf32>
    %cst_28 = arith.constant 1.000000e+00 : f32
    %121 = vector.broadcast %cst_28 : f32 to vector<8x128xf32>
    %122 = arith.addf %121, %120 : vector<8x128xf32>
    %123 = arith.divf %121, %122 : vector<8x128xf32>
    %124 = arith.mulf %115, %68 : vector<8x128xf32>
    %125 = arith.mulf %109, %117 : vector<8x128xf32>
    %126 = arith.addf %124, %125 : vector<8x128xf32>
    %127 = math.tanh %126 : vector<8x128xf32>
    %128 = arith.mulf %123, %127 : vector<8x128xf32>
    %129 = vector.extract_strided_slice %6 {offsets = [16, 0], sizes = [8, 512], strides = [1, 1]} : vector<64x512xf32> to vector<8x512xf32>
    %130 = arith.truncf %99 : vector<8x128xf32> to vector<8x128xbf16>
    %cst_29 = arith.constant dense<0.000000e+00> : vector<8x512xf32>
    %131 = tpu.matmul %130, %7, %cst_29 {dimension_numbers = #tpu.dot_dimension_numbers<[1], [0], [0], [1], [0, 0, 1, 1], [], []>} : vector<8x128xbf16>, vector<128x512xbf16>, vector<8x512xf32> -> vector<8x512xf32>
    %132 = arith.addf %129, %131 : vector<8x512xf32>
    %133 = vector.extract_strided_slice %132 {offsets = [0, 0], sizes = [8, 128], strides = [1, 1]} : vector<8x512xf32> to vector<8x128xf32>
    %134 = arith.negf %133 : vector<8x128xf32>
    %135 = math.exp %134 : vector<8x128xf32>
    %cst_30 = arith.constant 1.000000e+00 : f32
    %136 = vector.broadcast %cst_30 : f32 to vector<8x128xf32>
    %137 = arith.addf %136, %135 : vector<8x128xf32>
    %138 = arith.divf %136, %137 : vector<8x128xf32>
    %139 = vector.extract_strided_slice %132 {offsets = [0, 128], sizes = [8, 128], strides = [1, 1]} : vector<8x512xf32> to vector<8x128xf32>
    %140 = arith.negf %139 : vector<8x128xf32>
    %141 = math.exp %140 : vector<8x128xf32>
    %cst_31 = arith.constant 1.000000e+00 : f32
    %142 = vector.broadcast %cst_31 : f32 to vector<8x128xf32>
    %143 = arith.addf %142, %141 : vector<8x128xf32>
    %144 = arith.divf %142, %143 : vector<8x128xf32>
    %145 = vector.extract_strided_slice %132 {offsets = [0, 256], sizes = [8, 128], strides = [1, 1]} : vector<8x512xf32> to vector<8x128xf32>
    %146 = math.tanh %145 : vector<8x128xf32>
    %147 = vector.extract_strided_slice %132 {offsets = [0, 384], sizes = [8, 128], strides = [1, 1]} : vector<8x512xf32> to vector<8x128xf32>
    %148 = arith.negf %147 : vector<8x128xf32>
    %149 = math.exp %148 : vector<8x128xf32>
    %cst_32 = arith.constant 1.000000e+00 : f32
    %150 = vector.broadcast %cst_32 : f32 to vector<8x128xf32>
    %151 = arith.addf %150, %149 : vector<8x128xf32>
    %152 = arith.divf %150, %151 : vector<8x128xf32>
    %153 = arith.mulf %144, %97 : vector<8x128xf32>
    %154 = arith.mulf %138, %146 : vector<8x128xf32>
    %155 = arith.addf %153, %154 : vector<8x128xf32>
    %156 = math.tanh %155 : vector<8x128xf32>
    %157 = arith.mulf %152, %156 : vector<8x128xf32>
    %158 = tpu.concatenate %157, %128 in 1 : vector<8x128xf32>, vector<8x128xf32> -> vector<8x256xf32>
    %159 = arith.truncf %158 : vector<8x256xf32> to vector<8x256xbf16>
    %cst_33 = arith.constant dense<0.000000e+00> : vector<8x512xf32>
    %160 = tpu.matmul %159, %8, %cst_33 {dimension_numbers = #tpu.dot_dimension_numbers<[1], [0], [0], [1], [0, 0, 1, 1], [], []>} : vector<8x256xbf16>, vector<256x512xbf16>, vector<8x512xf32> -> vector<8x512xf32>
    %161 = arith.addf %160, %11 : vector<8x512xf32>
    %162 = vector.extract_strided_slice %161 {offsets = [0, 0], sizes = [8, 128], strides = [1, 1]} : vector<8x512xf32> to vector<8x128xf32>
    %163 = arith.negf %162 : vector<8x128xf32>
    %164 = math.exp %163 : vector<8x128xf32>
    %cst_34 = arith.constant 1.000000e+00 : f32
    %165 = vector.broadcast %cst_34 : f32 to vector<8x128xf32>
    %166 = arith.addf %165, %164 : vector<8x128xf32>
    %167 = arith.divf %165, %166 : vector<8x128xf32>
    %168 = vector.extract_strided_slice %161 {offsets = [0, 128], sizes = [8, 128], strides = [1, 1]} : vector<8x512xf32> to vector<8x128xf32>
    %169 = arith.negf %168 : vector<8x128xf32>
    %170 = math.exp %169 : vector<8x128xf32>
    %cst_35 = arith.constant 1.000000e+00 : f32
    %171 = vector.broadcast %cst_35 : f32 to vector<8x128xf32>
    %172 = arith.addf %171, %170 : vector<8x128xf32>
    %173 = arith.divf %171, %172 : vector<8x128xf32>
    %174 = vector.extract_strided_slice %161 {offsets = [0, 256], sizes = [8, 128], strides = [1, 1]} : vector<8x512xf32> to vector<8x128xf32>
    %175 = math.tanh %174 : vector<8x128xf32>
    %176 = vector.extract_strided_slice %161 {offsets = [0, 384], sizes = [8, 128], strides = [1, 1]} : vector<8x512xf32> to vector<8x128xf32>
    %177 = arith.negf %176 : vector<8x128xf32>
    %178 = math.exp %177 : vector<8x128xf32>
    %cst_36 = arith.constant 1.000000e+00 : f32
    %179 = vector.broadcast %cst_36 : f32 to vector<8x128xf32>
    %180 = arith.addf %179, %178 : vector<8x128xf32>
    %181 = arith.divf %179, %180 : vector<8x128xf32>
    %182 = arith.mulf %173, %126 : vector<8x128xf32>
    %183 = arith.mulf %167, %175 : vector<8x128xf32>
    %184 = arith.addf %182, %183 : vector<8x128xf32>
    %185 = math.tanh %184 : vector<8x128xf32>
    %186 = arith.mulf %181, %185 : vector<8x128xf32>
    %187 = vector.extract_strided_slice %6 {offsets = [24, 0], sizes = [8, 512], strides = [1, 1]} : vector<64x512xf32> to vector<8x512xf32>
    %188 = arith.truncf %157 : vector<8x128xf32> to vector<8x128xbf16>
    %cst_37 = arith.constant dense<0.000000e+00> : vector<8x512xf32>
    %189 = tpu.matmul %188, %7, %cst_37 {dimension_numbers = #tpu.dot_dimension_numbers<[1], [0], [0], [1], [0, 0, 1, 1], [], []>} : vector<8x128xbf16>, vector<128x512xbf16>, vector<8x512xf32> -> vector<8x512xf32>
    %190 = arith.addf %187, %189 : vector<8x512xf32>
    %191 = vector.extract_strided_slice %190 {offsets = [0, 0], sizes = [8, 128], strides = [1, 1]} : vector<8x512xf32> to vector<8x128xf32>
    %192 = arith.negf %191 : vector<8x128xf32>
    %193 = math.exp %192 : vector<8x128xf32>
    %cst_38 = arith.constant 1.000000e+00 : f32
    %194 = vector.broadcast %cst_38 : f32 to vector<8x128xf32>
    %195 = arith.addf %194, %193 : vector<8x128xf32>
    %196 = arith.divf %194, %195 : vector<8x128xf32>
    %197 = vector.extract_strided_slice %190 {offsets = [0, 128], sizes = [8, 128], strides = [1, 1]} : vector<8x512xf32> to vector<8x128xf32>
    %198 = arith.negf %197 : vector<8x128xf32>
    %199 = math.exp %198 : vector<8x128xf32>
    %cst_39 = arith.constant 1.000000e+00 : f32
    %200 = vector.broadcast %cst_39 : f32 to vector<8x128xf32>
    %201 = arith.addf %200, %199 : vector<8x128xf32>
    %202 = arith.divf %200, %201 : vector<8x128xf32>
    %203 = vector.extract_strided_slice %190 {offsets = [0, 256], sizes = [8, 128], strides = [1, 1]} : vector<8x512xf32> to vector<8x128xf32>
    %204 = math.tanh %203 : vector<8x128xf32>
    %205 = vector.extract_strided_slice %190 {offsets = [0, 384], sizes = [8, 128], strides = [1, 1]} : vector<8x512xf32> to vector<8x128xf32>
    %206 = arith.negf %205 : vector<8x128xf32>
    %207 = math.exp %206 : vector<8x128xf32>
    %cst_40 = arith.constant 1.000000e+00 : f32
    %208 = vector.broadcast %cst_40 : f32 to vector<8x128xf32>
    %209 = arith.addf %208, %207 : vector<8x128xf32>
    %210 = arith.divf %208, %209 : vector<8x128xf32>
    %211 = arith.mulf %202, %155 : vector<8x128xf32>
    %212 = arith.mulf %196, %204 : vector<8x128xf32>
    %213 = arith.addf %211, %212 : vector<8x128xf32>
    %214 = math.tanh %213 : vector<8x128xf32>
    %215 = arith.mulf %210, %214 : vector<8x128xf32>
    %216 = tpu.concatenate %215, %186 in 1 : vector<8x128xf32>, vector<8x128xf32> -> vector<8x256xf32>
    %217 = arith.truncf %216 : vector<8x256xf32> to vector<8x256xbf16>
    %cst_41 = arith.constant dense<0.000000e+00> : vector<8x512xf32>
    %218 = tpu.matmul %217, %8, %cst_41 {dimension_numbers = #tpu.dot_dimension_numbers<[1], [0], [0], [1], [0, 0, 1, 1], [], []>} : vector<8x256xbf16>, vector<256x512xbf16>, vector<8x512xf32> -> vector<8x512xf32>
    %219 = arith.addf %218, %11 : vector<8x512xf32>
    %220 = vector.extract_strided_slice %219 {offsets = [0, 0], sizes = [8, 128], strides = [1, 1]} : vector<8x512xf32> to vector<8x128xf32>
    %221 = arith.negf %220 : vector<8x128xf32>
    %222 = math.exp %221 : vector<8x128xf32>
    %cst_42 = arith.constant 1.000000e+00 : f32
    %223 = vector.broadcast %cst_42 : f32 to vector<8x128xf32>
    %224 = arith.addf %223, %222 : vector<8x128xf32>
    %225 = arith.divf %223, %224 : vector<8x128xf32>
    %226 = vector.extract_strided_slice %219 {offsets = [0, 128], sizes = [8, 128], strides = [1, 1]} : vector<8x512xf32> to vector<8x128xf32>
    %227 = arith.negf %226 : vector<8x128xf32>
    %228 = math.exp %227 : vector<8x128xf32>
    %cst_43 = arith.constant 1.000000e+00 : f32
    %229 = vector.broadcast %cst_43 : f32 to vector<8x128xf32>
    %230 = arith.addf %229, %228 : vector<8x128xf32>
    %231 = arith.divf %229, %230 : vector<8x128xf32>
    %232 = vector.extract_strided_slice %219 {offsets = [0, 256], sizes = [8, 128], strides = [1, 1]} : vector<8x512xf32> to vector<8x128xf32>
    %233 = math.tanh %232 : vector<8x128xf32>
    %234 = vector.extract_strided_slice %219 {offsets = [0, 384], sizes = [8, 128], strides = [1, 1]} : vector<8x512xf32> to vector<8x128xf32>
    %235 = arith.negf %234 : vector<8x128xf32>
    %236 = math.exp %235 : vector<8x128xf32>
    %cst_44 = arith.constant 1.000000e+00 : f32
    %237 = vector.broadcast %cst_44 : f32 to vector<8x128xf32>
    %238 = arith.addf %237, %236 : vector<8x128xf32>
    %239 = arith.divf %237, %238 : vector<8x128xf32>
    %240 = arith.mulf %231, %184 : vector<8x128xf32>
    %241 = arith.mulf %225, %233 : vector<8x128xf32>
    %242 = arith.addf %240, %241 : vector<8x128xf32>
    %243 = math.tanh %242 : vector<8x128xf32>
    %244 = arith.mulf %239, %243 : vector<8x128xf32>
    %245 = vector.extract_strided_slice %6 {offsets = [32, 0], sizes = [8, 512], strides = [1, 1]} : vector<64x512xf32> to vector<8x512xf32>
    %246 = arith.truncf %215 : vector<8x128xf32> to vector<8x128xbf16>
    %cst_45 = arith.constant dense<0.000000e+00> : vector<8x512xf32>
    %247 = tpu.matmul %246, %7, %cst_45 {dimension_numbers = #tpu.dot_dimension_numbers<[1], [0], [0], [1], [0, 0, 1, 1], [], []>} : vector<8x128xbf16>, vector<128x512xbf16>, vector<8x512xf32> -> vector<8x512xf32>
    %248 = arith.addf %245, %247 : vector<8x512xf32>
    %249 = vector.extract_strided_slice %248 {offsets = [0, 0], sizes = [8, 128], strides = [1, 1]} : vector<8x512xf32> to vector<8x128xf32>
    %250 = arith.negf %249 : vector<8x128xf32>
    %251 = math.exp %250 : vector<8x128xf32>
    %cst_46 = arith.constant 1.000000e+00 : f32
    %252 = vector.broadcast %cst_46 : f32 to vector<8x128xf32>
    %253 = arith.addf %252, %251 : vector<8x128xf32>
    %254 = arith.divf %252, %253 : vector<8x128xf32>
    %255 = vector.extract_strided_slice %248 {offsets = [0, 128], sizes = [8, 128], strides = [1, 1]} : vector<8x512xf32> to vector<8x128xf32>
    %256 = arith.negf %255 : vector<8x128xf32>
    %257 = math.exp %256 : vector<8x128xf32>
    %cst_47 = arith.constant 1.000000e+00 : f32
    %258 = vector.broadcast %cst_47 : f32 to vector<8x128xf32>
    %259 = arith.addf %258, %257 : vector<8x128xf32>
    %260 = arith.divf %258, %259 : vector<8x128xf32>
    %261 = vector.extract_strided_slice %248 {offsets = [0, 256], sizes = [8, 128], strides = [1, 1]} : vector<8x512xf32> to vector<8x128xf32>
    %262 = math.tanh %261 : vector<8x128xf32>
    %263 = vector.extract_strided_slice %248 {offsets = [0, 384], sizes = [8, 128], strides = [1, 1]} : vector<8x512xf32> to vector<8x128xf32>
    %264 = arith.negf %263 : vector<8x128xf32>
    %265 = math.exp %264 : vector<8x128xf32>
    %cst_48 = arith.constant 1.000000e+00 : f32
    %266 = vector.broadcast %cst_48 : f32 to vector<8x128xf32>
    %267 = arith.addf %266, %265 : vector<8x128xf32>
    %268 = arith.divf %266, %267 : vector<8x128xf32>
    %269 = arith.mulf %260, %213 : vector<8x128xf32>
    %270 = arith.mulf %254, %262 : vector<8x128xf32>
    %271 = arith.addf %269, %270 : vector<8x128xf32>
    %272 = math.tanh %271 : vector<8x128xf32>
    %273 = arith.mulf %268, %272 : vector<8x128xf32>
    %274 = tpu.concatenate %273, %244 in 1 : vector<8x128xf32>, vector<8x128xf32> -> vector<8x256xf32>
    %275 = arith.truncf %274 : vector<8x256xf32> to vector<8x256xbf16>
    %cst_49 = arith.constant dense<0.000000e+00> : vector<8x512xf32>
    %276 = tpu.matmul %275, %8, %cst_49 {dimension_numbers = #tpu.dot_dimension_numbers<[1], [0], [0], [1], [0, 0, 1, 1], [], []>} : vector<8x256xbf16>, vector<256x512xbf16>, vector<8x512xf32> -> vector<8x512xf32>
    %277 = arith.addf %276, %11 : vector<8x512xf32>
    %278 = vector.extract_strided_slice %277 {offsets = [0, 0], sizes = [8, 128], strides = [1, 1]} : vector<8x512xf32> to vector<8x128xf32>
    %279 = arith.negf %278 : vector<8x128xf32>
    %280 = math.exp %279 : vector<8x128xf32>
    %cst_50 = arith.constant 1.000000e+00 : f32
    %281 = vector.broadcast %cst_50 : f32 to vector<8x128xf32>
    %282 = arith.addf %281, %280 : vector<8x128xf32>
    %283 = arith.divf %281, %282 : vector<8x128xf32>
    %284 = vector.extract_strided_slice %277 {offsets = [0, 128], sizes = [8, 128], strides = [1, 1]} : vector<8x512xf32> to vector<8x128xf32>
    %285 = arith.negf %284 : vector<8x128xf32>
    %286 = math.exp %285 : vector<8x128xf32>
    %cst_51 = arith.constant 1.000000e+00 : f32
    %287 = vector.broadcast %cst_51 : f32 to vector<8x128xf32>
    %288 = arith.addf %287, %286 : vector<8x128xf32>
    %289 = arith.divf %287, %288 : vector<8x128xf32>
    %290 = vector.extract_strided_slice %277 {offsets = [0, 256], sizes = [8, 128], strides = [1, 1]} : vector<8x512xf32> to vector<8x128xf32>
    %291 = math.tanh %290 : vector<8x128xf32>
    %292 = vector.extract_strided_slice %277 {offsets = [0, 384], sizes = [8, 128], strides = [1, 1]} : vector<8x512xf32> to vector<8x128xf32>
    %293 = arith.negf %292 : vector<8x128xf32>
    %294 = math.exp %293 : vector<8x128xf32>
    %cst_52 = arith.constant 1.000000e+00 : f32
    %295 = vector.broadcast %cst_52 : f32 to vector<8x128xf32>
    %296 = arith.addf %295, %294 : vector<8x128xf32>
    %297 = arith.divf %295, %296 : vector<8x128xf32>
    %298 = arith.mulf %289, %242 : vector<8x128xf32>
    %299 = arith.mulf %283, %291 : vector<8x128xf32>
    %300 = arith.addf %298, %299 : vector<8x128xf32>
    %301 = math.tanh %300 : vector<8x128xf32>
    %302 = arith.mulf %297, %301 : vector<8x128xf32>
    %303 = vector.extract_strided_slice %6 {offsets = [40, 0], sizes = [8, 512], strides = [1, 1]} : vector<64x512xf32> to vector<8x512xf32>
    %304 = arith.truncf %273 : vector<8x128xf32> to vector<8x128xbf16>
    %cst_53 = arith.constant dense<0.000000e+00> : vector<8x512xf32>
    %305 = tpu.matmul %304, %7, %cst_53 {dimension_numbers = #tpu.dot_dimension_numbers<[1], [0], [0], [1], [0, 0, 1, 1], [], []>} : vector<8x128xbf16>, vector<128x512xbf16>, vector<8x512xf32> -> vector<8x512xf32>
    %306 = arith.addf %303, %305 : vector<8x512xf32>
    %307 = vector.extract_strided_slice %306 {offsets = [0, 0], sizes = [8, 128], strides = [1, 1]} : vector<8x512xf32> to vector<8x128xf32>
    %308 = arith.negf %307 : vector<8x128xf32>
    %309 = math.exp %308 : vector<8x128xf32>
    %cst_54 = arith.constant 1.000000e+00 : f32
    %310 = vector.broadcast %cst_54 : f32 to vector<8x128xf32>
    %311 = arith.addf %310, %309 : vector<8x128xf32>
    %312 = arith.divf %310, %311 : vector<8x128xf32>
    %313 = vector.extract_strided_slice %306 {offsets = [0, 128], sizes = [8, 128], strides = [1, 1]} : vector<8x512xf32> to vector<8x128xf32>
    %314 = arith.negf %313 : vector<8x128xf32>
    %315 = math.exp %314 : vector<8x128xf32>
    %cst_55 = arith.constant 1.000000e+00 : f32
    %316 = vector.broadcast %cst_55 : f32 to vector<8x128xf32>
    %317 = arith.addf %316, %315 : vector<8x128xf32>
    %318 = arith.divf %316, %317 : vector<8x128xf32>
    %319 = vector.extract_strided_slice %306 {offsets = [0, 256], sizes = [8, 128], strides = [1, 1]} : vector<8x512xf32> to vector<8x128xf32>
    %320 = math.tanh %319 : vector<8x128xf32>
    %321 = vector.extract_strided_slice %306 {offsets = [0, 384], sizes = [8, 128], strides = [1, 1]} : vector<8x512xf32> to vector<8x128xf32>
    %322 = arith.negf %321 : vector<8x128xf32>
    %323 = math.exp %322 : vector<8x128xf32>
    %cst_56 = arith.constant 1.000000e+00 : f32
    %324 = vector.broadcast %cst_56 : f32 to vector<8x128xf32>
    %325 = arith.addf %324, %323 : vector<8x128xf32>
    %326 = arith.divf %324, %325 : vector<8x128xf32>
    %327 = arith.mulf %318, %271 : vector<8x128xf32>
    %328 = arith.mulf %312, %320 : vector<8x128xf32>
    %329 = arith.addf %327, %328 : vector<8x128xf32>
    %330 = math.tanh %329 : vector<8x128xf32>
    %331 = arith.mulf %326, %330 : vector<8x128xf32>
    %332 = tpu.concatenate %331, %302 in 1 : vector<8x128xf32>, vector<8x128xf32> -> vector<8x256xf32>
    %333 = arith.truncf %332 : vector<8x256xf32> to vector<8x256xbf16>
    %cst_57 = arith.constant dense<0.000000e+00> : vector<8x512xf32>
    %334 = tpu.matmul %333, %8, %cst_57 {dimension_numbers = #tpu.dot_dimension_numbers<[1], [0], [0], [1], [0, 0, 1, 1], [], []>} : vector<8x256xbf16>, vector<256x512xbf16>, vector<8x512xf32> -> vector<8x512xf32>
    %335 = arith.addf %334, %11 : vector<8x512xf32>
    %336 = vector.extract_strided_slice %335 {offsets = [0, 0], sizes = [8, 128], strides = [1, 1]} : vector<8x512xf32> to vector<8x128xf32>
    %337 = arith.negf %336 : vector<8x128xf32>
    %338 = math.exp %337 : vector<8x128xf32>
    %cst_58 = arith.constant 1.000000e+00 : f32
    %339 = vector.broadcast %cst_58 : f32 to vector<8x128xf32>
    %340 = arith.addf %339, %338 : vector<8x128xf32>
    %341 = arith.divf %339, %340 : vector<8x128xf32>
    %342 = vector.extract_strided_slice %335 {offsets = [0, 128], sizes = [8, 128], strides = [1, 1]} : vector<8x512xf32> to vector<8x128xf32>
    %343 = arith.negf %342 : vector<8x128xf32>
    %344 = math.exp %343 : vector<8x128xf32>
    %cst_59 = arith.constant 1.000000e+00 : f32
    %345 = vector.broadcast %cst_59 : f32 to vector<8x128xf32>
    %346 = arith.addf %345, %344 : vector<8x128xf32>
    %347 = arith.divf %345, %346 : vector<8x128xf32>
    %348 = vector.extract_strided_slice %335 {offsets = [0, 256], sizes = [8, 128], strides = [1, 1]} : vector<8x512xf32> to vector<8x128xf32>
    %349 = math.tanh %348 : vector<8x128xf32>
    %350 = vector.extract_strided_slice %335 {offsets = [0, 384], sizes = [8, 128], strides = [1, 1]} : vector<8x512xf32> to vector<8x128xf32>
    %351 = arith.negf %350 : vector<8x128xf32>
    %352 = math.exp %351 : vector<8x128xf32>
    %cst_60 = arith.constant 1.000000e+00 : f32
    %353 = vector.broadcast %cst_60 : f32 to vector<8x128xf32>
    %354 = arith.addf %353, %352 : vector<8x128xf32>
    %355 = arith.divf %353, %354 : vector<8x128xf32>
    %356 = arith.mulf %347, %300 : vector<8x128xf32>
    %357 = arith.mulf %341, %349 : vector<8x128xf32>
    %358 = arith.addf %356, %357 : vector<8x128xf32>
    %359 = math.tanh %358 : vector<8x128xf32>
    %360 = arith.mulf %355, %359 : vector<8x128xf32>
    %361 = vector.extract_strided_slice %6 {offsets = [48, 0], sizes = [8, 512], strides = [1, 1]} : vector<64x512xf32> to vector<8x512xf32>
    %362 = arith.truncf %331 : vector<8x128xf32> to vector<8x128xbf16>
    %cst_61 = arith.constant dense<0.000000e+00> : vector<8x512xf32>
    %363 = tpu.matmul %362, %7, %cst_61 {dimension_numbers = #tpu.dot_dimension_numbers<[1], [0], [0], [1], [0, 0, 1, 1], [], []>} : vector<8x128xbf16>, vector<128x512xbf16>, vector<8x512xf32> -> vector<8x512xf32>
    %364 = arith.addf %361, %363 : vector<8x512xf32>
    %365 = vector.extract_strided_slice %364 {offsets = [0, 0], sizes = [8, 128], strides = [1, 1]} : vector<8x512xf32> to vector<8x128xf32>
    %366 = arith.negf %365 : vector<8x128xf32>
    %367 = math.exp %366 : vector<8x128xf32>
    %cst_62 = arith.constant 1.000000e+00 : f32
    %368 = vector.broadcast %cst_62 : f32 to vector<8x128xf32>
    %369 = arith.addf %368, %367 : vector<8x128xf32>
    %370 = arith.divf %368, %369 : vector<8x128xf32>
    %371 = vector.extract_strided_slice %364 {offsets = [0, 128], sizes = [8, 128], strides = [1, 1]} : vector<8x512xf32> to vector<8x128xf32>
    %372 = arith.negf %371 : vector<8x128xf32>
    %373 = math.exp %372 : vector<8x128xf32>
    %cst_63 = arith.constant 1.000000e+00 : f32
    %374 = vector.broadcast %cst_63 : f32 to vector<8x128xf32>
    %375 = arith.addf %374, %373 : vector<8x128xf32>
    %376 = arith.divf %374, %375 : vector<8x128xf32>
    %377 = vector.extract_strided_slice %364 {offsets = [0, 256], sizes = [8, 128], strides = [1, 1]} : vector<8x512xf32> to vector<8x128xf32>
    %378 = math.tanh %377 : vector<8x128xf32>
    %379 = vector.extract_strided_slice %364 {offsets = [0, 384], sizes = [8, 128], strides = [1, 1]} : vector<8x512xf32> to vector<8x128xf32>
    %380 = arith.negf %379 : vector<8x128xf32>
    %381 = math.exp %380 : vector<8x128xf32>
    %cst_64 = arith.constant 1.000000e+00 : f32
    %382 = vector.broadcast %cst_64 : f32 to vector<8x128xf32>
    %383 = arith.addf %382, %381 : vector<8x128xf32>
    %384 = arith.divf %382, %383 : vector<8x128xf32>
    %385 = arith.mulf %376, %329 : vector<8x128xf32>
    %386 = arith.mulf %370, %378 : vector<8x128xf32>
    %387 = arith.addf %385, %386 : vector<8x128xf32>
    %388 = math.tanh %387 : vector<8x128xf32>
    %389 = arith.mulf %384, %388 : vector<8x128xf32>
    %390 = tpu.concatenate %389, %360 in 1 : vector<8x128xf32>, vector<8x128xf32> -> vector<8x256xf32>
    %391 = arith.truncf %390 : vector<8x256xf32> to vector<8x256xbf16>
    %cst_65 = arith.constant dense<0.000000e+00> : vector<8x512xf32>
    %392 = tpu.matmul %391, %8, %cst_65 {dimension_numbers = #tpu.dot_dimension_numbers<[1], [0], [0], [1], [0, 0, 1, 1], [], []>} : vector<8x256xbf16>, vector<256x512xbf16>, vector<8x512xf32> -> vector<8x512xf32>
    %393 = arith.addf %392, %11 : vector<8x512xf32>
    %394 = vector.extract_strided_slice %393 {offsets = [0, 0], sizes = [8, 128], strides = [1, 1]} : vector<8x512xf32> to vector<8x128xf32>
    %395 = arith.negf %394 : vector<8x128xf32>
    %396 = math.exp %395 : vector<8x128xf32>
    %cst_66 = arith.constant 1.000000e+00 : f32
    %397 = vector.broadcast %cst_66 : f32 to vector<8x128xf32>
    %398 = arith.addf %397, %396 : vector<8x128xf32>
    %399 = arith.divf %397, %398 : vector<8x128xf32>
    %400 = vector.extract_strided_slice %393 {offsets = [0, 128], sizes = [8, 128], strides = [1, 1]} : vector<8x512xf32> to vector<8x128xf32>
    %401 = arith.negf %400 : vector<8x128xf32>
    %402 = math.exp %401 : vector<8x128xf32>
    %cst_67 = arith.constant 1.000000e+00 : f32
    %403 = vector.broadcast %cst_67 : f32 to vector<8x128xf32>
    %404 = arith.addf %403, %402 : vector<8x128xf32>
    %405 = arith.divf %403, %404 : vector<8x128xf32>
    %406 = vector.extract_strided_slice %393 {offsets = [0, 256], sizes = [8, 128], strides = [1, 1]} : vector<8x512xf32> to vector<8x128xf32>
    %407 = math.tanh %406 : vector<8x128xf32>
    %408 = vector.extract_strided_slice %393 {offsets = [0, 384], sizes = [8, 128], strides = [1, 1]} : vector<8x512xf32> to vector<8x128xf32>
    %409 = arith.negf %408 : vector<8x128xf32>
    %410 = math.exp %409 : vector<8x128xf32>
    %cst_68 = arith.constant 1.000000e+00 : f32
    %411 = vector.broadcast %cst_68 : f32 to vector<8x128xf32>
    %412 = arith.addf %411, %410 : vector<8x128xf32>
    %413 = arith.divf %411, %412 : vector<8x128xf32>
    %414 = arith.mulf %405, %358 : vector<8x128xf32>
    %415 = arith.mulf %399, %407 : vector<8x128xf32>
    %416 = arith.addf %414, %415 : vector<8x128xf32>
    %417 = math.tanh %416 : vector<8x128xf32>
    %418 = arith.mulf %413, %417 : vector<8x128xf32>
    %419 = vector.extract_strided_slice %6 {offsets = [56, 0], sizes = [8, 512], strides = [1, 1]} : vector<64x512xf32> to vector<8x512xf32>
    %420 = arith.truncf %389 : vector<8x128xf32> to vector<8x128xbf16>
    %cst_69 = arith.constant dense<0.000000e+00> : vector<8x512xf32>
    %421 = tpu.matmul %420, %7, %cst_69 {dimension_numbers = #tpu.dot_dimension_numbers<[1], [0], [0], [1], [0, 0, 1, 1], [], []>} : vector<8x128xbf16>, vector<128x512xbf16>, vector<8x512xf32> -> vector<8x512xf32>
    %422 = arith.addf %419, %421 : vector<8x512xf32>
    %423 = vector.extract_strided_slice %422 {offsets = [0, 0], sizes = [8, 128], strides = [1, 1]} : vector<8x512xf32> to vector<8x128xf32>
    %424 = arith.negf %423 : vector<8x128xf32>
    %425 = math.exp %424 : vector<8x128xf32>
    %cst_70 = arith.constant 1.000000e+00 : f32
    %426 = vector.broadcast %cst_70 : f32 to vector<8x128xf32>
    %427 = arith.addf %426, %425 : vector<8x128xf32>
    %428 = arith.divf %426, %427 : vector<8x128xf32>
    %429 = vector.extract_strided_slice %422 {offsets = [0, 128], sizes = [8, 128], strides = [1, 1]} : vector<8x512xf32> to vector<8x128xf32>
    %430 = arith.negf %429 : vector<8x128xf32>
    %431 = math.exp %430 : vector<8x128xf32>
    %cst_71 = arith.constant 1.000000e+00 : f32
    %432 = vector.broadcast %cst_71 : f32 to vector<8x128xf32>
    %433 = arith.addf %432, %431 : vector<8x128xf32>
    %434 = arith.divf %432, %433 : vector<8x128xf32>
    %435 = vector.extract_strided_slice %422 {offsets = [0, 256], sizes = [8, 128], strides = [1, 1]} : vector<8x512xf32> to vector<8x128xf32>
    %436 = math.tanh %435 : vector<8x128xf32>
    %437 = vector.extract_strided_slice %422 {offsets = [0, 384], sizes = [8, 128], strides = [1, 1]} : vector<8x512xf32> to vector<8x128xf32>
    %438 = arith.negf %437 : vector<8x128xf32>
    %439 = math.exp %438 : vector<8x128xf32>
    %cst_72 = arith.constant 1.000000e+00 : f32
    %440 = vector.broadcast %cst_72 : f32 to vector<8x128xf32>
    %441 = arith.addf %440, %439 : vector<8x128xf32>
    %442 = arith.divf %440, %441 : vector<8x128xf32>
    %443 = arith.mulf %434, %387 : vector<8x128xf32>
    %444 = arith.mulf %428, %436 : vector<8x128xf32>
    %445 = arith.addf %443, %444 : vector<8x128xf32>
    %446 = math.tanh %445 : vector<8x128xf32>
    %447 = arith.mulf %442, %446 : vector<8x128xf32>
    %448 = tpu.concatenate %447, %418 in 1 : vector<8x128xf32>, vector<8x128xf32> -> vector<8x256xf32>
    %449 = arith.truncf %448 : vector<8x256xf32> to vector<8x256xbf16>
    %cst_73 = arith.constant dense<0.000000e+00> : vector<8x512xf32>
    %450 = tpu.matmul %449, %8, %cst_73 {dimension_numbers = #tpu.dot_dimension_numbers<[1], [0], [0], [1], [0, 0, 1, 1], [], []>} : vector<8x256xbf16>, vector<256x512xbf16>, vector<8x512xf32> -> vector<8x512xf32>
    %451 = arith.addf %450, %11 : vector<8x512xf32>
    %452 = vector.extract_strided_slice %451 {offsets = [0, 0], sizes = [8, 128], strides = [1, 1]} : vector<8x512xf32> to vector<8x128xf32>
    %453 = arith.negf %452 : vector<8x128xf32>
    %454 = math.exp %453 : vector<8x128xf32>
    %cst_74 = arith.constant 1.000000e+00 : f32
    %455 = vector.broadcast %cst_74 : f32 to vector<8x128xf32>
    %456 = arith.addf %455, %454 : vector<8x128xf32>
    %457 = arith.divf %455, %456 : vector<8x128xf32>
    %458 = vector.extract_strided_slice %451 {offsets = [0, 128], sizes = [8, 128], strides = [1, 1]} : vector<8x512xf32> to vector<8x128xf32>
    %459 = arith.negf %458 : vector<8x128xf32>
    %460 = math.exp %459 : vector<8x128xf32>
    %cst_75 = arith.constant 1.000000e+00 : f32
    %461 = vector.broadcast %cst_75 : f32 to vector<8x128xf32>
    %462 = arith.addf %461, %460 : vector<8x128xf32>
    %463 = arith.divf %461, %462 : vector<8x128xf32>
    %464 = vector.extract_strided_slice %451 {offsets = [0, 256], sizes = [8, 128], strides = [1, 1]} : vector<8x512xf32> to vector<8x128xf32>
    %465 = math.tanh %464 : vector<8x128xf32>
    %466 = vector.extract_strided_slice %451 {offsets = [0, 384], sizes = [8, 128], strides = [1, 1]} : vector<8x512xf32> to vector<8x128xf32>
    %467 = arith.negf %466 : vector<8x128xf32>
    %468 = math.exp %467 : vector<8x128xf32>
    %cst_76 = arith.constant 1.000000e+00 : f32
    %469 = vector.broadcast %cst_76 : f32 to vector<8x128xf32>
    %470 = arith.addf %469, %468 : vector<8x128xf32>
    %471 = arith.divf %469, %470 : vector<8x128xf32>
    %472 = arith.mulf %463, %416 : vector<8x128xf32>
    %473 = arith.mulf %457, %465 : vector<8x128xf32>
    %474 = arith.addf %472, %473 : vector<8x128xf32>
    %475 = math.tanh %474 : vector<8x128xf32>
    %476 = arith.mulf %471, %475 : vector<8x128xf32>
    %cst_77 = arith.constant 0.000000e+00 : f32
    %477 = vector.broadcast %cst_77 : f32 to vector<8x128xf32>
    %478 = arith.maximumf %476, %477 : vector<8x128xf32>
    %c0_78 = arith.constant 0 : index
    %c0_79 = arith.constant 0 : index
    %479 = vector.load %arg7[%c0_78, %c0_79] : memref<1x128xf32, #tpu.memory_space<vmem>>, vector<1x128xf32>
    %480 = vector.broadcast %479 : vector<1x128xf32> to vector<8x128xf32>
    %481 = arith.mulf %478, %480 : vector<8x128xf32>
    %cst_80 = arith.constant dense<0.000000e+00> : vector<8xf32>
    %482 = vector.multi_reduction <add>, %481, %cst_80 [1] : vector<8x128xf32> to vector<8xf32>
    %483 = vector.shape_cast %482 : vector<8xf32> to vector<8x1xf32>
    %c0_81 = arith.constant 0 : index
    %c0_82 = arith.constant 0 : index
    %484 = vector.load %arg8[%c0_81, %c0_82] : memref<1x1xf32, #tpu.memory_space<vmem>>, vector<1x1xf32>
    %485 = vector.broadcast %484 : vector<1x1xf32> to vector<8x1xf32>
    %486 = arith.addf %483, %485 : vector<8x1xf32>
    %487 = arith.negf %486 : vector<8x1xf32>
    %488 = math.exp %487 : vector<8x1xf32>
    %cst_83 = arith.constant 1.000000e+00 : f32
    %489 = vector.broadcast %cst_83 : f32 to vector<8x1xf32>
    %490 = arith.addf %489, %488 : vector<8x1xf32>
    %491 = arith.divf %489, %490 : vector<8x1xf32>
    %c0_84 = arith.constant 0 : index
    %c0_85 = arith.constant 0 : index
    %c0_86 = arith.constant 0 : index
    %492 = vector.load %arg9[%c0_84, %c0_85, %c0_86] : memref<1x8x1xf32, #tpu.memory_space<vmem>>, vector<1x8x1xf32>
    %493 = vector.shape_cast %492 : vector<1x8x1xf32> to vector<8x1xf32>
    %494 = vector.shape_cast %491 : vector<8x1xf32> to vector<1x8x1xf32>
    tpu.vector_store %arg9[%c0_84, %c0_85, %c0_86], %494 {strides = array<i32>} : memref<1x8x1xf32, #tpu.memory_space<vmem>>, vector<1x8x1xf32>,
    return
  }
  func.func @transform_0(%arg0: i32) -> (i32, i32, i32) {
    %c0_i32 = arith.constant 0 : i32
    %c0_i32_0 = arith.constant 0 : i32
    %c0_i32_1 = arith.constant 0 : i32
    return %arg0, %c0_i32, %c0_i32_0 : i32, i32, i32
  }
  func.func @transform_1(%arg0: i32) -> (i32, i32) {
    %c0_i32 = arith.constant 0 : i32
    %c0_i32_0 = arith.constant 0 : i32
    %c0_i32_1 = arith.constant 0 : i32
    return %c0_i32, %c0_i32_0 : i32, i32
  }
  func.func @transform_2(%arg0: i32) -> (i32, i32) {
    %c0_i32 = arith.constant 0 : i32
    %c0_i32_0 = arith.constant 0 : i32
    %c0_i32_1 = arith.constant 0 : i32
    return %c0_i32, %c0_i32_0 : i32, i32
  }
  func.func @transform_3(%arg0: i32) -> (i32, i32) {
    %c0_i32 = arith.constant 0 : i32
    %c0_i32_0 = arith.constant 0 : i32
    %c0_i32_1 = arith.constant 0 : i32
    return %c0_i32, %c0_i32_0 : i32, i32
  }
  func.func @transform_4(%arg0: i32) -> (i32, i32) {
    %c0_i32 = arith.constant 0 : i32
    %c0_i32_0 = arith.constant 0 : i32
    %c0_i32_1 = arith.constant 0 : i32
    return %c0_i32, %c0_i32_0 : i32, i32
  }
  func.func @transform_5(%arg0: i32) -> (i32, i32) {
    %c0_i32 = arith.constant 0 : i32
    %c0_i32_0 = arith.constant 0 : i32
    %c0_i32_1 = arith.constant 0 : i32
    return %c0_i32, %c0_i32_0 : i32, i32
  }
  func.func @transform_6(%arg0: i32) -> (i32, i32) {
    %c0_i32 = arith.constant 0 : i32
    %c0_i32_0 = arith.constant 0 : i32
    %c0_i32_1 = arith.constant 0 : i32
    return %c0_i32, %c0_i32_0 : i32, i32
  }
  func.func @transform_7(%arg0: i32) -> (i32, i32) {
    %c0_i32 = arith.constant 0 : i32
    %c0_i32_0 = arith.constant 0 : i32
    %c0_i32_1 = arith.constant 0 : i32
    return %c0_i32, %c0_i32_0 : i32, i32
  }
  func.func @transform_8(%arg0: i32) -> (i32, i32, i32) {
    %c0_i32 = arith.constant 0 : i32
    %c0_i32_0 = arith.constant 0 : i32
    %c0_i32_1 = arith.constant 0 : i32
    return %arg0, %c0_i32, %c0_i32_0 : i32, i32, i32
  }
}

</mosaic_0001>

<llo_original>
// kernel: tpu_custom_call.1
$region0: #{tpu_custom_call.1}
  #allocation0 [shape = 'u32[]', space=smem, size = 0x4, offset = 0x4, fixed_abs, tag = 'smem constant byte address 0x4 - core index']
  #allocation1 [shape = 'u32[144,128]{1,0:T(1,128)}', space=vmem, size = 0x12000, scoped, tag = 'internal scratch']
  #allocation2 [shape = 'f32[1,1]{1,0:T(1,128)S(1)}', space=vmem, size = 0x200, scoped, tag = 'scoped memory for tpu_custom_call.1']
  %s0 = inlined_call_operand.vmem [shape: bf16[1,64,16], index: 0, kind: input, shape index: {}]
  %s1 = inlined_call_operand.vmem [shape: bf16[16,512], index: 1, kind: input, shape index: {}]
  %s2 = inlined_call_operand.hbm [shape: bf16[128,512], index: 2, kind: input, shape index: {}]
  %s3 = inlined_call_operand.vmem [shape: f32[1,512], index: 3, kind: input, shape index: {}]
  %s4 = inlined_call_operand.hbm [shape: bf16[256,512], index: 4, kind: input, shape index: {}]
  %s5 = inlined_call_operand.vmem [shape: f32[1,512], index: 5, kind: input, shape index: {}]
  %s6 = inlined_call_operand.vmem [shape: f32[1,128], index: 6, kind: input, shape index: {}]
  %s7 = inlined_call_operand.<no memory space> [shape: f32[1,1], index: 7, kind: input, shape index: {}]
  %s8 = inlined_call_operand.vmem [shape: f32[1,8,1], index: 8, kind: output, shape index: {}]
  %s9 = sld [smem:[#allocation0]]
  $region50: #{tpu_custom_call.1} parent=0
    _
  %s11 = ssub.s32 1, %s9
  %s12 = scalar_select 0, %s11, %s9
  %v13 = vstv %s7
  %14 = vst [vmem:[#allocation2] sm:$0x1] %v13
  $region1: #{tpu_custom_call.1} parent=0
    #allocation3 [shape = 'u8[131072]{0}', space=vmem, size = 0x20000, scoped, tag = 'input window, operand 2, single buffered']
    #allocation4 [shape = 's32[1]{0}', space=sflag, size = 0x4, scoped, tag = 'scoped memory for tpu_custom_call.1']
    #allocation5 [shape = 'u8[262144]{0}', space=vmem, size = 0x40000, scoped, tag = 'input window, operand 4, single buffered']
    #allocation6 [shape = 's32[1]{0}', space=sflag, size = 0x4, scoped, tag = 'scoped memory for tpu_custom_call.1']
    %15 = vsyncpa [#allocation4], 0
    %16 = vsyncpa [#allocation6], 0
    // Predicated region
    $region2: #{tpu_custom_call.1} parent=1 // pred_check
      _
    $region3: #{tpu_custom_call.1} parent=1 // pred_check_branch
      %18 = sbr.rel (0) target = $region5
    $region4: #{tpu_custom_call.1} parent=1 // pred_region
      _
    $region5: #{tpu_custom_call.1} parent=1 // pred_fallthru
      _
    // Predicated region
    $region6: #{tpu_custom_call.1} parent=1 // pred_check
      _
    $region7: #{tpu_custom_call.1} parent=1 // pred_check_branch
      %20 = sbr.rel (0) target = $region9
    $region8: #{tpu_custom_call.1} parent=1 // pred_region
      _
    $region9: #{tpu_custom_call.1} parent=1 // pred_fallthru
      _
    // Predicated region
    $region10: #{tpu_custom_call.1} parent=1 // pred_check
      _
    $region11: #{tpu_custom_call.1} parent=1 // pred_check_branch
      %22 = sbr.rel (0) target = $region13
    $region12: #{tpu_custom_call.1} parent=1 // pred_region
      %s24 = ssub.s32 4096, 4096
      %25 = vsyncadd [#allocation4], %s24
      %s26 = sshll.u32 [#allocation3], 4
      %s27 = int_to_ptr.vmem [resolvable:$true] %s26
      %32 = dma.hbm_to_vmem [thread:$0]  %s2, 4096, %s27, [#allocation4], 256, 256, 16
    $region13: #{tpu_custom_call.1} parent=1 // pred_fallthru
      _
    // Predicated region
    $region14: #{tpu_custom_call.1} parent=1 // pred_check
      _
    $region15: #{tpu_custom_call.1} parent=1 // pred_check_branch
      %34 = sbr.rel (0) target = $region17
    $region16: #{tpu_custom_call.1} parent=1 // pred_region
      _
    $region17: #{tpu_custom_call.1} parent=1 // pred_fallthru
      _
    // Predicated region
    $region18: #{tpu_custom_call.1} parent=1 // pred_check
      _
    $region19: #{tpu_custom_call.1} parent=1 // pred_check_branch
      %36 = sbr.rel (0) target = $region21
    $region20: #{tpu_custom_call.1} parent=1 // pred_region
      %s38 = ssub.s32 8192, 8192
      %39 = vsyncadd [#allocation6], %s38
      %s40 = sshll.u32 [#allocation5], 4
      %s41 = int_to_ptr.vmem [resolvable:$true] %s40
      %46 = dma.hbm_to_vmem [thread:$0]  %s4, 8192, %s41, [#allocation6], 256, 256, 16
    $region21: #{tpu_custom_call.1} parent=1 // pred_fallthru
      _
    // Predicated region
    $region22: #{tpu_custom_call.1} parent=1 // pred_check
      _
    $region23: #{tpu_custom_call.1} parent=1 // pred_check_branch
      %48 = sbr.rel (0) target = $region25
    $region24: #{tpu_custom_call.1} parent=1 // pred_region
      _
    $region25: #{tpu_custom_call.1} parent=1 // pred_fallthru
      _
    // Predicated region
    $region26: #{tpu_custom_call.1} parent=1 // pred_check
      _
    $region27: #{tpu_custom_call.1} parent=1 // pred_check_branch
      %50 = sbr.rel (0) target = $region29
    $region28: #{tpu_custom_call.1} parent=1 // pred_region
      _
    $region29: #{tpu_custom_call.1} parent=1 // pred_fallthru
      _
    // Predicated region
    $region30: #{tpu_custom_call.1} parent=1 // pred_check
      _
    $region31: #{tpu_custom_call.1} parent=1 // pred_check_branch
      %52 = sbr.rel (0) target = $region33
    $region32: #{tpu_custom_call.1} parent=1 // pred_region
      _
    $region33: #{tpu_custom_call.1} parent=1 // pred_fallthru
      _
    // Predicated region
    $region34: #{tpu_custom_call.1} parent=1 // pred_check
      _
    $region35: #{tpu_custom_call.1} parent=1 // pred_check_branch
      %54 = sbr.rel (0) target = $region37
    $region36: #{tpu_custom_call.1} parent=1 // pred_region
      %55 = dma.done [#allocation4], 4096
    $region37: #{tpu_custom_call.1} parent=1 // pred_fallthru
      _
    // Predicated region
    $region38: #{tpu_custom_call.1} parent=1 // pred_check
      _
    $region39: #{tpu_custom_call.1} parent=1 // pred_check_branch
      %57 = sbr.rel (0) target = $region41
    $region40: #{tpu_custom_call.1} parent=1 // pred_region
      %58 = dma.done [#allocation6], 8192
    $region41: #{tpu_custom_call.1} parent=1 // pred_fallthru
      _
    %v60 = vld [vmem:[%s0] sm:$0xf]
    %v61 = vld [vmem:[%s0 + $0x4] sm:$0xf]
    %v62 = vld [vmem:[%s0 + $0x8] sm:$0xf]
    %v63 = vld [vmem:[%s0 + $0xc] sm:$0xf]
    %v64 = vld [vmem:[%s0 + $0x10] sm:$0xf]
    %v65 = vld [vmem:[%s0 + $0x14] sm:$0xf]
    %v66 = vld [vmem:[%s0 + $0x18] sm:$0xf]
    %v67 = vld [vmem:[%s0 + $0x1c] sm:$0xf]
    %v68 = vld [vmem:[%s1] sm:$0xff]
    %v69 = vld [vmem:[%s1 + $0x8] sm:$0xff]
    %v70 = vld [vmem:[%s1 + $0x10] sm:$0xff]
    %v71 = vld [vmem:[%s1 + $0x18] sm:$0xff]
    %v72 = vld [vmem:[%s3] sm:$0xf]
    %v74 = vlaneseq
    %v75 = vshrl.u32 %v74, 7
    %v76 = vsub.s32 0, %v75
    %v77 = vrot.slane %v72, %v76
    %v78 = vlaneseq
    %v79 = vshrl.u32 %v78, 7
    %v80 = vsub.s32 1, %v79
    %v81 = vrot.slane %v72, %v80
    %v82 = vlaneseq
    %v83 = vshrl.u32 %v82, 7
    %v84 = vsub.s32 2, %v83
    %v85 = vrot.slane %v72, %v84
    %v86 = vlaneseq
    %v87 = vshrl.u32 %v86, 7
    %v88 = vsub.s32 3, %v87
    %v89 = vrot.slane %v72, %v88
    %v102 = vunpack.c.l.b16 %v60
    %v103 = vunpack.c.l.b16 %v61
    %v104 = vunpack.c.l.b16 %v62
    %v105 = vunpack.c.l.b16 %v63
    %v106 = vunpack.c.l.b16 %v64
    %v107 = vunpack.c.l.b16 %v65
    %v108 = vunpack.c.l.b16 %v66
    %v109 = vunpack.c.l.b16 %v67
    %v110 = vpack.c.b16 %v103, %v102
    %v111 = vpack.c.b16 %v105, %v104
    %v112 = vpack.c.b16 %v107, %v106
    %v113 = vpack.c.b16 %v109, %v108
    %v118 = vunpack.c.l.b16 %v68
    %v119 = vunpack.c.h.b16 %v68
    %v120 = vunpack.c.l.b16 %v69
    %v121 = vunpack.c.h.b16 %v69
    %v122 = vunpack.c.l.b16 %v70
    %v123 = vunpack.c.h.b16 %v70
    %v124 = vunpack.c.l.b16 %v71
    %v125 = vunpack.c.h.b16 %v71
    %v126 = vpack.c.b16 %v122, %v118
    %v127 = vpack.c.b16 %v123, %v119
    %v128 = vpack.c.b16 %v124, %v120
    %v129 = vpack.c.b16 %v125, %v121
    %vm134 = vcmask 130048
    %v136 = vsel %vm134, %v110, 0
    %v139 = vsel %vm134, %v111, 0
    %v142 = vsel %vm134, %v112, 0
    %v145 = vsel %vm134, %v113, 0
    %147 = vmatprep.subr.bf16.mxu0 0
    %148 = vmatpush1.bf16.msra.mxu0 0
    %149 = vmatprep.subr.bf16.mxu0 0
    %150 = vmatpush1.bf16.msra.mxu0 0
    %151 = vmatprep.subr.bf16.mxu0 0
    %152 = vmatpush1.bf16.msra.mxu0 0
    %153 = vmatprep.subr.bf16.mxu0 0
    %154 = vmatpush1.bf16.msra.mxu0 0
    %155 = vmatprep.subr.bf16.mxu0 0
    %156 = vmatpush1.bf16.msra.mxu0 0
    %157 = vmatprep.subr.bf16.mxu0 0
    %158 = vmatpush1.bf16.msra.mxu0 0
    %159 = vmatprep.subr.bf16.mxu0 0
    %160 = vmatpush1.bf16.msra.mxu0 0
    %161 = vmatprep.subr.bf16.mxu0 %v127
    %162 = vmatpush1.bf16.msra.mxu0 %v126
    %163 = vmatprep.subr.bf16.mxu0 0
    %164 = vmatpush2.bf16.msra.mxu0 0
    %165 = vmatprep.subr.bf16.mxu0 0
    %166 = vmatpush2.bf16.msra.mxu0 0
    %167 = vmatprep.subr.bf16.mxu0 0
    %168 = vmatpush2.bf16.msra.mxu0 0
    %169 = vmatprep.subr.bf16.mxu0 0
    %170 = vmatpush2.bf16.msra.mxu0 0
    %171 = vmatprep.subr.bf16.mxu0 0
    %172 = vmatpush2.bf16.msra.mxu0 0
    %173 = vmatprep.subr.bf16.mxu0 0
    %174 = vmatpush2.bf16.msra.mxu0 0
    %175 = vmatprep.subr.bf16.mxu0 0
    %176 = vmatpush2.bf16.msra.mxu0 0
    %177 = vmatprep.subr.bf16.mxu0 0
    %178 = vmatpush2.bf16.msra.mxu0 0
    %179 = vmatprep.mubr.bf16.mxu0 0
    %180 = vmatmul.mubr.bf16.gmra.mxu0 %v136
    %v181 = vpop.f32.mrf.mxu0
    %v182 = vadd.f32 %v77, %v181
    %v183 = vpop.f32.mrf.mxu0
    %v184 = vadd.f32 %v81, %v183
    %v185 = vpop.f32.mrf.mxu0
    %v186 = vadd.f32 %v77, %v185
    %v187 = vpop.f32.mrf.mxu0
    %v188 = vadd.f32 %v81, %v187
    %189 = vmatprep.mubr.bf16.mxu0 0
    %190 = vmatmul.mubr.bf16.gmra.mxu0 %v139
    %v191 = vpop.f32.mrf.mxu0
    %v192 = vadd.f32 %v77, %v191
    %v193 = vpop.f32.mrf.mxu0
    %v194 = vadd.f32 %v81, %v193
    %v195 = vpop.f32.mrf.mxu0
    %v196 = vadd.f32 %v77, %v195
    %v197 = vpop.f32.mrf.mxu0
    %v198 = vadd.f32 %v81, %v197
    %199 = vmatprep.mubr.bf16.mxu0 0
    %200 = vmatmul.mubr.bf16.gmra.mxu0 %v142
    %v201 = vpop.f32.mrf.mxu0
    %v202 = vadd.f32 %v77, %v201
    %v203 = vpop.f32.mrf.mxu0
    %v204 = vadd.f32 %v81, %v203
    %v205 = vpop.f32.mrf.mxu0
    %v206 = vadd.f32 %v77, %v205
    %v207 = vpop.f32.mrf.mxu0
    %v208 = vadd.f32 %v81, %v207
    %209 = vmatprep.mubr.bf16.mxu0 0
    %210 = vmatmul.mubr.bf16.gmra.mxu0 %v145
    %v211 = vpop.f32.mrf.mxu0
    %v212 = vadd.f32 %v77, %v211
    %v213 = vpop.f32.mrf.mxu0
    %v214 = vadd.f32 %v81, %v213
    %v215 = vpop.f32.mrf.mxu0
    %v216 = vadd.f32 %v77, %v215
    %v217 = vpop.f32.mrf.mxu0
    %v218 = vadd.f32 %v81, %v217
    %219 = vdwg.mxu0
    %220 = vmatprep.subr.bf16.mxu0 0
    %221 = vmatpush1.bf16.msra.mxu0 0
    %222 = vmatprep.subr.bf16.mxu0 0
    %223 = vmatpush1.bf16.msra.mxu0 0
    %224 = vmatprep.subr.bf16.mxu0 0
    %225 = vmatpush1.bf16.msra.mxu0 0
    %226 = vmatprep.subr.bf16.mxu0 0
    %227 = vmatpush1.bf16.msra.mxu0 0
    %228 = vmatprep.subr.bf16.mxu0 0
    %229 = vmatpush1.bf16.msra.mxu0 0
    %230 = vmatprep.subr.bf16.mxu0 0
    %231 = vmatpush1.bf16.msra.mxu0 0
    %232 = vmatprep.subr.bf16.mxu0 0
    %233 = vmatpush1.bf16.msra.mxu0 0
    %234 = vmatprep.subr.bf16.mxu0 %v129
    %235 = vmatpush1.bf16.msra.mxu0 %v128
    %236 = vmatprep.subr.bf16.mxu0 0
    %237 = vmatpush2.bf16.msra.mxu0 0
    %238 = vmatprep.subr.bf16.mxu0 0
    %239 = vmatpush2.bf16.msra.mxu0 0
    %240 = vmatprep.subr.bf16.mxu0 0
    %241 = vmatpush2.bf16.msra.mxu0 0
    %242 = vmatprep.subr.bf16.mxu0 0
    %243 = vmatpush2.bf16.msra.mxu0 0
    %244 = vmatprep.subr.bf16.mxu0 0
    %245 = vmatpush2.bf16.msra.mxu0 0
    %246 = vmatprep.subr.bf16.mxu0 0
    %247 = vmatpush2.bf16.msra.mxu0 0
    %248 = vmatprep.subr.bf16.mxu0 0
    %249 = vmatpush2.bf16.msra.mxu0 0
    %250 = vmatprep.subr.bf16.mxu0 0
    %251 = vmatpush2.bf16.msra.mxu0 0
    %252 = vmatprep.mubr.bf16.mxu0 0
    %253 = vmatmul.mubr.bf16.gmra.mxu0 %v136
    %v254 = vpop.f32.mrf.mxu0
    %v255 = vadd.f32 %v85, %v254
    %v256 = vpop.f32.mrf.mxu0
    %v257 = vadd.f32 %v89, %v256
    %v258 = vpop.f32.mrf.mxu0
    %v259 = vadd.f32 %v85, %v258
    %v260 = vpop.f32.mrf.mxu0
    %v261 = vadd.f32 %v89, %v260
    %262 = vmatprep.mubr.bf16.mxu0 0
    %263 = vmatmul.mubr.bf16.gmra.mxu0 %v139
    %v264 = vpop.f32.mrf.mxu0
    %v265 = vadd.f32 %v85, %v264
    %v266 = vpop.f32.mrf.mxu0
    %v267 = vadd.f32 %v89, %v266
    %v268 = vpop.f32.mrf.mxu0
    %v269 = vadd.f32 %v85, %v268
    %v270 = vpop.f32.mrf.mxu0
    %v271 = vadd.f32 %v89, %v270
    %272 = vmatprep.mubr.bf16.mxu0 0
    %273 = vmatmul.mubr.bf16.gmra.mxu0 %v142
    %v274 = vpop.f32.mrf.mxu0
    %v275 = vadd.f32 %v85, %v274
    %v276 = vpop.f32.mrf.mxu0
    %v277 = vadd.f32 %v89, %v276
    %v278 = vpop.f32.mrf.mxu0
    %v279 = vadd.f32 %v85, %v278
    %v280 = vpop.f32.mrf.mxu0
    %v281 = vadd.f32 %v89, %v280
    %282 = vmatprep.mubr.bf16.mxu0 0
    %283 = vmatmul.mubr.bf16.gmra.mxu0 %v145
    %v284 = vpop.f32.mrf.mxu0
    %v285 = vadd.f32 %v85, %v284
    %v286 = vpop.f32.mrf.mxu0
    %v287 = vadd.f32 %v89, %v286
    %v288 = vpop.f32.mrf.mxu0
    %v289 = vadd.f32 %v85, %v288
    %v290 = vpop.f32.mrf.mxu0
    %v291 = vadd.f32 %v89, %v290
    %292 = vdwg.mxu0
    %v293 = vld [vmem:[#allocation3] sm:$0xff]
    %v294 = vld [vmem:[#allocation3 + $0x8] sm:$0xff]
    %v295 = vld [vmem:[#allocation3 + $0x10] sm:$0xff]
    %v296 = vld [vmem:[#allocation3 + $0x18] sm:$0xff]
    %v297 = vld [vmem:[#allocation3 + $0x20] sm:$0xff]
    %v298 = vld [vmem:[#allocation3 + $0x28] sm:$0xff]
    %v299 = vld [vmem:[#allocation3 + $0x30] sm:$0xff]
    %v300 = vld [vmem:[#allocation3 + $0x38] sm:$0xff]
    %v301 = vld [vmem:[#allocation3 + $0x40] sm:$0xff]
    %v302 = vld [vmem:[#allocation3 + $0x48] sm:$0xff]
    %v303 = vld [vmem:[#allocation3 + $0x50] sm:$0xff]
    %v304 = vld [vmem:[#allocation3 + $0x58] sm:$0xff]
    %v305 = vld [vmem:[#allocation3 + $0x60] sm:$0xff]
    %v306 = vld [vmem:[#allocation3 + $0x68] sm:$0xff]
    %v307 = vld [vmem:[#allocation3 + $0x70] sm:$0xff]
    %v308 = vld [vmem:[#allocation3 + $0x78] sm:$0xff]
    %v309 = vld [vmem:[#allocation3 + $0x80] sm:$0xff]
    %v310 = vld [vmem:[#allocation3 + $0x88] sm:$0xff]
    %v311 = vld [vmem:[#allocation3 + $0x90] sm:$0xff]
    %v312 = vld [vmem:[#allocation3 + $0x98] sm:$0xff]
    %v313 = vld [vmem:[#allocation3 + $0xa0] sm:$0xff]
    %v314 = vld [vmem:[#allocation3 + $0xa8] sm:$0xff]
    %v315 = vld [vmem:[#allocation3 + $0xb0] sm:$0xff]
    %v316 = vld [vmem:[#allocation3 + $0xb8] sm:$0xff]
    %v317 = vld [vmem:[#allocation3 + $0xc0] sm:$0xff]
    %v318 = vld [vmem:[#allocation3 + $0xc8] sm:$0xff]
    %v319 = vld [vmem:[#allocation3 + $0xd0] sm:$0xff]
    %v320 = vld [vmem:[#allocation3 + $0xd8] sm:$0xff]
    %v321 = vld [vmem:[#allocation3 + $0xe0] sm:$0xff]
    %v322 = vld [vmem:[#allocation3 + $0xe8] sm:$0xff]
    %v323 = vld [vmem:[#allocation3 + $0xf0] sm:$0xff]
    %v324 = vld [vmem:[#allocation3 + $0xf8] sm:$0xff]
    %v325 = vld [vmem:[#allocation5] sm:$0xff]
    %v326 = vld [vmem:[#allocation5 + $0x8] sm:$0xff]
    %v327 = vld [vmem:[#allocation5 + $0x10] sm:$0xff]
    %v328 = vld [vmem:[#allocation5 + $0x18] sm:$0xff]
    %v329 = vld [vmem:[#allocation5 + $0x20] sm:$0xff]
    %v330 = vld [vmem:[#allocation5 + $0x28] sm:$0xff]
    %v331 = vld [vmem:[#allocation5 + $0x30] sm:$0xff]
    %v332 = vld [vmem:[#allocation5 + $0x38] sm:$0xff]
    %v333 = vld [vmem:[#allocation5 + $0x40] sm:$0xff]
    %v334 = vld [vmem:[#allocation5 + $0x48] sm:$0xff]
    %v335 = vld [vmem:[#allocation5 + $0x50] sm:$0xff]
    %v336 = vld [vmem:[#allocation5 + $0x58] sm:$0xff]
    %v337 = vld [vmem:[#allocation5 + $0x60] sm:$0xff]
    %v338 = vld [vmem:[#allocation5 + $0x68] sm:$0xff]
    %v339 = vld [vmem:[#allocation5 + $0x70] sm:$0xff]
    %v340 = vld [vmem:[#allocation5 + $0x78] sm:$0xff]
    %v341 = vld [vmem:[#allocation5 + $0x80] sm:$0xff]
    %v342 = vld [vmem:[#allocation5 + $0x88] sm:$0xff]
    %v343 = vld [vmem:[#allocation5 + $0x90] sm:$0xff]
    %v344 = vld [vmem:[#allocation5 + $0x98] sm:$0xff]
    %v345 = vld [vmem:[#allocation5 + $0xa0] sm:$0xff]
    %v346 = vld [vmem:[#allocation5 + $0xa8] sm:$0xff]
    %v347 = vld [vmem:[#allocation5 + $0xb0] sm:$0xff]
    %v348 = vld [vmem:[#allocation5 + $0xb8] sm:$0xff]
    %v349 = vld [vmem:[#allocation5 + $0xc0] sm:$0xff]
    %v350 = vld [vmem:[#allocation5 + $0xc8] sm:$0xff]
    %v351 = vld [vmem:[#allocation5 + $0xd0] sm:$0xff]
    %v352 = vld [vmem:[#allocation5 + $0xd8] sm:$0xff]
    %v353 = vld [vmem:[#allocation5 + $0xe0] sm:$0xff]
    %v354 = vld [vmem:[#allocation5 + $0xe8] sm:$0xff]
    %v355 = vld [vmem:[#allocation5 + $0xf0] sm:$0xff]
    %v356 = vld [vmem:[#allocation5 + $0xf8] sm:$0xff]
    %v357 = vld [vmem:[#allocation5 + $0x100] sm:$0xff]
    %v358 = vld [vmem:[#allocation5 + $0x108] sm:$0xff]
    %v359 = vld [vmem:[#allocation5 + $0x110] sm:$0xff]
    %v360 = vld [vmem:[#allocation5 + $0x118] sm:$0xff]
    %v361 = vld [vmem:[#allocation5 + $0x120] sm:$0xff]
    %v362 = vld [vmem:[#allocation5 + $0x128] sm:$0xff]
    %v363 = vld [vmem:[#allocation5 + $0x130] sm:$0xff]
    %v364 = vld [vmem:[#allocation5 + $0x138] sm:$0xff]
    %v365 = vld [vmem:[#allocation5 + $0x140] sm:$0xff]
    %v366 = vld [vmem:[#allocation5 + $0x148] sm:$0xff]
    %v367 = vld [vmem:[#allocation5 + $0x150] sm:$0xff]
    %v368 = vld [vmem:[#allocation5 + $0x158] sm:$0xff]
    %v369 = vld [vmem:[#allocation5 + $0x160] sm:$0xff]
    %v370 = vld [vmem:[#allocation5 + $0x168] sm:$0xff]
    %v371 = vld [vmem:[#allocation5 + $0x170] sm:$0xff]
    %v372 = vld [vmem:[#allocation5 + $0x178] sm:$0xff]
    %v373 = vld [vmem:[#allocation5 + $0x180] sm:$0xff]
    %v374 = vld [vmem:[#allocation5 + $0x188] sm:$0xff]
    %v375 = vld [vmem:[#allocation5 + $0x190] sm:$0xff]
    %v376 = vld [vmem:[#allocation5 + $0x198] sm:$0xff]
    %v377 = vld [vmem:[#allocation5 + $0x1a0] sm:$0xff]
    %v378 = vld [vmem:[#allocation5 + $0x1a8] sm:$0xff]
    %v379 = vld [vmem:[#allocation5 + $0x1b0] sm:$0xff]
    %v380 = vld [vmem:[#allocation5 + $0x1b8] sm:$0xff]
    %v381 = vld [vmem:[#allocation5 + $0x1c0] sm:$0xff]
    %v382 = vld [vmem:[#allocation5 + $0x1c8] sm:$0xff]
    %v383 = vld [vmem:[#allocation5 + $0x1d0] sm:$0xff]
    %v384 = vld [vmem:[#allocation5 + $0x1d8] sm:$0xff]
    %v385 = vld [vmem:[#allocation5 + $0x1e0] sm:$0xff]
    %v386 = vld [vmem:[#allocation5 + $0x1e8] sm:$0xff]
    %v387 = vld [vmem:[#allocation5 + $0x1f0] sm:$0xff]
    %v388 = vld [vmem:[#allocation5 + $0x1f8] sm:$0xff]
    %v389 = vld [vmem:[%s5] sm:$0xf]
    %v391 = vlaneseq
    %v392 = vshrl.u32 %v391, 7
    %v393 = vsub.s32 0, %v392
    %v394 = vrot.slane %v389, %v393
    %v395 = vlaneseq
    %v396 = vshrl.u32 %v395, 7
    %v397 = vsub.s32 1, %v396
    %v398 = vrot.slane %v389, %v397
    %v399 = vlaneseq
    %v400 = vshrl.u32 %v399, 7
    %v401 = vsub.s32 2, %v400
    %v402 = vrot.slane %v389, %v401
    %v403 = vlaneseq
    %v404 = vshrl.u32 %v403, 7
    %v405 = vsub.s32 3, %v404
    %v406 = vrot.slane %v389, %v405
    %v443 = vunpack.c.l.b16 %v293
    %v444 = vunpack.c.h.b16 %v293
    %v445 = vunpack.c.l.b16 %v294
    %v446 = vunpack.c.h.b16 %v294
    %v447 = vunpack.c.l.b16 %v295
    %v448 = vunpack.c.h.b16 %v295
    %v449 = vunpack.c.l.b16 %v296
    %v450 = vunpack.c.h.b16 %v296
    %v451 = vunpack.c.l.b16 %v297
    %v452 = vunpack.c.h.b16 %v297
    %v453 = vunpack.c.l.b16 %v298
    %v454 = vunpack.c.h.b16 %v298
    %v455 = vunpack.c.l.b16 %v299
    %v456 = vunpack.c.h.b16 %v299
    %v457 = vunpack.c.l.b16 %v300
    %v458 = vunpack.c.h.b16 %v300
    %v459 = vunpack.c.l.b16 %v301
    %v460 = vunpack.c.h.b16 %v301
    %v461 = vunpack.c.l.b16 %v302
    %v462 = vunpack.c.h.b16 %v302
    %v463 = vunpack.c.l.b16 %v303
    %v464 = vunpack.c.h.b16 %v303
    %v465 = vunpack.c.l.b16 %v304
    %v466 = vunpack.c.h.b16 %v304
    %v467 = vunpack.c.l.b16 %v305
    %v468 = vunpack.c.h.b16 %v305
    %v469 = vunpack.c.l.b16 %v306
    %v470 = vunpack.c.h.b16 %v306
    %v471 = vunpack.c.l.b16 %v307
    %v472 = vunpack.c.h.b16 %v307
    %v473 = vunpack.c.l.b16 %v308
    %v474 = vunpack.c.h.b16 %v308
    %v475 = vunpack.c.l.b16 %v309
    %v476 = vunpack.c.h.b16 %v309
    %v477 = vunpack.c.l.b16 %v310
    %v478 = vunpack.c.h.b16 %v310
    %v479 = vunpack.c.l.b16 %v311
    %v480 = vunpack.c.h.b16 %v311
    %v481 = vunpack.c.l.b16 %v312
    %v482 = vunpack.c.h.b16 %v312
    %v483 = vunpack.c.l.b16 %v313
    %v484 = vunpack.c.h.b16 %v313
    %v485 = vunpack.c.l.b16 %v314
    %v486 = vunpack.c.h.b16 %v314
    %v487 = vunpack.c.l.b16 %v315
    %v488 = vunpack.c.h.b16 %v315
    %v489 = vunpack.c.l.b16 %v316
    %v490 = vunpack.c.h.b16 %v316
    %v491 = vunpack.c.l.b16 %v317
    %v492 = vunpack.c.h.b16 %v317
    %v493 = vunpack.c.l.b16 %v318
    %v494 = vunpack.c.h.b16 %v318
    %v495 = vunpack.c.l.b16 %v319
    %v496 = vunpack.c.h.b16 %v319
    %v497 = vunpack.c.l.b16 %v320
    %v498 = vunpack.c.h.b16 %v320
    %v499 = vunpack.c.l.b16 %v321
    %v500 = vunpack.c.h.b16 %v321
    %v501 = vunpack.c.l.b16 %v322
    %v502 = vunpack.c.h.b16 %v322
    %v503 = vunpack.c.l.b16 %v323
    %v504 = vunpack.c.h.b16 %v323
    %v505 = vunpack.c.l.b16 %v324
    %v506 = vunpack.c.h.b16 %v324
    %v507 = vpack.c.b16 %v447, %v443
    %v508 = vpack.c.b16 %v448, %v444
    %v509 = vpack.c.b16 %v449, %v445
    %v510 = vpack.c.b16 %v450, %v446
    %v511 = vpack.c.b16 %v455, %v451
    %v512 = vpack.c.b16 %v456, %v452
    %v513 = vpack.c.b16 %v457, %v453
    %v514 = vpack.c.b16 %v458, %v454
    %v515 = vpack.c.b16 %v463, %v459
    %v516 = vpack.c.b16 %v464, %v460
    %v517 = vpack.c.b16 %v465, %v461
    %v518 = vpack.c.b16 %v466, %v462
    %v519 = vpack.c.b16 %v471, %v467
    %v520 = vpack.c.b16 %v472, %v468
    %v521 = vpack.c.b16 %v473, %v469
    %v522 = vpack.c.b16 %v474, %v470
    %v523 = vpack.c.b16 %v479, %v475
    %v524 = vpack.c.b16 %v480, %v476
    %v525 = vpack.c.b16 %v481, %v477
    %v526 = vpack.c.b16 %v482, %v478
    %v527 = vpack.c.b16 %v487, %v483
    %v528 = vpack.c.b16 %v488, %v484
    %v529 = vpack.c.b16 %v489, %v485
    %v530 = vpack.c.b16 %v490, %v486
    %v531 = vpack.c.b16 %v495, %v491
    %v532 = vpack.c.b16 %v496, %v492
    %v533 = vpack.c.b16 %v497, %v493
    %v534 = vpack.c.b16 %v498, %v494
    %v535 = vpack.c.b16 %v503, %v499
    %v536 = vpack.c.b16 %v504, %v500
    %v537 = vpack.c.b16 %v505, %v501
    %v538 = vpack.c.b16 %v506, %v502
    %571 = vmatprep.subr.bf16.mxu0 %v536
    %572 = vmatpush1.bf16.msra.mxu0 %v535
    %573 = vmatprep.subr.bf16.mxu0 %v532
    %574 = vmatpush1.bf16.msra.mxu0 %v531
    %575 = vmatprep.subr.bf16.mxu0 %v528
    %576 = vmatpush1.bf16.msra.mxu0 %v527
    %577 = vmatprep.subr.bf16.mxu0 %v524
    %578 = vmatpush1.bf16.msra.mxu0 %v523
    %579 = vmatprep.subr.bf16.mxu0 %v520
    %580 = vmatpush1.bf16.msra.mxu0 %v519
    %581 = vmatprep.subr.bf16.mxu0 %v516
    %582 = vmatpush1.bf16.msra.mxu0 %v515
    %583 = vmatprep.subr.bf16.mxu0 %v512
    %584 = vmatpush1.bf16.msra.mxu0 %v511
    %585 = vmatprep.subr.bf16.mxu0 %v508
    %586 = vmatpush1.bf16.msra.mxu0 %v507
    %587 = vmatprep.subr.bf16.mxu0 0
    %588 = vmatpush2.bf16.msra.mxu0 0
    %589 = vmatprep.subr.bf16.mxu0 0
    %590 = vmatpush2.bf16.msra.mxu0 0
    %591 = vmatprep.subr.bf16.mxu0 0
    %592 = vmatpush2.bf16.msra.mxu0 0
    %593 = vmatprep.subr.bf16.mxu0 0
    %594 = vmatpush2.bf16.msra.mxu0 0
    %595 = vmatprep.subr.bf16.mxu0 0
    %596 = vmatpush2.bf16.msra.mxu0 0
    %597 = vmatprep.subr.bf16.mxu0 0
    %598 = vmatpush2.bf16.msra.mxu0 0
    %599 = vmatprep.subr.bf16.mxu0 0
    %600 = vmatpush2.bf16.msra.mxu0 0
    %601 = vmatprep.subr.bf16.mxu0 0
    %602 = vmatpush2.bf16.msra.mxu0 0
    %603 = vmatprep.mubr.bf16.mxu0 0
    %604 = vmatmul.mubr.bf16.gmra.mxu0 0
    %v605 = vpop.f32.mrf.mxu0
    %v606 = vadd.f32 0.0, %v605
    %v607 = vpop.f32.mrf.mxu0
    %v608 = vadd.f32 0.0, %v607
    %v609 = vpop.f32.mrf.mxu0
    %v610 = vpop.f32.mrf.mxu0
    %611 = vdwg.mxu0
    %612 = vmatprep.subr.bf16.mxu0 %v538
    %613 = vmatpush1.bf16.msra.mxu0 %v537
    %614 = vmatprep.subr.bf16.mxu0 %v534
    %615 = vmatpush1.bf16.msra.mxu0 %v533
    %616 = vmatprep.subr.bf16.mxu0 %v530
    %617 = vmatpush1.bf16.msra.mxu0 %v529
    %618 = vmatprep.subr.bf16.mxu0 %v526
    %619 = vmatpush1.bf16.msra.mxu0 %v525
    %620 = vmatprep.subr.bf16.mxu0 %v522
    %621 = vmatpush1.bf16.msra.mxu0 %v521
    %622 = vmatprep.subr.bf16.mxu0 %v518
    %623 = vmatpush1.bf16.msra.mxu0 %v517
    %624 = vmatprep.subr.bf16.mxu0 %v514
    %625 = vmatpush1.bf16.msra.mxu0 %v513
    %626 = vmatprep.subr.bf16.mxu0 %v510
    %627 = vmatpush1.bf16.msra.mxu0 %v509
    %628 = vmatprep.subr.bf16.mxu0 0
    %629 = vmatpush2.bf16.msra.mxu0 0
    %630 = vmatprep.subr.bf16.mxu0 0
    %631 = vmatpush2.bf16.msra.mxu0 0
    %632 = vmatprep.subr.bf16.mxu0 0
    %633 = vmatpush2.bf16.msra.mxu0 0
    %634 = vmatprep.subr.bf16.mxu0 0
    %635 = vmatpush2.bf16.msra.mxu0 0
    %636 = vmatprep.subr.bf16.mxu0 0
    %637 = vmatpush2.bf16.msra.mxu0 0
    %638 = vmatprep.subr.bf16.mxu0 0
    %639 = vmatpush2.bf16.msra.mxu0 0
    %640 = vmatprep.subr.bf16.mxu0 0
    %641 = vmatpush2.bf16.msra.mxu0 0
    %642 = vmatprep.subr.bf16.mxu0 0
    %643 = vmatpush2.bf16.msra.mxu0 0
    %644 = vmatprep.mubr.bf16.mxu0 0
    %645 = vmatmul.mubr.bf16.gmra.mxu0 0
    %v646 = vpop.f32.mrf.mxu0
    %v647 = vadd.f32 0.0, %v646
    %v648 = vpop.f32.mrf.mxu0
    %v649 = vadd.f32 0.0, %v648
    %v650 = vpop.f32.mrf.mxu0
    %v651 = vpop.f32.mrf.mxu0
    %652 = vdwg.mxu0
    %v653 = vadd.f32 %v182, %v606
    %v654 = vadd.f32 %v184, %v608
    %v655 = vadd.f32 %v255, %v647
    %v656 = vadd.f32 %v257, %v649
    %v657 = vxor.u32 %v653, 2147483648
    %v658 = vmul.f32 %v657, 1.442695
    %v659 = vpow.pop %v658
    %v660 = vadd.f32 %v659, 1.0
    %v661 = vrcp.pop %v660
    %v662 = vmul.f32 1.0, %v661
    %v663 = vxor.u32 %v654, 2147483648
    %v664 = vmul.f32 %v663, 1.442695
    %v665 = vpow.pop %v664
    %v666 = vadd.f32 %v665, 1.0
    %v667 = vrcp.pop %v666
    %v668 = vmul.f32 1.0, %v667
    %v669 = vtanh.pop %v655
    %v670 = vxor.u32 %v656, 2147483648
    %v671 = vmul.f32 %v670, 1.442695
    %v672 = vpow.pop %v671
    %v673 = vadd.f32 %v672, 1.0
    %v674 = vrcp.pop %v673
    %v675 = vmul.f32 1.0, %v674
    %v676 = vmul.f32 %v668, 0.0
    %v677 = vmul.f32 %v662, %v669
    %v678 = vadd.f32 %v676, %v677
    %v679 = vtanh.pop %v678
    %v680 = vmul.f32 %v675, %v679
    %v681 = vpack.c.bf16 %v680, %v680
    %v682 = vpack.c.bf16 0.0, 0.0
    %v747 = vunpack.c.l.b16 %v325
    %v748 = vunpack.c.h.b16 %v325
    %v749 = vunpack.c.l.b16 %v326
    %v750 = vunpack.c.h.b16 %v326
    %v751 = vunpack.c.l.b16 %v327
    %v752 = vunpack.c.h.b16 %v327
    %v753 = vunpack.c.l.b16 %v328
    %v754 = vunpack.c.h.b16 %v328
    %v755 = vunpack.c.l.b16 %v329
    %v756 = vunpack.c.h.b16 %v329
    %v757 = vunpack.c.l.b16 %v330
    %v758 = vunpack.c.h.b16 %v330
    %v759 = vunpack.c.l.b16 %v331
    %v760 = vunpack.c.h.b16 %v331
    %v761 = vunpack.c.l.b16 %v332
    %v762 = vunpack.c.h.b16 %v332
    %v763 = vunpack.c.l.b16 %v333
    %v764 = vunpack.c.h.b16 %v333
    %v765 = vunpack.c.l.b16 %v334
    %v766 = vunpack.c.h.b16 %v334
    %v767 = vunpack.c.l.b16 %v335
    %v768 = vunpack.c.h.b16 %v335
    %v769 = vunpack.c.l.b16 %v336
    %v770 = vunpack.c.h.b16 %v336
    %v771 = vunpack.c.l.b16 %v337
    %v772 = vunpack.c.h.b16 %v337
    %v773 = vunpack.c.l.b16 %v338
    %v774 = vunpack.c.h.b16 %v338
    %v775 = vunpack.c.l.b16 %v339
    %v776 = vunpack.c.h.b16 %v339
    %v777 = vunpack.c.l.b16 %v340
    %v778 = vunpack.c.h.b16 %v340
    %v779 = vunpack.c.l.b16 %v341
    %v780 = vunpack.c.h.b16 %v341
    %v781 = vunpack.c.l.b16 %v342
    %v782 = vunpack.c.h.b16 %v342
    %v783 = vunpack.c.l.b16 %v343
    %v784 = vunpack.c.h.b16 %v343
    %v785 = vunpack.c.l.b16 %v344
    %v786 = vunpack.c.h.b16 %v344
    %v787 = vunpack.c.l.b16 %v345
    %v788 = vunpack.c.h.b16 %v345
    %v789 = vunpack.c.l.b16 %v346
    %v790 = vunpack.c.h.b16 %v346
    %v791 = vunpack.c.l.b16 %v347
    %v792 = vunpack.c.h.b16 %v347
    %v793 = vunpack.c.l.b16 %v348
    %v794 = vunpack.c.h.b16 %v348
    %v795 = vunpack.c.l.b16 %v349
    %v796 = vunpack.c.h.b16 %v349
    %v797 = vunpack.c.l.b16 %v350
    %v798 = vunpack.c.h.b16 %v350
    %v799 = vunpack.c.l.b16 %v351
    %v800 = vunpack.c.h.b16 %v351
    %v801 = vunpack.c.l.b16 %v352
    %v802 = vunpack.c.h.b16 %v352
    %v803 = vunpack.c.l.b16 %v353
    %v804 = vunpack.c.h.b16 %v353
    %v805 = vunpack.c.l.b16 %v354
    %v806 = vunpack.c.h.b16 %v354
    %v807 = vunpack.c.l.b16 %v355
    %v808 = vunpack.c.h.b16 %v355
    %v809 = vunpack.c.l.b16 %v356
    %v810 = vunpack.c.h.b16 %v356
    %v811 = vunpack.c.l.b16 %v357
    %v812 = vunpack.c.h.b16 %v357
    %v813 = vunpack.c.l.b16 %v358
    %v814 = vunpack.c.h.b16 %v358
    %v815 = vunpack.c.l.b16 %v359
    %v816 = vunpack.c.h.b16 %v359
    %v817 = vunpack.c.l.b16 %v360
    %v818 = vunpack.c.h.b16 %v360
    %v819 = vunpack.c.l.b16 %v361
    %v820 = vunpack.c.h.b16 %v361
    %v821 = vunpack.c.l.b16 %v362
    %v822 = vunpack.c.h.b16 %v362
    %v823 = vunpack.c.l.b16 %v363
    %v824 = vunpack.c.h.b16 %v363
    %v825 = vunpack.c.l.b16 %v364
    %v826 = vunpack.c.h.b16 %v364
    %v827 = vunpack.c.l.b16 %v365
    %v828 = vunpack.c.h.b16 %v365
    %v829 = vunpack.c.l.b16 %v366
    %v830 = vunpack.c.h.b16 %v366
    %v831 = vunpack.c.l.b16 %v367
    %v832 = vunpack.c.h.b16 %v367
    %v833 = vunpack.c.l.b16 %v368
    %v834 = vunpack.c.h.b16 %v368
    %v835 = vunpack.c.l.b16 %v369
    %v836 = vunpack.c.h.b16 %v369
    %v837 = vunpack.c.l.b16 %v370
    %v838 = vunpack.c.h.b16 %v370
    %v839 = vunpack.c.l.b16 %v371
    %v840 = vunpack.c.h.b16 %v371
    %v841 = vunpack.c.l.b16 %v372
    %v842 = vunpack.c.h.b16 %v372
    %v843 = vunpack.c.l.b16 %v373
    %v844 = vunpack.c.h.b16 %v373
    %v845 = vunpack.c.l.b16 %v374
    %v846 = vunpack.c.h.b16 %v374
    %v847 = vunpack.c.l.b16 %v375
    %v848 = vunpack.c.h.b16 %v375
    %v849 = vunpack.c.l.b16 %v376
    %v850 = vunpack.c.h.b16 %v376
    %v851 = vunpack.c.l.b16 %v377
    %v852 = vunpack.c.h.b16 %v377
    %v853 = vunpack.c.l.b16 %v378
    %v854 = vunpack.c.h.b16 %v378
    %v855 = vunpack.c.l.b16 %v379
    %v856 = vunpack.c.h.b16 %v379
    %v857 = vunpack.c.l.b16 %v380
    %v858 = vunpack.c.h.b16 %v380
    %v859 = vunpack.c.l.b16 %v381
    %v860 = vunpack.c.h.b16 %v381
    %v861 = vunpack.c.l.b16 %v382
    %v862 = vunpack.c.h.b16 %v382
    %v863 = vunpack.c.l.b16 %v383
    %v864 = vunpack.c.h.b16 %v383
    %v865 = vunpack.c.l.b16 %v384
    %v866 = vunpack.c.h.b16 %v384
    %v867 = vunpack.c.l.b16 %v385
    %v868 = vunpack.c.h.b16 %v385
    %v869 = vunpack.c.l.b16 %v386
    %v870 = vunpack.c.h.b16 %v386
    %v871 = vunpack.c.l.b16 %v387
    %v872 = vunpack.c.h.b16 %v387
    %v873 = vunpack.c.l.b16 %v388
    %v874 = vunpack.c.h.b16 %v388
    %v875 = vpack.c.b16 %v751, %v747
    %v876 = vpack.c.b16 %v752, %v748
    %v877 = vpack.c.b16 %v753, %v749
    %v878 = vpack.c.b16 %v754, %v750
    %v879 = vpack.c.b16 %v759, %v755
    %v880 = vpack.c.b16 %v760, %v756
    %v881 = vpack.c.b16 %v761, %v757
    %v882 = vpack.c.b16 %v762, %v758
    %v883 = vpack.c.b16 %v767, %v763
    %v884 = vpack.c.b16 %v768, %v764
    %v885 = vpack.c.b16 %v769, %v765
    %v886 = vpack.c.b16 %v770, %v766
    %v887 = vpack.c.b16 %v775, %v771
    %v888 = vpack.c.b16 %v776, %v772
    %v889 = vpack.c.b16 %v777, %v773
    %v890 = vpack.c.b16 %v778, %v774
    %v891 = vpack.c.b16 %v783, %v779
    %v892 = vpack.c.b16 %v784, %v780
    %v893 = vpack.c.b16 %v785, %v781
    %v894 = vpack.c.b16 %v786, %v782
    %v895 = vpack.c.b16 %v791, %v787
    %v896 = vpack.c.b16 %v792, %v788
    %v897 = vpack.c.b16 %v793, %v789
    %v898 = vpack.c.b16 %v794, %v790
    %v899 = vpack.c.b16 %v799, %v795
    %v900 = vpack.c.b16 %v800, %v796
    %v901 = vpack.c.b16 %v801, %v797
    %v902 = vpack.c.b16 %v802, %v798
    %v903 = vpack.c.b16 %v807, %v803
    %v904 = vpack.c.b16 %v808, %v804
    %v905 = vpack.c.b16 %v809, %v805
    %v906 = vpack.c.b16 %v810, %v806
    %v907 = vpack.c.b16 %v815, %v811
    %v908 = vpack.c.b16 %v816, %v812
    %v909 = vpack.c.b16 %v817, %v813
    %v910 = vpack.c.b16 %v818, %v814
    %v911 = vpack.c.b16 %v823, %v819
    %v912 = vpack.c.b16 %v824, %v820
    %v913 = vpack.c.b16 %v825, %v821
    %v914 = vpack.c.b16 %v826, %v822
    %v915 = vpack.c.b16 %v831, %v827
    %v916 = vpack.c.b16 %v832, %v828
    %v917 = vpack.c.b16 %v833, %v829
    %v918 = vpack.c.b16 %v834, %v830
    %v919 = vpack.c.b16 %v839, %v835
    %v920 = vpack.c.b16 %v840, %v836
    %v921 = vpack.c.b16 %v841, %v837
    %v922 = vpack.c.b16 %v842, %v838
    %v923 = vpack.c.b16 %v847, %v843
    %v924 = vpack.c.b16 %v848, %v844
    %v925 = vpack.c.b16 %v849, %v845
    %v926 = vpack.c.b16 %v850, %v846
    %v927 = vpack.c.b16 %v855, %v851
    %v928 = vpack.c.b16 %v856, %v852
    %v929 = vpack.c.b16 %v857, %v853
    %v930 = vpack.c.b16 %v858, %v854
    %v931 = vpack.c.b16 %v863, %v859
    %v932 = vpack.c.b16 %v864, %v860
    %v933 = vpack.c.b16 %v865, %v861
    %v934 = vpack.c.b16 %v866, %v862
    %v935 = vpack.c.b16 %v871, %v867
    %v936 = vpack.c.b16 %v872, %v868
    %v937 = vpack.c.b16 %v873, %v869
    %v938 = vpack.c.b16 %v874, %v870
    %1003 = vmatprep.subr.bf16.mxu0 %v904
    %1004 = vmatpush1.bf16.msra.mxu0 %v903
    %1005 = vmatprep.subr.bf16.mxu0 %v900
    %1006 = vmatpush1.bf16.msra.mxu0 %v899
    %1007 = vmatprep.subr.bf16.mxu0 %v896
    %1008 = vmatpush1.bf16.msra.mxu0 %v895
    %1009 = vmatprep.subr.bf16.mxu0 %v892
    %1010 = vmatpush1.bf16.msra.mxu0 %v891
    %1011 = vmatprep.subr.bf16.mxu0 %v888
    %1012 = vmatpush1.bf16.msra.mxu0 %v887
    %1013 = vmatprep.subr.bf16.mxu0 %v884
    %1014 = vmatpush1.bf16.msra.mxu0 %v883
    %1015 = vmatprep.subr.bf16.mxu0 %v880
    %1016 = vmatpush1.bf16.msra.mxu0 %v879
    %1017 = vmatprep.subr.bf16.mxu0 %v876
    %1018 = vmatpush1.bf16.msra.mxu0 %v875
    %1019 = vmatprep.subr.bf16.mxu0 %v936
    %1020 = vmatpush2.bf16.msra.mxu0 %v935
    %1021 = vmatprep.subr.bf16.mxu0 %v932
    %1022 = vmatpush2.bf16.msra.mxu0 %v931
    %1023 = vmatprep.subr.bf16.mxu0 %v928
    %1024 = vmatpush2.bf16.msra.mxu0 %v927
    %1025 = vmatprep.subr.bf16.mxu0 %v924
    %1026 = vmatpush2.bf16.msra.mxu0 %v923
    %1027 = vmatprep.subr.bf16.mxu0 %v920
    %1028 = vmatpush2.bf16.msra.mxu0 %v919
    %1029 = vmatprep.subr.bf16.mxu0 %v916
    %1030 = vmatpush2.bf16.msra.mxu0 %v915
    %1031 = vmatprep.subr.bf16.mxu0 %v912
    %1032 = vmatpush2.bf16.msra.mxu0 %v911
    %1033 = vmatprep.subr.bf16.mxu0 %v908
    %1034 = vmatpush2.bf16.msra.mxu0 %v907
    %1035 = vmatprep.mubr.bf16.mxu0 %v682
    %1036 = vmatmul.mubr.bf16.gmra.mxu0 %v681
    %v1037 = vpop.f32.mrf.mxu0
    %v1038 = vadd.f32 %v394, %v1037
    %v1039 = vpop.f32.mrf.mxu0
    %v1040 = vadd.f32 %v398, %v1039
    %v1041 = vpop.f32.mrf.mxu0
    %v1042 = vpop.f32.mrf.mxu0
    %1043 = vdwg.mxu0
    %1044 = vmatprep.subr.bf16.mxu0 %v906
    %1045 = vmatpush1.bf16.msra.mxu0 %v905
    %1046 = vmatprep.subr.bf16.mxu0 %v902
    %1047 = vmatpush1.bf16.msra.mxu0 %v901
    %1048 = vmatprep.subr.bf16.mxu0 %v898
    %1049 = vmatpush1.bf16.msra.mxu0 %v897
    %1050 = vmatprep.subr.bf16.mxu0 %v894
    %1051 = vmatpush1.bf16.msra.mxu0 %v893
    %1052 = vmatprep.subr.bf16.mxu0 %v890
    %1053 = vmatpush1.bf16.msra.mxu0 %v889
    %1054 = vmatprep.subr.bf16.mxu0 %v886
    %1055 = vmatpush1.bf16.msra.mxu0 %v885
    %1056 = vmatprep.subr.bf16.mxu0 %v882
    %1057 = vmatpush1.bf16.msra.mxu0 %v881
    %1058 = vmatprep.subr.bf16.mxu0 %v878
    %1059 = vmatpush1.bf16.msra.mxu0 %v877
    %1060 = vmatprep.subr.bf16.mxu0 %v938
    %1061 = vmatpush2.bf16.msra.mxu0 %v937
    %1062 = vmatprep.subr.bf16.mxu0 %v934
    %1063 = vmatpush2.bf16.msra.mxu0 %v933
    %1064 = vmatprep.subr.bf16.mxu0 %v930
    %1065 = vmatpush2.bf16.msra.mxu0 %v929
    %1066 = vmatprep.subr.bf16.mxu0 %v926
    %1067 = vmatpush2.bf16.msra.mxu0 %v925
    %1068 = vmatprep.subr.bf16.mxu0 %v922
    %1069 = vmatpush2.bf16.msra.mxu0 %v921
    %1070 = vmatprep.subr.bf16.mxu0 %v918
    %1071 = vmatpush2.bf16.msra.mxu0 %v917
    %1072 = vmatprep.subr.bf16.mxu0 %v914
    %1073 = vmatpush2.bf16.msra.mxu0 %v913
    %1074 = vmatprep.subr.bf16.mxu0 %v910
    %1075 = vmatpush2.bf16.msra.mxu0 %v909
    %1076 = vmatprep.mubr.bf16.mxu0 %v682
    %1077 = vmatmul.mubr.bf16.gmra.mxu0 %v681
    %v1078 = vpop.f32.mrf.mxu0
    %v1079 = vadd.f32 %v402, %v1078
    %v1080 = vpop.f32.mrf.mxu0
    %v1081 = vadd.f32 %v406, %v1080
    %v1082 = vpop.f32.mrf.mxu0
    %v1083 = vpop.f32.mrf.mxu0
    %1084 = vdwg.mxu0
    %v1085 = vxor.u32 %v1038, 2147483648
    %v1086 = vmul.f32 %v1085, 1.442695
    %v1087 = vpow.pop %v1086
    %v1088 = vadd.f32 %v1087, 1.0
    %v1089 = vrcp.pop %v1088
    %v1090 = vmul.f32 1.0, %v1089
    %v1091 = vxor.u32 %v1040, 2147483648
    %v1092 = vmul.f32 %v1091, 1.442695
    %v1093 = vpow.pop %v1092
    %v1094 = vadd.f32 %v1093, 1.0
    %v1095 = vrcp.pop %v1094
    %v1096 = vmul.f32 1.0, %v1095
    %v1097 = vtanh.pop %v1079
    %v1098 = vxor.u32 %v1081, 2147483648
    %v1099 = vmul.f32 %v1098, 1.442695
    %v1100 = vpow.pop %v1099
    %v1101 = vadd.f32 %v1100, 1.0
    %v1102 = vrcp.pop %v1101
    %v1103 = vmul.f32 1.0, %v1102
    %v1104 = vmul.f32 %v1096, 0.0
    %v1105 = vmul.f32 %v1090, %v1097
    %v1106 = vadd.f32 %v1104, %v1105
    %v1107 = vtanh.pop %v1106
    %v1108 = vmul.f32 %v1103, %v1107
    %1109 = vmatprep.subr.bf16.mxu0 %v536
    %1110 = vmatpush1.bf16.msra.mxu0 %v535
    %1111 = vmatprep.subr.bf16.mxu0 %v532
    %1112 = vmatpush1.bf16.msra.mxu0 %v531
    %1113 = vmatprep.subr.bf16.mxu0 %v528
    %1114 = vmatpush1.bf16.msra.mxu0 %v527
    %1115 = vmatprep.subr.bf16.mxu0 %v524
    %1116 = vmatpush1.bf16.msra.mxu0 %v523
    %1117 = vmatprep.subr.bf16.mxu0 %v520
    %1118 = vmatpush1.bf16.msra.mxu0 %v519
    %1119 = vmatprep.subr.bf16.mxu0 %v516
    %1120 = vmatpush1.bf16.msra.mxu0 %v515
    %1121 = vmatprep.subr.bf16.mxu0 %v512
    %1122 = vmatpush1.bf16.msra.mxu0 %v511
    %1123 = vmatprep.subr.bf16.mxu0 %v508
    %1124 = vmatpush1.bf16.msra.mxu0 %v507
    %1125 = vmatprep.subr.bf16.mxu0 0
    %1126 = vmatpush2.bf16.msra.mxu0 0
    %1127 = vmatprep.subr.bf16.mxu0 0
    %1128 = vmatpush2.bf16.msra.mxu0 0
    %1129 = vmatprep.subr.bf16.mxu0 0
    %1130 = vmatpush2.bf16.msra.mxu0 0
    %1131 = vmatprep.subr.bf16.mxu0 0
    %1132 = vmatpush2.bf16.msra.mxu0 0
    %1133 = vmatprep.subr.bf16.mxu0 0
    %1134 = vmatpush2.bf16.msra.mxu0 0
    %1135 = vmatprep.subr.bf16.mxu0 0
    %1136 = vmatpush2.bf16.msra.mxu0 0
    %1137 = vmatprep.subr.bf16.mxu0 0
    %1138 = vmatpush2.bf16.msra.mxu0 0
    %1139 = vmatprep.subr.bf16.mxu0 0
    %1140 = vmatpush2.bf16.msra.mxu0 0
    %1141 = vmatprep.mubr.bf16.mxu0 0
    %1142 = vmatmul.mubr.bf16.gmra.mxu0 %v681
    %v1143 = vpop.f32.mrf.mxu0
    %v1144 = vadd.f32 0.0, %v1143
    %v1145 = vpop.f32.mrf.mxu0
    %v1146 = vadd.f32 0.0, %v1145
    %v1147 = vpop.f32.mrf.mxu0
    %v1148 = vpop.f32.mrf.mxu0
    %1149 = vdwg.mxu0
    %1150 = vmatprep.subr.bf16.mxu0 %v538
    %1151 = vmatpush1.bf16.msra.mxu0 %v537
    %1152 = vmatprep.subr.bf16.mxu0 %v534
    %1153 = vmatpush1.bf16.msra.mxu0 %v533
    %1154 = vmatprep.subr.bf16.mxu0 %v530
    %1155 = vmatpush1.bf16.msra.mxu0 %v529
    %1156 = vmatprep.subr.bf16.mxu0 %v526
    %1157 = vmatpush1.bf16.msra.mxu0 %v525
    %1158 = vmatprep.subr.bf16.mxu0 %v522
    %1159 = vmatpush1.bf16.msra.mxu0 %v521
    %1160 = vmatprep.subr.bf16.mxu0 %v518
    %1161 = vmatpush1.bf16.msra.mxu0 %v517
    %1162 = vmatprep.subr.bf16.mxu0 %v514
    %1163 = vmatpush1.bf16.msra.mxu0 %v513
    %1164 = vmatprep.subr.bf16.mxu0 %v510
    %1165 = vmatpush1.bf16.msra.mxu0 %v509
    %1166 = vmatprep.subr.bf16.mxu0 0
    %1167 = vmatpush2.bf16.msra.mxu0 0
    %1168 = vmatprep.subr.bf16.mxu0 0
    %1169 = vmatpush2.bf16.msra.mxu0 0
    %1170 = vmatprep.subr.bf16.mxu0 0
    %1171 = vmatpush2.bf16.msra.mxu0 0
    %1172 = vmatprep.subr.bf16.mxu0 0
    %1173 = vmatpush2.bf16.msra.mxu0 0
    %1174 = vmatprep.subr.bf16.mxu0 0
    %1175 = vmatpush2.bf16.msra.mxu0 0
    %1176 = vmatprep.subr.bf16.mxu0 0
    %1177 = vmatpush2.bf16.msra.mxu0 0
    %1178 = vmatprep.subr.bf16.mxu0 0
    %1179 = vmatpush2.bf16.msra.mxu0 0
    %1180 = vmatprep.subr.bf16.mxu0 0
    %1181 = vmatpush2.bf16.msra.mxu0 0
    %1182 = vmatprep.mubr.bf16.mxu0 0
    %1183 = vmatmul.mubr.bf16.gmra.mxu0 %v681
    %v1184 = vpop.f32.mrf.mxu0
    %v1185 = vadd.f32 0.0, %v1184
    %v1186 = vpop.f32.mrf.mxu0
    %v1187 = vadd.f32 0.0, %v1186
    %v1188 = vpop.f32.mrf.mxu0
    %v1189 = vpop.f32.mrf.mxu0
    %1190 = vdwg.mxu0
    %v1191 = vadd.f32 %v186, %v1144
    %v1192 = vadd.f32 %v188, %v1146
    %v1193 = vadd.f32 %v259, %v1185
    %v1194 = vadd.f32 %v261, %v1187
    %v1195 = vxor.u32 %v1191, 2147483648
    %v1196 = vmul.f32 %v1195, 1.442695
    %v1197 = vpow.pop %v1196
    %v1198 = vadd.f32 %v1197, 1.0
    %v1199 = vrcp.pop %v1198
    %v1200 = vmul.f32 1.0, %v1199
    %v1201 = vxor.u32 %v1192, 2147483648
    %v1202 = vmul.f32 %v1201, 1.442695
    %v1203 = vpow.pop %v1202
    %v1204 = vadd.f32 %v1203, 1.0
    %v1205 = vrcp.pop %v1204
    %v1206 = vmul.f32 1.0, %v1205
    %v1207 = vtanh.pop %v1193
    %v1208 = vxor.u32 %v1194, 2147483648
    %v1209 = vmul.f32 %v1208, 1.442695
    %v1210 = vpow.pop %v1209
    %v1211 = vadd.f32 %v1210, 1.0
    %v1212 = vrcp.pop %v1211
    %v1213 = vmul.f32 1.0, %v1212
    %v1214 = vmul.f32 %v1206, %v678
    %v1215 = vmul.f32 %v1200, %v1207
    %v1216 = vadd.f32 %v1214, %v1215
    %v1217 = vtanh.pop %v1216
    %v1218 = vmul.f32 %v1213, %v1217
    %v1219 = vpack.c.bf16 %v1218, %v1218
    %v1220 = vpack.c.bf16 %v1108, %v1108
    %1221 = vmatprep.subr.bf16.mxu0 %v904
    %1222 = vmatpush1.bf16.msra.mxu0 %v903
    %1223 = vmatprep.subr.bf16.mxu0 %v900
    %1224 = vmatpush1.bf16.msra.mxu0 %v899
    %1225 = vmatprep.subr.bf16.mxu0 %v896
    %1226 = vmatpush1.bf16.msra.mxu0 %v895
    %1227 = vmatprep.subr.bf16.mxu0 %v892
    %1228 = vmatpush1.bf16.msra.mxu0 %v891
    %1229 = vmatprep.subr.bf16.mxu0 %v888
    %1230 = vmatpush1.bf16.msra.mxu0 %v887
    %1231 = vmatprep.subr.bf16.mxu0 %v884
    %1232 = vmatpush1.bf16.msra.mxu0 %v883
    %1233 = vmatprep.subr.bf16.mxu0 %v880
    %1234 = vmatpush1.bf16.msra.mxu0 %v879
    %1235 = vmatprep.subr.bf16.mxu0 %v876
    %1236 = vmatpush1.bf16.msra.mxu0 %v875
    %1237 = vmatprep.subr.bf16.mxu0 %v936
    %1238 = vmatpush2.bf16.msra.mxu0 %v935
    %1239 = vmatprep.subr.bf16.mxu0 %v932
    %1240 = vmatpush2.bf16.msra.mxu0 %v931
    %1241 = vmatprep.subr.bf16.mxu0 %v928
    %1242 = vmatpush2.bf16.msra.mxu0 %v927
    %1243 = vmatprep.subr.bf16.mxu0 %v924
    %1244 = vmatpush2.bf16.msra.mxu0 %v923
    %1245 = vmatprep.subr.bf16.mxu0 %v920
    %1246 = vmatpush2.bf16.msra.mxu0 %v919
    %1247 = vmatprep.subr.bf16.mxu0 %v916
    %1248 = vmatpush2.bf16.msra.mxu0 %v915
    %1249 = vmatprep.subr.bf16.mxu0 %v912
    %1250 = vmatpush2.bf16.msra.mxu0 %v911
    %1251 = vmatprep.subr.bf16.mxu0 %v908
    %1252 = vmatpush2.bf16.msra.mxu0 %v907
    %1253 = vmatprep.mubr.bf16.mxu0 %v1220
    %1254 = vmatmul.mubr.bf16.gmra.mxu0 %v1219
    %v1255 = vpop.f32.mrf.mxu0
    %v1256 = vadd.f32 %v394, %v1255
    %v1257 = vpop.f32.mrf.mxu0
    %v1258 = vadd.f32 %v398, %v1257
    %v1259 = vpop.f32.mrf.mxu0
    %v1260 = vpop.f32.mrf.mxu0
    %1261 = vdwg.mxu0
    %1262 = vmatprep.subr.bf16.mxu0 %v906
    %1263 = vmatpush1.bf16.msra.mxu0 %v905
    %1264 = vmatprep.subr.bf16.mxu0 %v902
    %1265 = vmatpush1.bf16.msra.mxu0 %v901
    %1266 = vmatprep.subr.bf16.mxu0 %v898
    %1267 = vmatpush1.bf16.msra.mxu0 %v897
    %1268 = vmatprep.subr.bf16.mxu0 %v894
    %1269 = vmatpush1.bf16.msra.mxu0 %v893
    %1270 = vmatprep.subr.bf16.mxu0 %v890
    %1271 = vmatpush1.bf16.msra.mxu0 %v889
    %1272 = vmatprep.subr.bf16.mxu0 %v886
    %1273 = vmatpush1.bf16.msra.mxu0 %v885
    %1274 = vmatprep.subr.bf16.mxu0 %v882
    %1275 = vmatpush1.bf16.msra.mxu0 %v881
    %1276 = vmatprep.subr.bf16.mxu0 %v878
    %1277 = vmatpush1.bf16.msra.mxu0 %v877
    %1278 = vmatprep.subr.bf16.mxu0 %v938
    %1279 = vmatpush2.bf16.msra.mxu0 %v937
    %1280 = vmatprep.subr.bf16.mxu0 %v934
    %1281 = vmatpush2.bf16.msra.mxu0 %v933
    %1282 = vmatprep.subr.bf16.mxu0 %v930
    %1283 = vmatpush2.bf16.msra.mxu0 %v929
    %1284 = vmatprep.subr.bf16.mxu0 %v926
    %1285 = vmatpush2.bf16.msra.mxu0 %v925
    %1286 = vmatprep.subr.bf16.mxu0 %v922
    %1287 = vmatpush2.bf16.msra.mxu0 %v921
    %1288 = vmatprep.subr.bf16.mxu0 %v918
    %1289 = vmatpush2.bf16.msra.mxu0 %v917
    %1290 = vmatprep.subr.bf16.mxu0 %v914
    %1291 = vmatpush2.bf16.msra.mxu0 %v913
    %1292 = vmatprep.subr.bf16.mxu0 %v910
    %1293 = vmatpush2.bf16.msra.mxu0 %v909
    %1294 = vmatprep.mubr.bf16.mxu0 %v1220
    %1295 = vmatmul.mubr.bf16.gmra.mxu0 %v1219
    %v1296 = vpop.f32.mrf.mxu0
    %v1297 = vadd.f32 %v402, %v1296
    %v1298 = vpop.f32.mrf.mxu0
    %v1299 = vadd.f32 %v406, %v1298
    %v1300 = vpop.f32.mrf.mxu0
    %v1301 = vpop.f32.mrf.mxu0
    %1302 = vdwg.mxu0
    %v1303 = vxor.u32 %v1256, 2147483648
    %v1304 = vmul.f32 %v1303, 1.442695
    %v1305 = vpow.pop %v1304
    %v1306 = vadd.f32 %v1305, 1.0
    %v1307 = vrcp.pop %v1306
    %v1308 = vmul.f32 1.0, %v1307
    %v1309 = vxor.u32 %v1258, 2147483648
    %v1310 = vmul.f32 %v1309, 1.442695
    %v1311 = vpow.pop %v1310
    %v1312 = vadd.f32 %v1311, 1.0
    %v1313 = vrcp.pop %v1312
    %v1314 = vmul.f32 1.0, %v1313
    %v1315 = vtanh.pop %v1297
    %v1316 = vxor.u32 %v1299, 2147483648
    %v1317 = vmul.f32 %v1316, 1.442695
    %v1318 = vpow.pop %v1317
    %v1319 = vadd.f32 %v1318, 1.0
    %v1320 = vrcp.pop %v1319
    %v1321 = vmul.f32 1.0, %v1320
    %v1322 = vmul.f32 %v1314, %v1106
    %v1323 = vmul.f32 %v1308, %v1315
    %v1324 = vadd.f32 %v1322, %v1323
    %v1325 = vtanh.pop %v1324
    %v1326 = vmul.f32 %v1321, %v1325
    %1327 = vmatprep.subr.bf16.mxu0 %v536
    %1328 = vmatpush1.bf16.msra.mxu0 %v535
    %1329 = vmatprep.subr.bf16.mxu0 %v532
    %1330 = vmatpush1.bf16.msra.mxu0 %v531
    %1331 = vmatprep.subr.bf16.mxu0 %v528
    %1332 = vmatpush1.bf16.msra.mxu0 %v527
    %1333 = vmatprep.subr.bf16.mxu0 %v524
    %1334 = vmatpush1.bf16.msra.mxu0 %v523
    %1335 = vmatprep.subr.bf16.mxu0 %v520
    %1336 = vmatpush1.bf16.msra.mxu0 %v519
    %1337 = vmatprep.subr.bf16.mxu0 %v516
    %1338 = vmatpush1.bf16.msra.mxu0 %v515
    %1339 = vmatprep.subr.bf16.mxu0 %v512
    %1340 = vmatpush1.bf16.msra.mxu0 %v511
    %1341 = vmatprep.subr.bf16.mxu0 %v508
    %1342 = vmatpush1.bf16.msra.mxu0 %v507
    %1343 = vmatprep.subr.bf16.mxu0 0
    %1344 = vmatpush2.bf16.msra.mxu0 0
    %1345 = vmatprep.subr.bf16.mxu0 0
    %1346 = vmatpush2.bf16.msra.mxu0 0
    %1347 = vmatprep.subr.bf16.mxu0 0
    %1348 = vmatpush2.bf16.msra.mxu0 0
    %1349 = vmatprep.subr.bf16.mxu0 0
    %1350 = vmatpush2.bf16.msra.mxu0 0
    %1351 = vmatprep.subr.bf16.mxu0 0
    %1352 = vmatpush2.bf16.msra.mxu0 0
    %1353 = vmatprep.subr.bf16.mxu0 0
    %1354 = vmatpush2.bf16.msra.mxu0 0
    %1355 = vmatprep.subr.bf16.mxu0 0
    %1356 = vmatpush2.bf16.msra.mxu0 0
    %1357 = vmatprep.subr.bf16.mxu0 0
    %1358 = vmatpush2.bf16.msra.mxu0 0
    %1359 = vmatprep.mubr.bf16.mxu0 0
    %1360 = vmatmul.mubr.bf16.gmra.mxu0 %v1219
    %v1361 = vpop.f32.mrf.mxu0
    %v1362 = vadd.f32 0.0, %v1361
    %v1363 = vpop.f32.mrf.mxu0
    %v1364 = vadd.f32 0.0, %v1363
    %v1365 = vpop.f32.mrf.mxu0
    %v1366 = vpop.f32.mrf.mxu0
    %1367 = vdwg.mxu0
    %1368 = vmatprep.subr.bf16.mxu0 %v538
    %1369 = vmatpush1.bf16.msra.mxu0 %v537
    %1370 = vmatprep.subr.bf16.mxu0 %v534
    %1371 = vmatpush1.bf16.msra.mxu0 %v533
    %1372 = vmatprep.subr.bf16.mxu0 %v530
    %1373 = vmatpush1.bf16.msra.mxu0 %v529
    %1374 = vmatprep.subr.bf16.mxu0 %v526
    %1375 = vmatpush1.bf16.msra.mxu0 %v525
    %1376 = vmatprep.subr.bf16.mxu0 %v522
    %1377 = vmatpush1.bf16.msra.mxu0 %v521
    %1378 = vmatprep.subr.bf16.mxu0 %v518
    %1379 = vmatpush1.bf16.msra.mxu0 %v517
    %1380 = vmatprep.subr.bf16.mxu0 %v514
    %1381 = vmatpush1.bf16.msra.mxu0 %v513
    %1382 = vmatprep.subr.bf16.mxu0 %v510
    %1383 = vmatpush1.bf16.msra.mxu0 %v509
    %1384 = vmatprep.subr.bf16.mxu0 0
    %1385 = vmatpush2.bf16.msra.mxu0 0
    %1386 = vmatprep.subr.bf16.mxu0 0
    %1387 = vmatpush2.bf16.msra.mxu0 0
    %1388 = vmatprep.subr.bf16.mxu0 0
    %1389 = vmatpush2.bf16.msra.mxu0 0
    %1390 = vmatprep.subr.bf16.mxu0 0
    %1391 = vmatpush2.bf16.msra.mxu0 0
    %1392 = vmatprep.subr.bf16.mxu0 0
    %1393 = vmatpush2.bf16.msra.mxu0 0
    %1394 = vmatprep.subr.bf16.mxu0 0
    %1395 = vmatpush2.bf16.msra.mxu0 0
    %1396 = vmatprep.subr.bf16.mxu0 0
    %1397 = vmatpush2.bf16.msra.mxu0 0
    %1398 = vmatprep.subr.bf16.mxu0 0
    %1399 = vmatpush2.bf16.msra.mxu0 0
    %1400 = vmatprep.mubr.bf16.mxu0 0
    %1401 = vmatmul.mubr.bf16.gmra.mxu0 %v1219
    %v1402 = vpop.f32.mrf.mxu0
    %v1403 = vadd.f32 0.0, %v1402
    %v1404 = vpop.f32.mrf.mxu0
    %v1405 = vadd.f32 0.0, %v1404
    %v1406 = vpop.f32.mrf.mxu0
    %v1407 = vpop.f32.mrf.mxu0
    %1408 = vdwg.mxu0
    %v1409 = vadd.f32 %v192, %v1362
    %v1410 = vadd.f32 %v194, %v1364
    %v1411 = vadd.f32 %v265, %v1403
    %v1412 = vadd.f32 %v267, %v1405
    %v1413 = vxor.u32 %v1409, 2147483648
    %v1414 = vmul.f32 %v1413, 1.442695
    %v1415 = vpow.pop %v1414
    %v1416 = vadd.f32 %v1415, 1.0
    %v1417 = vrcp.pop %v1416
    %v1418 = vmul.f32 1.0, %v1417
    %v1419 = vxor.u32 %v1410, 2147483648
    %v1420 = vmul.f32 %v1419, 1.442695
    %v1421 = vpow.pop %v1420
    %v1422 = vadd.f32 %v1421, 1.0
    %v1423 = vrcp.pop %v1422
    %v1424 = vmul.f32 1.0, %v1423
    %v1425 = vtanh.pop %v1411
    %v1426 = vxor.u32 %v1412, 2147483648
    %v1427 = vmul.f32 %v1426, 1.442695
    %v1428 = vpow.pop %v1427
    %v1429 = vadd.f32 %v1428, 1.0
    %v1430 = vrcp.pop %v1429
    %v1431 = vmul.f32 1.0, %v1430
    %v1432 = vmul.f32 %v1424, %v1216
    %v1433 = vmul.f32 %v1418, %v1425
    %v1434 = vadd.f32 %v1432, %v1433
    %v1435 = vtanh.pop %v1434
    %v1436 = vmul.f32 %v1431, %v1435
    %v1437 = vpack.c.bf16 %v1436, %v1436
    %v1438 = vpack.c.bf16 %v1326, %v1326
    %1439 = vmatprep.subr.bf16.mxu0 %v904
    %1440 = vmatpush1.bf16.msra.mxu0 %v903
    %1441 = vmatprep.subr.bf16.mxu0 %v900
    %1442 = vmatpush1.bf16.msra.mxu0 %v899
    %1443 = vmatprep.subr.bf16.mxu0 %v896
    %1444 = vmatpush1.bf16.msra.mxu0 %v895
    %1445 = vmatprep.subr.bf16.mxu0 %v892
    %1446 = vmatpush1.bf16.msra.mxu0 %v891
    %1447 = vmatprep.subr.bf16.mxu0 %v888
    %1448 = vmatpush1.bf16.msra.mxu0 %v887
    %1449 = vmatprep.subr.bf16.mxu0 %v884
    %1450 = vmatpush1.bf16.msra.mxu0 %v883
    %1451 = vmatprep.subr.bf16.mxu0 %v880
    %1452 = vmatpush1.bf16.msra.mxu0 %v879
    %1453 = vmatprep.subr.bf16.mxu0 %v876
    %1454 = vmatpush1.bf16.msra.mxu0 %v875
    %1455 = vmatprep.subr.bf16.mxu0 %v936
    %1456 = vmatpush2.bf16.msra.mxu0 %v935
    %1457 = vmatprep.subr.bf16.mxu0 %v932
    %1458 = vmatpush2.bf16.msra.mxu0 %v931
    %1459 = vmatprep.subr.bf16.mxu0 %v928
    %1460 = vmatpush2.bf16.msra.mxu0 %v927
    %1461 = vmatprep.subr.bf16.mxu0 %v924
    %1462 = vmatpush2.bf16.msra.mxu0 %v923
    %1463 = vmatprep.subr.bf16.mxu0 %v920
    %1464 = vmatpush2.bf16.msra.mxu0 %v919
    %1465 = vmatprep.subr.bf16.mxu0 %v916
    %1466 = vmatpush2.bf16.msra.mxu0 %v915
    %1467 = vmatprep.subr.bf16.mxu0 %v912
    %1468 = vmatpush2.bf16.msra.mxu0 %v911
    %1469 = vmatprep.subr.bf16.mxu0 %v908
    %1470 = vmatpush2.bf16.msra.mxu0 %v907
    %1471 = vmatprep.mubr.bf16.mxu0 %v1438
    %1472 = vmatmul.mubr.bf16.gmra.mxu0 %v1437
    %v1473 = vpop.f32.mrf.mxu0
    %v1474 = vadd.f32 %v394, %v1473
    %v1475 = vpop.f32.mrf.mxu0
    %v1476 = vadd.f32 %v398, %v1475
    %v1477 = vpop.f32.mrf.mxu0
    %v1478 = vpop.f32.mrf.mxu0
    %1479 = vdwg.mxu0
    %1480 = vmatprep.subr.bf16.mxu0 %v906
    %1481 = vmatpush1.bf16.msra.mxu0 %v905
    %1482 = vmatprep.subr.bf16.mxu0 %v902
    %1483 = vmatpush1.bf16.msra.mxu0 %v901
    %1484 = vmatprep.subr.bf16.mxu0 %v898
    %1485 = vmatpush1.bf16.msra.mxu0 %v897
    %1486 = vmatprep.subr.bf16.mxu0 %v894
    %1487 = vmatpush1.bf16.msra.mxu0 %v893
    %1488 = vmatprep.subr.bf16.mxu0 %v890
    %1489 = vmatpush1.bf16.msra.mxu0 %v889
    %1490 = vmatprep.subr.bf16.mxu0 %v886
    %1491 = vmatpush1.bf16.msra.mxu0 %v885
    %1492 = vmatprep.subr.bf16.mxu0 %v882
    %1493 = vmatpush1.bf16.msra.mxu0 %v881
    %1494 = vmatprep.subr.bf16.mxu0 %v878
    %1495 = vmatpush1.bf16.msra.mxu0 %v877
    %1496 = vmatprep.subr.bf16.mxu0 %v938
    %1497 = vmatpush2.bf16.msra.mxu0 %v937
    %1498 = vmatprep.subr.bf16.mxu0 %v934
    %1499 = vmatpush2.bf16.msra.mxu0 %v933
    %1500 = vmatprep.subr.bf16.mxu0 %v930
    %1501 = vmatpush2.bf16.msra.mxu0 %v929
    %1502 = vmatprep.subr.bf16.mxu0 %v926
    %1503 = vmatpush2.bf16.msra.mxu0 %v925
    %1504 = vmatprep.subr.bf16.mxu0 %v922
    %1505 = vmatpush2.bf16.msra.mxu0 %v921
    %1506 = vmatprep.subr.bf16.mxu0 %v918
    %1507 = vmatpush2.bf16.msra.mxu0 %v917
    %1508 = vmatprep.subr.bf16.mxu0 %v914
    %1509 = vmatpush2.bf16.msra.mxu0 %v913
    %1510 = vmatprep.subr.bf16.mxu0 %v910
    %1511 = vmatpush2.bf16.msra.mxu0 %v909
    %1512 = vmatprep.mubr.bf16.mxu0 %v1438
    %1513 = vmatmul.mubr.bf16.gmra.mxu0 %v1437
    %v1514 = vpop.f32.mrf.mxu0
    %v1515 = vadd.f32 %v402, %v1514
    %v1516 = vpop.f32.mrf.mxu0
    %v1517 = vadd.f32 %v406, %v1516
    %v1518 = vpop.f32.mrf.mxu0
    %v1519 = vpop.f32.mrf.mxu0
    %1520 = vdwg.mxu0
    %v1521 = vxor.u32 %v1474, 2147483648
    %v1522 = vmul.f32 %v1521, 1.442695
    %v1523 = vpow.pop %v1522
    %v1524 = vadd.f32 %v1523, 1.0
    %v1525 = vrcp.pop %v1524
    %v1526 = vmul.f32 1.0, %v1525
    %v1527 = vxor.u32 %v1476, 2147483648
    %v1528 = vmul.f32 %v1527, 1.442695
    %v1529 = vpow.pop %v1528
    %v1530 = vadd.f32 %v1529, 1.0
    %v1531 = vrcp.pop %v1530
    %v1532 = vmul.f32 1.0, %v1531
    %v1533 = vtanh.pop %v1515
    %v1534 = vxor.u32 %v1517, 2147483648
    %v1535 = vmul.f32 %v1534, 1.442695
    %v1536 = vpow.pop %v1535
    %v1537 = vadd.f32 %v1536, 1.0
    %v1538 = vrcp.pop %v1537
    %v1539 = vmul.f32 1.0, %v1538
    %v1540 = vmul.f32 %v1532, %v1324
    %v1541 = vmul.f32 %v1526, %v1533
    %v1542 = vadd.f32 %v1540, %v1541
    %v1543 = vtanh.pop %v1542
    %v1544 = vmul.f32 %v1539, %v1543
    %1545 = vmatprep.subr.bf16.mxu0 %v536
    %1546 = vmatpush1.bf16.msra.mxu0 %v535
    %1547 = vmatprep.subr.bf16.mxu0 %v532
    %1548 = vmatpush1.bf16.msra.mxu0 %v531
    %1549 = vmatprep.subr.bf16.mxu0 %v528
    %1550 = vmatpush1.bf16.msra.mxu0 %v527
    %1551 = vmatprep.subr.bf16.mxu0 %v524
    %1552 = vmatpush1.bf16.msra.mxu0 %v523
    %1553 = vmatprep.subr.bf16.mxu0 %v520
    %1554 = vmatpush1.bf16.msra.mxu0 %v519
    %1555 = vmatprep.subr.bf16.mxu0 %v516
    %1556 = vmatpush1.bf16.msra.mxu0 %v515
    %1557 = vmatprep.subr.bf16.mxu0 %v512
    %1558 = vmatpush1.bf16.msra.mxu0 %v511
    %1559 = vmatprep.subr.bf16.mxu0 %v508
    %1560 = vmatpush1.bf16.msra.mxu0 %v507
    %1561 = vmatprep.subr.bf16.mxu0 0
    %1562 = vmatpush2.bf16.msra.mxu0 0
    %1563 = vmatprep.subr.bf16.mxu0 0
    %1564 = vmatpush2.bf16.msra.mxu0 0
    %1565 = vmatprep.subr.bf16.mxu0 0
    %1566 = vmatpush2.bf16.msra.mxu0 0
    %1567 = vmatprep.subr.bf16.mxu0 0
    %1568 = vmatpush2.bf16.msra.mxu0 0
    %1569 = vmatprep.subr.bf16.mxu0 0
    %1570 = vmatpush2.bf16.msra.mxu0 0
    %1571 = vmatprep.subr.bf16.mxu0 0
    %1572 = vmatpush2.bf16.msra.mxu0 0
    %1573 = vmatprep.subr.bf16.mxu0 0
    %1574 = vmatpush2.bf16.msra.mxu0 0
    %1575 = vmatprep.subr.bf16.mxu0 0
    %1576 = vmatpush2.bf16.msra.mxu0 0
    %1577 = vmatprep.mubr.bf16.mxu0 0
    %1578 = vmatmul.mubr.bf16.gmra.mxu0 %v1437
    %v1579 = vpop.f32.mrf.mxu0
    %v1580 = vadd.f32 0.0, %v1579
    %v1581 = vpop.f32.mrf.mxu0
    %v1582 = vadd.f32 0.0, %v1581
    %v1583 = vpop.f32.mrf.mxu0
    %v1584 = vpop.f32.mrf.mxu0
    %1585 = vdwg.mxu0
    %1586 = vmatprep.subr.bf16.mxu0 %v538
    %1587 = vmatpush1.bf16.msra.mxu0 %v537
    %1588 = vmatprep.subr.bf16.mxu0 %v534
    %1589 = vmatpush1.bf16.msra.mxu0 %v533
    %1590 = vmatprep.subr.bf16.mxu0 %v530
    %1591 = vmatpush1.bf16.msra.mxu0 %v529
    %1592 = vmatprep.subr.bf16.mxu0 %v526
    %1593 = vmatpush1.bf16.msra.mxu0 %v525
    %1594 = vmatprep.subr.bf16.mxu0 %v522
    %1595 = vmatpush1.bf16.msra.mxu0 %v521
    %1596 = vmatprep.subr.bf16.mxu0 %v518
    %1597 = vmatpush1.bf16.msra.mxu0 %v517
    %1598 = vmatprep.subr.bf16.mxu0 %v514
    %1599 = vmatpush1.bf16.msra.mxu0 %v513
    %1600 = vmatprep.subr.bf16.mxu0 %v510
    %1601 = vmatpush1.bf16.msra.mxu0 %v509
    %1602 = vmatprep.subr.bf16.mxu0 0
    %1603 = vmatpush2.bf16.msra.mxu0 0
    %1604 = vmatprep.subr.bf16.mxu0 0
    %1605 = vmatpush2.bf16.msra.mxu0 0
    %1606 = vmatprep.subr.bf16.mxu0 0
    %1607 = vmatpush2.bf16.msra.mxu0 0
    %1608 = vmatprep.subr.bf16.mxu0 0
    %1609 = vmatpush2.bf16.msra.mxu0 0
    %1610 = vmatprep.subr.bf16.mxu0 0
    %1611 = vmatpush2.bf16.msra.mxu0 0
    %1612 = vmatprep.subr.bf16.mxu0 0
    %1613 = vmatpush2.bf16.msra.mxu0 0
    %1614 = vmatprep.subr.bf16.mxu0 0
    %1615 = vmatpush2.bf16.msra.mxu0 0
    %1616 = vmatprep.subr.bf16.mxu0 0
    %1617 = vmatpush2.bf16.msra.mxu0 0
    %1618 = vmatprep.mubr.bf16.mxu0 0
    %1619 = vmatmul.mubr.bf16.gmra.mxu0 %v1437
    %v1620 = vpop.f32.mrf.mxu0
    %v1621 = vadd.f32 0.0, %v1620
    %v1622 = vpop.f32.mrf.mxu0
    %v1623 = vadd.f32 0.0, %v1622
    %v1624 = vpop.f32.mrf.mxu0
    %v1625 = vpop.f32.mrf.mxu0
    %1626 = vdwg.mxu0
    %v1627 = vadd.f32 %v196, %v1580
    %v1628 = vadd.f32 %v198, %v1582
    %v1629 = vadd.f32 %v269, %v1621
    %v1630 = vadd.f32 %v271, %v1623
    %v1631 = vxor.u32 %v1627, 2147483648
    %v1632 = vmul.f32 %v1631, 1.442695
    %v1633 = vpow.pop %v1632
    %v1634 = vadd.f32 %v1633, 1.0
    %v1635 = vrcp.pop %v1634
    %v1636 = vmul.f32 1.0, %v1635
    %v1637 = vxor.u32 %v1628, 2147483648
    %v1638 = vmul.f32 %v1637, 1.442695
    %v1639 = vpow.pop %v1638
    %v1640 = vadd.f32 %v1639, 1.0
    %v1641 = vrcp.pop %v1640
    %v1642 = vmul.f32 1.0, %v1641
    %v1643 = vtanh.pop %v1629
    %v1644 = vxor.u32 %v1630, 2147483648
    %v1645 = vmul.f32 %v1644, 1.442695
    %v1646 = vpow.pop %v1645
    %v1647 = vadd.f32 %v1646, 1.0
    %v1648 = vrcp.pop %v1647
    %v1649 = vmul.f32 1.0, %v1648
    %v1650 = vmul.f32 %v1642, %v1434
    %v1651 = vmul.f32 %v1636, %v1643
    %v1652 = vadd.f32 %v1650, %v1651
    %v1653 = vtanh.pop %v1652
    %v1654 = vmul.f32 %v1649, %v1653
    %v1655 = vpack.c.bf16 %v1654, %v1654
    %v1656 = vpack.c.bf16 %v1544, %v1544
    %1657 = vmatprep.subr.bf16.mxu0 %v904
    %1658 = vmatpush1.bf16.msra.mxu0 %v903
    %1659 = vmatprep.subr.bf16.mxu0 %v900
    %1660 = vmatpush1.bf16.msra.mxu0 %v899
    %1661 = vmatprep.subr.bf16.mxu0 %v896
    %1662 = vmatpush1.bf16.msra.mxu0 %v895
    %1663 = vmatprep.subr.bf16.mxu0 %v892
    %1664 = vmatpush1.bf16.msra.mxu0 %v891
    %1665 = vmatprep.subr.bf16.mxu0 %v888
    %1666 = vmatpush1.bf16.msra.mxu0 %v887
    %1667 = vmatprep.subr.bf16.mxu0 %v884
    %1668 = vmatpush1.bf16.msra.mxu0 %v883
    %1669 = vmatprep.subr.bf16.mxu0 %v880
    %1670 = vmatpush1.bf16.msra.mxu0 %v879
    %1671 = vmatprep.subr.bf16.mxu0 %v876
    %1672 = vmatpush1.bf16.msra.mxu0 %v875
    %1673 = vmatprep.subr.bf16.mxu0 %v936
    %1674 = vmatpush2.bf16.msra.mxu0 %v935
    %1675 = vmatprep.subr.bf16.mxu0 %v932
    %1676 = vmatpush2.bf16.msra.mxu0 %v931
    %1677 = vmatprep.subr.bf16.mxu0 %v928
    %1678 = vmatpush2.bf16.msra.mxu0 %v927
    %1679 = vmatprep.subr.bf16.mxu0 %v924
    %1680 = vmatpush2.bf16.msra.mxu0 %v923
    %1681 = vmatprep.subr.bf16.mxu0 %v920
    %1682 = vmatpush2.bf16.msra.mxu0 %v919
    %1683 = vmatprep.subr.bf16.mxu0 %v916
    %1684 = vmatpush2.bf16.msra.mxu0 %v915
    %1685 = vmatprep.subr.bf16.mxu0 %v912
    %1686 = vmatpush2.bf16.msra.mxu0 %v911
    %1687 = vmatprep.subr.bf16.mxu0 %v908
    %1688 = vmatpush2.bf16.msra.mxu0 %v907
    %1689 = vmatprep.mubr.bf16.mxu0 %v1656
    %1690 = vmatmul.mubr.bf16.gmra.mxu0 %v1655
    %v1691 = vpop.f32.mrf.mxu0
    %v1692 = vadd.f32 %v394, %v1691
    %v1693 = vpop.f32.mrf.mxu0
    %v1694 = vadd.f32 %v398, %v1693
    %v1695 = vpop.f32.mrf.mxu0
    %v1696 = vpop.f32.mrf.mxu0
    %1697 = vdwg.mxu0
    %1698 = vmatprep.subr.bf16.mxu0 %v906
    %1699 = vmatpush1.bf16.msra.mxu0 %v905
    %1700 = vmatprep.subr.bf16.mxu0 %v902
    %1701 = vmatpush1.bf16.msra.mxu0 %v901
    %1702 = vmatprep.subr.bf16.mxu0 %v898
    %1703 = vmatpush1.bf16.msra.mxu0 %v897
    %1704 = vmatprep.subr.bf16.mxu0 %v894
    %1705 = vmatpush1.bf16.msra.mxu0 %v893
    %1706 = vmatprep.subr.bf16.mxu0 %v890
    %1707 = vmatpush1.bf16.msra.mxu0 %v889
    %1708 = vmatprep.subr.bf16.mxu0 %v886
    %1709 = vmatpush1.bf16.msra.mxu0 %v885
    %1710 = vmatprep.subr.bf16.mxu0 %v882
    %1711 = vmatpush1.bf16.msra.mxu0 %v881
    %1712 = vmatprep.subr.bf16.mxu0 %v878
    %1713 = vmatpush1.bf16.msra.mxu0 %v877
    %1714 = vmatprep.subr.bf16.mxu0 %v938
    %1715 = vmatpush2.bf16.msra.mxu0 %v937
    %1716 = vmatprep.subr.bf16.mxu0 %v934
    %1717 = vmatpush2.bf16.msra.mxu0 %v933
    %1718 = vmatprep.subr.bf16.mxu0 %v930
    %1719 = vmatpush2.bf16.msra.mxu0 %v929
    %1720 = vmatprep.subr.bf16.mxu0 %v926
    %1721 = vmatpush2.bf16.msra.mxu0 %v925
    %1722 = vmatprep.subr.bf16.mxu0 %v922
    %1723 = vmatpush2.bf16.msra.mxu0 %v921
    %1724 = vmatprep.subr.bf16.mxu0 %v918
    %1725 = vmatpush2.bf16.msra.mxu0 %v917
    %1726 = vmatprep.subr.bf16.mxu0 %v914
    %1727 = vmatpush2.bf16.msra.mxu0 %v913
    %1728 = vmatprep.subr.bf16.mxu0 %v910
    %1729 = vmatpush2.bf16.msra.mxu0 %v909
    %1730 = vmatprep.mubr.bf16.mxu0 %v1656
    %1731 = vmatmul.mubr.bf16.gmra.mxu0 %v1655
    %v1732 = vpop.f32.mrf.mxu0
    %v1733 = vadd.f32 %v402, %v1732
    %v1734 = vpop.f32.mrf.mxu0
    %v1735 = vadd.f32 %v406, %v1734
    %v1736 = vpop.f32.mrf.mxu0
    %v1737 = vpop.f32.mrf.mxu0
    %1738 = vdwg.mxu0
    %v1739 = vxor.u32 %v1692, 2147483648
    %v1740 = vmul.f32 %v1739, 1.442695
    %v1741 = vpow.pop %v1740
    %v1742 = vadd.f32 %v1741, 1.0
    %v1743 = vrcp.pop %v1742
    %v1744 = vmul.f32 1.0, %v1743
    %v1745 = vxor.u32 %v1694, 2147483648
    %v1746 = vmul.f32 %v1745, 1.442695
    %v1747 = vpow.pop %v1746
    %v1748 = vadd.f32 %v1747, 1.0
    %v1749 = vrcp.pop %v1748
    %v1750 = vmul.f32 1.0, %v1749
    %v1751 = vtanh.pop %v1733
    %v1752 = vxor.u32 %v1735, 2147483648
    %v1753 = vmul.f32 %v1752, 1.442695
    %v1754 = vpow.pop %v1753
    %v1755 = vadd.f32 %v1754, 1.0
    %v1756 = vrcp.pop %v1755
    %v1757 = vmul.f32 1.0, %v1756
    %v1758 = vmul.f32 %v1750, %v1542
    %v1759 = vmul.f32 %v1744, %v1751
    %v1760 = vadd.f32 %v1758, %v1759
    %v1761 = vtanh.pop %v1760
    %v1762 = vmul.f32 %v1757, %v1761
    %1763 = vmatprep.subr.bf16.mxu0 %v536
    %1764 = vmatpush1.bf16.msra.mxu0 %v535
    %1765 = vmatprep.subr.bf16.mxu0 %v532
    %1766 = vmatpush1.bf16.msra.mxu0 %v531
    %1767 = vmatprep.subr.bf16.mxu0 %v528
    %1768 = vmatpush1.bf16.msra.mxu0 %v527
    %1769 = vmatprep.subr.bf16.mxu0 %v524
    %1770 = vmatpush1.bf16.msra.mxu0 %v523
    %1771 = vmatprep.subr.bf16.mxu0 %v520
    %1772 = vmatpush1.bf16.msra.mxu0 %v519
    %1773 = vmatprep.subr.bf16.mxu0 %v516
    %1774 = vmatpush1.bf16.msra.mxu0 %v515
    %1775 = vmatprep.subr.bf16.mxu0 %v512
    %1776 = vmatpush1.bf16.msra.mxu0 %v511
    %1777 = vmatprep.subr.bf16.mxu0 %v508
    %1778 = vmatpush1.bf16.msra.mxu0 %v507
    %1779 = vmatprep.subr.bf16.mxu0 0
    %1780 = vmatpush2.bf16.msra.mxu0 0
    %1781 = vmatprep.subr.bf16.mxu0 0
    %1782 = vmatpush2.bf16.msra.mxu0 0
    %1783 = vmatprep.subr.bf16.mxu0 0
    %1784 = vmatpush2.bf16.msra.mxu0 0
    %1785 = vmatprep.subr.bf16.mxu0 0
    %1786 = vmatpush2.bf16.msra.mxu0 0
    %1787 = vmatprep.subr.bf16.mxu0 0
    %1788 = vmatpush2.bf16.msra.mxu0 0
    %1789 = vmatprep.subr.bf16.mxu0 0
    %1790 = vmatpush2.bf16.msra.mxu0 0
    %1791 = vmatprep.subr.bf16.mxu0 0
    %1792 = vmatpush2.bf16.msra.mxu0 0
    %1793 = vmatprep.subr.bf16.mxu0 0
    %1794 = vmatpush2.bf16.msra.mxu0 0
    %1795 = vmatprep.mubr.bf16.mxu0 0
    %1796 = vmatmul.mubr.bf16.gmra.mxu0 %v1655
    %v1797 = vpop.f32.mrf.mxu0
    %v1798 = vadd.f32 0.0, %v1797
    %v1799 = vpop.f32.mrf.mxu0
    %v1800 = vadd.f32 0.0, %v1799
    %v1801 = vpop.f32.mrf.mxu0
    %v1802 = vpop.f32.mrf.mxu0
    %1803 = vdwg.mxu0
    %1804 = vmatprep.subr.bf16.mxu0 %v538
    %1805 = vmatpush1.bf16.msra.mxu0 %v537
    %1806 = vmatprep.subr.bf16.mxu0 %v534
    %1807 = vmatpush1.bf16.msra.mxu0 %v533
    %1808 = vmatprep.subr.bf16.mxu0 %v530
    %1809 = vmatpush1.bf16.msra.mxu0 %v529
    %1810 = vmatprep.subr.bf16.mxu0 %v526
    %1811 = vmatpush1.bf16.msra.mxu0 %v525
    %1812 = vmatprep.subr.bf16.mxu0 %v522
    %1813 = vmatpush1.bf16.msra.mxu0 %v521
    %1814 = vmatprep.subr.bf16.mxu0 %v518
    %1815 = vmatpush1.bf16.msra.mxu0 %v517
    %1816 = vmatprep.subr.bf16.mxu0 %v514
    %1817 = vmatpush1.bf16.msra.mxu0 %v513
    %1818 = vmatprep.subr.bf16.mxu0 %v510
    %1819 = vmatpush1.bf16.msra.mxu0 %v509
    %1820 = vmatprep.subr.bf16.mxu0 0
    %1821 = vmatpush2.bf16.msra.mxu0 0
    %1822 = vmatprep.subr.bf16.mxu0 0
    %1823 = vmatpush2.bf16.msra.mxu0 0
    %1824 = vmatprep.subr.bf16.mxu0 0
    %1825 = vmatpush2.bf16.msra.mxu0 0
    %1826 = vmatprep.subr.bf16.mxu0 0
    %1827 = vmatpush2.bf16.msra.mxu0 0
    %1828 = vmatprep.subr.bf16.mxu0 0
    %1829 = vmatpush2.bf16.msra.mxu0 0
    %1830 = vmatprep.subr.bf16.mxu0 0
    %1831 = vmatpush2.bf16.msra.mxu0 0
    %1832 = vmatprep.subr.bf16.mxu0 0
    %1833 = vmatpush2.bf16.msra.mxu0 0
    %1834 = vmatprep.subr.bf16.mxu0 0
    %1835 = vmatpush2.bf16.msra.mxu0 0
    %1836 = vmatprep.mubr.bf16.mxu0 0
    %1837 = vmatmul.mubr.bf16.gmra.mxu0 %v1655
    %v1838 = vpop.f32.mrf.mxu0
    %v1839 = vadd.f32 0.0, %v1838
    %v1840 = vpop.f32.mrf.mxu0
    %v1841 = vadd.f32 0.0, %v1840
    %v1842 = vpop.f32.mrf.mxu0
    %v1843 = vpop.f32.mrf.mxu0
    %1844 = vdwg.mxu0
    %v1845 = vadd.f32 %v202, %v1798
    %v1846 = vadd.f32 %v204, %v1800
    %v1847 = vadd.f32 %v275, %v1839
    %v1848 = vadd.f32 %v277, %v1841
    %v1849 = vxor.u32 %v1845, 2147483648
    %v1850 = vmul.f32 %v1849, 1.442695
    %v1851 = vpow.pop %v1850
    %v1852 = vadd.f32 %v1851, 1.0
    %v1853 = vrcp.pop %v1852
    %v1854 = vmul.f32 1.0, %v1853
    %v1855 = vxor.u32 %v1846, 2147483648
    %v1856 = vmul.f32 %v1855, 1.442695
    %v1857 = vpow.pop %v1856
    %v1858 = vadd.f32 %v1857, 1.0
    %v1859 = vrcp.pop %v1858
    %v1860 = vmul.f32 1.0, %v1859
    %v1861 = vtanh.pop %v1847
    %v1862 = vxor.u32 %v1848, 2147483648
    %v1863 = vmul.f32 %v1862, 1.442695
    %v1864 = vpow.pop %v1863
    %v1865 = vadd.f32 %v1864, 1.0
    %v1866 = vrcp.pop %v1865
    %v1867 = vmul.f32 1.0, %v1866
    %v1868 = vmul.f32 %v1860, %v1652
    %v1869 = vmul.f32 %v1854, %v1861
    %v1870 = vadd.f32 %v1868, %v1869
    %v1871 = vtanh.pop %v1870
    %v1872 = vmul.f32 %v1867, %v1871
    %v1873 = vpack.c.bf16 %v1872, %v1872
    %v1874 = vpack.c.bf16 %v1762, %v1762
    %1875 = vmatprep.subr.bf16.mxu0 %v904
    %1876 = vmatpush1.bf16.msra.mxu0 %v903
    %1877 = vmatprep.subr.bf16.mxu0 %v900
    %1878 = vmatpush1.bf16.msra.mxu0 %v899
    %1879 = vmatprep.subr.bf16.mxu0 %v896
    %1880 = vmatpush1.bf16.msra.mxu0 %v895
    %1881 = vmatprep.subr.bf16.mxu0 %v892
    %1882 = vmatpush1.bf16.msra.mxu0 %v891
    %1883 = vmatprep.subr.bf16.mxu0 %v888
    %1884 = vmatpush1.bf16.msra.mxu0 %v887
    %1885 = vmatprep.subr.bf16.mxu0 %v884
    %1886 = vmatpush1.bf16.msra.mxu0 %v883
    %1887 = vmatprep.subr.bf16.mxu0 %v880
    %1888 = vmatpush1.bf16.msra.mxu0 %v879
    %1889 = vmatprep.subr.bf16.mxu0 %v876
    %1890 = vmatpush1.bf16.msra.mxu0 %v875
    %1891 = vmatprep.subr.bf16.mxu0 %v936
    %1892 = vmatpush2.bf16.msra.mxu0 %v935
    %1893 = vmatprep.subr.bf16.mxu0 %v932
    %1894 = vmatpush2.bf16.msra.mxu0 %v931
    %1895 = vmatprep.subr.bf16.mxu0 %v928
    %1896 = vmatpush2.bf16.msra.mxu0 %v927
    %1897 = vmatprep.subr.bf16.mxu0 %v924
    %1898 = vmatpush2.bf16.msra.mxu0 %v923
    %1899 = vmatprep.subr.bf16.mxu0 %v920
    %1900 = vmatpush2.bf16.msra.mxu0 %v919
    %1901 = vmatprep.subr.bf16.mxu0 %v916
    %1902 = vmatpush2.bf16.msra.mxu0 %v915
    %1903 = vmatprep.subr.bf16.mxu0 %v912
    %1904 = vmatpush2.bf16.msra.mxu0 %v911
    %1905 = vmatprep.subr.bf16.mxu0 %v908
    %1906 = vmatpush2.bf16.msra.mxu0 %v907
    %1907 = vmatprep.mubr.bf16.mxu0 %v1874
    %1908 = vmatmul.mubr.bf16.gmra.mxu0 %v1873
    %v1909 = vpop.f32.mrf.mxu0
    %v1910 = vadd.f32 %v394, %v1909
    %v1911 = vpop.f32.mrf.mxu0
    %v1912 = vadd.f32 %v398, %v1911
    %v1913 = vpop.f32.mrf.mxu0
    %v1914 = vpop.f32.mrf.mxu0
    %1915 = vdwg.mxu0
    %1916 = vmatprep.subr.bf16.mxu0 %v906
    %1917 = vmatpush1.bf16.msra.mxu0 %v905
    %1918 = vmatprep.subr.bf16.mxu0 %v902
    %1919 = vmatpush1.bf16.msra.mxu0 %v901
    %1920 = vmatprep.subr.bf16.mxu0 %v898
    %1921 = vmatpush1.bf16.msra.mxu0 %v897
    %1922 = vmatprep.subr.bf16.mxu0 %v894
    %1923 = vmatpush1.bf16.msra.mxu0 %v893
    %1924 = vmatprep.subr.bf16.mxu0 %v890
    %1925 = vmatpush1.bf16.msra.mxu0 %v889
    %1926 = vmatprep.subr.bf16.mxu0 %v886
    %1927 = vmatpush1.bf16.msra.mxu0 %v885
    %1928 = vmatprep.subr.bf16.mxu0 %v882
    %1929 = vmatpush1.bf16.msra.mxu0 %v881
    %1930 = vmatprep.subr.bf16.mxu0 %v878
    %1931 = vmatpush1.bf16.msra.mxu0 %v877
    %1932 = vmatprep.subr.bf16.mxu0 %v938
    %1933 = vmatpush2.bf16.msra.mxu0 %v937
    %1934 = vmatprep.subr.bf16.mxu0 %v934
    %1935 = vmatpush2.bf16.msra.mxu0 %v933
    %1936 = vmatprep.subr.bf16.mxu0 %v930
    %1937 = vmatpush2.bf16.msra.mxu0 %v929
    %1938 = vmatprep.subr.bf16.mxu0 %v926
    %1939 = vmatpush2.bf16.msra.mxu0 %v925
    %1940 = vmatprep.subr.bf16.mxu0 %v922
    %1941 = vmatpush2.bf16.msra.mxu0 %v921
    %1942 = vmatprep.subr.bf16.mxu0 %v918
    %1943 = vmatpush2.bf16.msra.mxu0 %v917
    %1944 = vmatprep.subr.bf16.mxu0 %v914
    %1945 = vmatpush2.bf16.msra.mxu0 %v913
    %1946 = vmatprep.subr.bf16.mxu0 %v910
    %1947 = vmatpush2.bf16.msra.mxu0 %v909
    %1948 = vmatprep.mubr.bf16.mxu0 %v1874
    %1949 = vmatmul.mubr.bf16.gmra.mxu0 %v1873
    %v1950 = vpop.f32.mrf.mxu0
    %v1951 = vadd.f32 %v402, %v1950
    %v1952 = vpop.f32.mrf.mxu0
    %v1953 = vadd.f32 %v406, %v1952
    %v1954 = vpop.f32.mrf.mxu0
    %v1955 = vpop.f32.mrf.mxu0
    %1956 = vdwg.mxu0
    %v1957 = vxor.u32 %v1910, 2147483648
    %v1958 = vmul.f32 %v1957, 1.442695
    %v1959 = vpow.pop %v1958
    %v1960 = vadd.f32 %v1959, 1.0
    %v1961 = vrcp.pop %v1960
    %v1962 = vmul.f32 1.0, %v1961
    %v1963 = vxor.u32 %v1912, 2147483648
    %v1964 = vmul.f32 %v1963, 1.442695
    %v1965 = vpow.pop %v1964
    %v1966 = vadd.f32 %v1965, 1.0
    %v1967 = vrcp.pop %v1966
    %v1968 = vmul.f32 1.0, %v1967
    %v1969 = vtanh.pop %v1951
    %v1970 = vxor.u32 %v1953, 2147483648
    %v1971 = vmul.f32 %v1970, 1.442695
    %v1972 = vpow.pop %v1971
    %v1973 = vadd.f32 %v1972, 1.0
    %v1974 = vrcp.pop %v1973
    %v1975 = vmul.f32 1.0, %v1974
    %v1976 = vmul.f32 %v1968, %v1760
    %v1977 = vmul.f32 %v1962, %v1969
    %v1978 = vadd.f32 %v1976, %v1977
    %v1979 = vtanh.pop %v1978
    %v1980 = vmul.f32 %v1975, %v1979
    %1981 = vmatprep.subr.bf16.mxu0 %v536
    %1982 = vmatpush1.bf16.msra.mxu0 %v535
    %1983 = vmatprep.subr.bf16.mxu0 %v532
    %1984 = vmatpush1.bf16.msra.mxu0 %v531
    %1985 = vmatprep.subr.bf16.mxu0 %v528
    %1986 = vmatpush1.bf16.msra.mxu0 %v527
    %1987 = vmatprep.subr.bf16.mxu0 %v524
    %1988 = vmatpush1.bf16.msra.mxu0 %v523
    %1989 = vmatprep.subr.bf16.mxu0 %v520
    %1990 = vmatpush1.bf16.msra.mxu0 %v519
    %1991 = vmatprep.subr.bf16.mxu0 %v516
    %1992 = vmatpush1.bf16.msra.mxu0 %v515
    %1993 = vmatprep.subr.bf16.mxu0 %v512
    %1994 = vmatpush1.bf16.msra.mxu0 %v511
    %1995 = vmatprep.subr.bf16.mxu0 %v508
    %1996 = vmatpush1.bf16.msra.mxu0 %v507
    %1997 = vmatprep.subr.bf16.mxu0 0
    %1998 = vmatpush2.bf16.msra.mxu0 0
    %1999 = vmatprep.subr.bf16.mxu0 0
    %2000 = vmatpush2.bf16.msra.mxu0 0
    %2001 = vmatprep.subr.bf16.mxu0 0
    %2002 = vmatpush2.bf16.msra.mxu0 0
    %2003 = vmatprep.subr.bf16.mxu0 0
    %2004 = vmatpush2.bf16.msra.mxu0 0
    %2005 = vmatprep.subr.bf16.mxu0 0
    %2006 = vmatpush2.bf16.msra.mxu0 0
    %2007 = vmatprep.subr.bf16.mxu0 0
    %2008 = vmatpush2.bf16.msra.mxu0 0
    %2009 = vmatprep.subr.bf16.mxu0 0
    %2010 = vmatpush2.bf16.msra.mxu0 0
    %2011 = vmatprep.subr.bf16.mxu0 0
    %2012 = vmatpush2.bf16.msra.mxu0 0
    %2013 = vmatprep.mubr.bf16.mxu0 0
    %2014 = vmatmul.mubr.bf16.gmra.mxu0 %v1873
    %v2015 = vpop.f32.mrf.mxu0
    %v2016 = vadd.f32 0.0, %v2015
    %v2017 = vpop.f32.mrf.mxu0
    %v2018 = vadd.f32 0.0, %v2017
    %v2019 = vpop.f32.mrf.mxu0
    %v2020 = vpop.f32.mrf.mxu0
    %2021 = vdwg.mxu0
    %2022 = vmatprep.subr.bf16.mxu0 %v538
    %2023 = vmatpush1.bf16.msra.mxu0 %v537
    %2024 = vmatprep.subr.bf16.mxu0 %v534
    %2025 = vmatpush1.bf16.msra.mxu0 %v533
    %2026 = vmatprep.subr.bf16.mxu0 %v530
    %2027 = vmatpush1.bf16.msra.mxu0 %v529
    %2028 = vmatprep.subr.bf16.mxu0 %v526
    %2029 = vmatpush1.bf16.msra.mxu0 %v525
    %2030 = vmatprep.subr.bf16.mxu0 %v522
    %2031 = vmatpush1.bf16.msra.mxu0 %v521
    %2032 = vmatprep.subr.bf16.mxu0 %v518
    %2033 = vmatpush1.bf16.msra.mxu0 %v517
    %2034 = vmatprep.subr.bf16.mxu0 %v514
    %2035 = vmatpush1.bf16.msra.mxu0 %v513
    %2036 = vmatprep.subr.bf16.mxu0 %v510
    %2037 = vmatpush1.bf16.msra.mxu0 %v509
    %2038 = vmatprep.subr.bf16.mxu0 0
    %2039 = vmatpush2.bf16.msra.mxu0 0
    %2040 = vmatprep.subr.bf16.mxu0 0
    %2041 = vmatpush2.bf16.msra.mxu0 0
    %2042 = vmatprep.subr.bf16.mxu0 0
    %2043 = vmatpush2.bf16.msra.mxu0 0
    %2044 = vmatprep.subr.bf16.mxu0 0
    %2045 = vmatpush2.bf16.msra.mxu0 0
    %2046 = vmatprep.subr.bf16.mxu0 0
    %2047 = vmatpush2.bf16.msra.mxu0 0
    %2048 = vmatprep.subr.bf16.mxu0 0
    %2049 = vmatpush2.bf16.msra.mxu0 0
    %2050 = vmatprep.subr.bf16.mxu0 0
    %2051 = vmatpush2.bf16.msra.mxu0 0
    %2052 = vmatprep.subr.bf16.mxu0 0
    %2053 = vmatpush2.bf16.msra.mxu0 0
    %2054 = vmatprep.mubr.bf16.mxu0 0
    %2055 = vmatmul.mubr.bf16.gmra.mxu0 %v1873
    %v2056 = vpop.f32.mrf.mxu0
    %v2057 = vadd.f32 0.0, %v2056
    %v2058 = vpop.f32.mrf.mxu0
    %v2059 = vadd.f32 0.0, %v2058
    %v2060 = vpop.f32.mrf.mxu0
    %v2061 = vpop.f32.mrf.mxu0
    %2062 = vdwg.mxu0
    %v2063 = vadd.f32 %v206, %v2016
    %v2064 = vadd.f32 %v208, %v2018
    %v2065 = vadd.f32 %v279, %v2057
    %v2066 = vadd.f32 %v281, %v2059
    %v2067 = vxor.u32 %v2063, 2147483648
    %v2068 = vmul.f32 %v2067, 1.442695
    %v2069 = vpow.pop %v2068
    %v2070 = vadd.f32 %v2069, 1.0
    %v2071 = vrcp.pop %v2070
    %v2072 = vmul.f32 1.0, %v2071
    %v2073 = vxor.u32 %v2064, 2147483648
    %v2074 = vmul.f32 %v2073, 1.442695
    %v2075 = vpow.pop %v2074
    %v2076 = vadd.f32 %v2075, 1.0
    %v2077 = vrcp.pop %v2076
    %v2078 = vmul.f32 1.0, %v2077
    %v2079 = vtanh.pop %v2065
    %v2080 = vxor.u32 %v2066, 2147483648
    %v2081 = vmul.f32 %v2080, 1.442695
    %v2082 = vpow.pop %v2081
    %v2083 = vadd.f32 %v2082, 1.0
    %v2084 = vrcp.pop %v2083
    %v2085 = vmul.f32 1.0, %v2084
    %v2086 = vmul.f32 %v2078, %v1870
    %v2087 = vmul.f32 %v2072, %v2079
    %v2088 = vadd.f32 %v2086, %v2087
    %v2089 = vtanh.pop %v2088
    %v2090 = vmul.f32 %v2085, %v2089
    %v2091 = vpack.c.bf16 %v2090, %v2090
    %v2092 = vpack.c.bf16 %v1980, %v1980
    %2093 = vmatprep.subr.bf16.mxu0 %v904
    %2094 = vmatpush1.bf16.msra.mxu0 %v903
    %2095 = vmatprep.subr.bf16.mxu0 %v900
    %2096 = vmatpush1.bf16.msra.mxu0 %v899
    %2097 = vmatprep.subr.bf16.mxu0 %v896
    %2098 = vmatpush1.bf16.msra.mxu0 %v895
    %2099 = vmatprep.subr.bf16.mxu0 %v892
    %2100 = vmatpush1.bf16.msra.mxu0 %v891
    %2101 = vmatprep.subr.bf16.mxu0 %v888
    %2102 = vmatpush1.bf16.msra.mxu0 %v887
    %2103 = vmatprep.subr.bf16.mxu0 %v884
    %2104 = vmatpush1.bf16.msra.mxu0 %v883
    %2105 = vmatprep.subr.bf16.mxu0 %v880
    %2106 = vmatpush1.bf16.msra.mxu0 %v879
    %2107 = vmatprep.subr.bf16.mxu0 %v876
    %2108 = vmatpush1.bf16.msra.mxu0 %v875
    %2109 = vmatprep.subr.bf16.mxu0 %v936
    %2110 = vmatpush2.bf16.msra.mxu0 %v935
    %2111 = vmatprep.subr.bf16.mxu0 %v932
    %2112 = vmatpush2.bf16.msra.mxu0 %v931
    %2113 = vmatprep.subr.bf16.mxu0 %v928
    %2114 = vmatpush2.bf16.msra.mxu0 %v927
    %2115 = vmatprep.subr.bf16.mxu0 %v924
    %2116 = vmatpush2.bf16.msra.mxu0 %v923
    %2117 = vmatprep.subr.bf16.mxu0 %v920
    %2118 = vmatpush2.bf16.msra.mxu0 %v919
    %2119 = vmatprep.subr.bf16.mxu0 %v916
    %2120 = vmatpush2.bf16.msra.mxu0 %v915
    %2121 = vmatprep.subr.bf16.mxu0 %v912
    %2122 = vmatpush2.bf16.msra.mxu0 %v911
    %2123 = vmatprep.subr.bf16.mxu0 %v908
    %2124 = vmatpush2.bf16.msra.mxu0 %v907
    %2125 = vmatprep.mubr.bf16.mxu0 %v2092
    %2126 = vmatmul.mubr.bf16.gmra.mxu0 %v2091
    %v2127 = vpop.f32.mrf.mxu0
    %v2128 = vadd.f32 %v394, %v2127
    %v2129 = vpop.f32.mrf.mxu0
    %v2130 = vadd.f32 %v398, %v2129
    %v2131 = vpop.f32.mrf.mxu0
    %v2132 = vpop.f32.mrf.mxu0
    %2133 = vdwg.mxu0
    %2134 = vmatprep.subr.bf16.mxu0 %v906
    %2135 = vmatpush1.bf16.msra.mxu0 %v905
    %2136 = vmatprep.subr.bf16.mxu0 %v902
    %2137 = vmatpush1.bf16.msra.mxu0 %v901
    %2138 = vmatprep.subr.bf16.mxu0 %v898
    %2139 = vmatpush1.bf16.msra.mxu0 %v897
    %2140 = vmatprep.subr.bf16.mxu0 %v894
    %2141 = vmatpush1.bf16.msra.mxu0 %v893
    %2142 = vmatprep.subr.bf16.mxu0 %v890
    %2143 = vmatpush1.bf16.msra.mxu0 %v889
    %2144 = vmatprep.subr.bf16.mxu0 %v886
    %2145 = vmatpush1.bf16.msra.mxu0 %v885
    %2146 = vmatprep.subr.bf16.mxu0 %v882
    %2147 = vmatpush1.bf16.msra.mxu0 %v881
    %2148 = vmatprep.subr.bf16.mxu0 %v878
    %2149 = vmatpush1.bf16.msra.mxu0 %v877
    %2150 = vmatprep.subr.bf16.mxu0 %v938
    %2151 = vmatpush2.bf16.msra.mxu0 %v937
    %2152 = vmatprep.subr.bf16.mxu0 %v934
    %2153 = vmatpush2.bf16.msra.mxu0 %v933
    %2154 = vmatprep.subr.bf16.mxu0 %v930
    %2155 = vmatpush2.bf16.msra.mxu0 %v929
    %2156 = vmatprep.subr.bf16.mxu0 %v926
    %2157 = vmatpush2.bf16.msra.mxu0 %v925
    %2158 = vmatprep.subr.bf16.mxu0 %v922
    %2159 = vmatpush2.bf16.msra.mxu0 %v921
    %2160 = vmatprep.subr.bf16.mxu0 %v918
    %2161 = vmatpush2.bf16.msra.mxu0 %v917
    %2162 = vmatprep.subr.bf16.mxu0 %v914
    %2163 = vmatpush2.bf16.msra.mxu0 %v913
    %2164 = vmatprep.subr.bf16.mxu0 %v910
    %2165 = vmatpush2.bf16.msra.mxu0 %v909
    %2166 = vmatprep.mubr.bf16.mxu0 %v2092
    %2167 = vmatmul.mubr.bf16.gmra.mxu0 %v2091
    %v2168 = vpop.f32.mrf.mxu0
    %v2169 = vadd.f32 %v402, %v2168
    %v2170 = vpop.f32.mrf.mxu0
    %v2171 = vadd.f32 %v406, %v2170
    %v2172 = vpop.f32.mrf.mxu0
    %v2173 = vpop.f32.mrf.mxu0
    %2174 = vdwg.mxu0
    %v2175 = vxor.u32 %v2128, 2147483648
    %v2176 = vmul.f32 %v2175, 1.442695
    %v2177 = vpow.pop %v2176
    %v2178 = vadd.f32 %v2177, 1.0
    %v2179 = vrcp.pop %v2178
    %v2180 = vmul.f32 1.0, %v2179
    %v2181 = vxor.u32 %v2130, 2147483648
    %v2182 = vmul.f32 %v2181, 1.442695
    %v2183 = vpow.pop %v2182
    %v2184 = vadd.f32 %v2183, 1.0
    %v2185 = vrcp.pop %v2184
    %v2186 = vmul.f32 1.0, %v2185
    %v2187 = vtanh.pop %v2169
    %v2188 = vxor.u32 %v2171, 2147483648
    %v2189 = vmul.f32 %v2188, 1.442695
    %v2190 = vpow.pop %v2189
    %v2191 = vadd.f32 %v2190, 1.0
    %v2192 = vrcp.pop %v2191
    %v2193 = vmul.f32 1.0, %v2192
    %v2194 = vmul.f32 %v2186, %v1978
    %v2195 = vmul.f32 %v2180, %v2187
    %v2196 = vadd.f32 %v2194, %v2195
    %v2197 = vtanh.pop %v2196
    %v2198 = vmul.f32 %v2193, %v2197
    %2199 = vmatprep.subr.bf16.mxu0 %v536
    %2200 = vmatpush1.bf16.msra.mxu0 %v535
    %2201 = vmatprep.subr.bf16.mxu0 %v532
    %2202 = vmatpush1.bf16.msra.mxu0 %v531
    %2203 = vmatprep.subr.bf16.mxu0 %v528
    %2204 = vmatpush1.bf16.msra.mxu0 %v527
    %2205 = vmatprep.subr.bf16.mxu0 %v524
    %2206 = vmatpush1.bf16.msra.mxu0 %v523
    %2207 = vmatprep.subr.bf16.mxu0 %v520
    %2208 = vmatpush1.bf16.msra.mxu0 %v519
    %2209 = vmatprep.subr.bf16.mxu0 %v516
    %2210 = vmatpush1.bf16.msra.mxu0 %v515
    %2211 = vmatprep.subr.bf16.mxu0 %v512
    %2212 = vmatpush1.bf16.msra.mxu0 %v511
    %2213 = vmatprep.subr.bf16.mxu0 %v508
    %2214 = vmatpush1.bf16.msra.mxu0 %v507
    %2215 = vmatprep.subr.bf16.mxu0 0
    %2216 = vmatpush2.bf16.msra.mxu0 0
    %2217 = vmatprep.subr.bf16.mxu0 0
    %2218 = vmatpush2.bf16.msra.mxu0 0
    %2219 = vmatprep.subr.bf16.mxu0 0
    %2220 = vmatpush2.bf16.msra.mxu0 0
    %2221 = vmatprep.subr.bf16.mxu0 0
    %2222 = vmatpush2.bf16.msra.mxu0 0
    %2223 = vmatprep.subr.bf16.mxu0 0
    %2224 = vmatpush2.bf16.msra.mxu0 0
    %2225 = vmatprep.subr.bf16.mxu0 0
    %2226 = vmatpush2.bf16.msra.mxu0 0
    %2227 = vmatprep.subr.bf16.mxu0 0
    %2228 = vmatpush2.bf16.msra.mxu0 0
    %2229 = vmatprep.subr.bf16.mxu0 0
    %2230 = vmatpush2.bf16.msra.mxu0 0
    %2231 = vmatprep.mubr.bf16.mxu0 0
    %2232 = vmatmul.mubr.bf16.gmra.mxu0 %v2091
    %v2233 = vpop.f32.mrf.mxu0
    %v2234 = vadd.f32 0.0, %v2233
    %v2235 = vpop.f32.mrf.mxu0
    %v2236 = vadd.f32 0.0, %v2235
    %v2237 = vpop.f32.mrf.mxu0
    %v2238 = vpop.f32.mrf.mxu0
    %2239 = vdwg.mxu0
    %2240 = vmatprep.subr.bf16.mxu0 %v538
    %2241 = vmatpush1.bf16.msra.mxu0 %v537
    %2242 = vmatprep.subr.bf16.mxu0 %v534
    %2243 = vmatpush1.bf16.msra.mxu0 %v533
    %2244 = vmatprep.subr.bf16.mxu0 %v530
    %2245 = vmatpush1.bf16.msra.mxu0 %v529
    %2246 = vmatprep.subr.bf16.mxu0 %v526
    %2247 = vmatpush1.bf16.msra.mxu0 %v525
    %2248 = vmatprep.subr.bf16.mxu0 %v522
    %2249 = vmatpush1.bf16.msra.mxu0 %v521
    %2250 = vmatprep.subr.bf16.mxu0 %v518
    %2251 = vmatpush1.bf16.msra.mxu0 %v517
    %2252 = vmatprep.subr.bf16.mxu0 %v514
    %2253 = vmatpush1.bf16.msra.mxu0 %v513
    %2254 = vmatprep.subr.bf16.mxu0 %v510
    %2255 = vmatpush1.bf16.msra.mxu0 %v509
    %2256 = vmatprep.subr.bf16.mxu0 0
    %2257 = vmatpush2.bf16.msra.mxu0 0
    %2258 = vmatprep.subr.bf16.mxu0 0
    %2259 = vmatpush2.bf16.msra.mxu0 0
    %2260 = vmatprep.subr.bf16.mxu0 0
    %2261 = vmatpush2.bf16.msra.mxu0 0
    %2262 = vmatprep.subr.bf16.mxu0 0
    %2263 = vmatpush2.bf16.msra.mxu0 0
    %2264 = vmatprep.subr.bf16.mxu0 0
    %2265 = vmatpush2.bf16.msra.mxu0 0
    %2266 = vmatprep.subr.bf16.mxu0 0
    %2267 = vmatpush2.bf16.msra.mxu0 0
    %2268 = vmatprep.subr.bf16.mxu0 0
    %2269 = vmatpush2.bf16.msra.mxu0 0
    %2270 = vmatprep.subr.bf16.mxu0 0
    %2271 = vmatpush2.bf16.msra.mxu0 0
    %2272 = vmatprep.mubr.bf16.mxu0 0
    %2273 = vmatmul.mubr.bf16.gmra.mxu0 %v2091
    %v2274 = vpop.f32.mrf.mxu0
    %v2275 = vadd.f32 0.0, %v2274
    %v2276 = vpop.f32.mrf.mxu0
    %v2277 = vadd.f32 0.0, %v2276
    %v2278 = vpop.f32.mrf.mxu0
    %v2279 = vpop.f32.mrf.mxu0
    %2280 = vdwg.mxu0
    %v2281 = vadd.f32 %v212, %v2234
    %v2282 = vadd.f32 %v214, %v2236
    %v2283 = vadd.f32 %v285, %v2275
    %v2284 = vadd.f32 %v287, %v2277
    %v2285 = vxor.u32 %v2281, 2147483648
    %v2286 = vmul.f32 %v2285, 1.442695
    %v2287 = vpow.pop %v2286
    %v2288 = vadd.f32 %v2287, 1.0
    %v2289 = vrcp.pop %v2288
    %v2290 = vmul.f32 1.0, %v2289
    %v2291 = vxor.u32 %v2282, 2147483648
    %v2292 = vmul.f32 %v2291, 1.442695
    %v2293 = vpow.pop %v2292
    %v2294 = vadd.f32 %v2293, 1.0
    %v2295 = vrcp.pop %v2294
    %v2296 = vmul.f32 1.0, %v2295
    %v2297 = vtanh.pop %v2283
    %v2298 = vxor.u32 %v2284, 2147483648
    %v2299 = vmul.f32 %v2298, 1.442695
    %v2300 = vpow.pop %v2299
    %v2301 = vadd.f32 %v2300, 1.0
    %v2302 = vrcp.pop %v2301
    %v2303 = vmul.f32 1.0, %v2302
    %v2304 = vmul.f32 %v2296, %v2088
    %v2305 = vmul.f32 %v2290, %v2297
    %v2306 = vadd.f32 %v2304, %v2305
    %v2307 = vtanh.pop %v2306
    %v2308 = vmul.f32 %v2303, %v2307
    %v2309 = vpack.c.bf16 %v2308, %v2308
    %v2310 = vpack.c.bf16 %v2198, %v2198
    %2311 = vmatprep.subr.bf16.mxu0 %v904
    %2312 = vmatpush1.bf16.msra.mxu0 %v903
    %2313 = vmatprep.subr.bf16.mxu0 %v900
    %2314 = vmatpush1.bf16.msra.mxu0 %v899
    %2315 = vmatprep.subr.bf16.mxu0 %v896
    %2316 = vmatpush1.bf16.msra.mxu0 %v895
    %2317 = vmatprep.subr.bf16.mxu0 %v892
    %2318 = vmatpush1.bf16.msra.mxu0 %v891
    %2319 = vmatprep.subr.bf16.mxu0 %v888
    %2320 = vmatpush1.bf16.msra.mxu0 %v887
    %2321 = vmatprep.subr.bf16.mxu0 %v884
    %2322 = vmatpush1.bf16.msra.mxu0 %v883
    %2323 = vmatprep.subr.bf16.mxu0 %v880
    %2324 = vmatpush1.bf16.msra.mxu0 %v879
    %2325 = vmatprep.subr.bf16.mxu0 %v876
    %2326 = vmatpush1.bf16.msra.mxu0 %v875
    %2327 = vmatprep.subr.bf16.mxu0 %v936
    %2328 = vmatpush2.bf16.msra.mxu0 %v935
    %2329 = vmatprep.subr.bf16.mxu0 %v932
    %2330 = vmatpush2.bf16.msra.mxu0 %v931
    %2331 = vmatprep.subr.bf16.mxu0 %v928
    %2332 = vmatpush2.bf16.msra.mxu0 %v927
    %2333 = vmatprep.subr.bf16.mxu0 %v924
    %2334 = vmatpush2.bf16.msra.mxu0 %v923
    %2335 = vmatprep.subr.bf16.mxu0 %v920
    %2336 = vmatpush2.bf16.msra.mxu0 %v919
    %2337 = vmatprep.subr.bf16.mxu0 %v916
    %2338 = vmatpush2.bf16.msra.mxu0 %v915
    %2339 = vmatprep.subr.bf16.mxu0 %v912
    %2340 = vmatpush2.bf16.msra.mxu0 %v911
    %2341 = vmatprep.subr.bf16.mxu0 %v908
    %2342 = vmatpush2.bf16.msra.mxu0 %v907
    %2343 = vmatprep.mubr.bf16.mxu0 %v2310
    %2344 = vmatmul.mubr.bf16.gmra.mxu0 %v2309
    %v2345 = vpop.f32.mrf.mxu0
    %v2346 = vadd.f32 %v394, %v2345
    %v2347 = vpop.f32.mrf.mxu0
    %v2348 = vadd.f32 %v398, %v2347
    %v2349 = vpop.f32.mrf.mxu0
    %v2350 = vpop.f32.mrf.mxu0
    %2351 = vdwg.mxu0
    %2352 = vmatprep.subr.bf16.mxu0 %v906
    %2353 = vmatpush1.bf16.msra.mxu0 %v905
    %2354 = vmatprep.subr.bf16.mxu0 %v902
    %2355 = vmatpush1.bf16.msra.mxu0 %v901
    %2356 = vmatprep.subr.bf16.mxu0 %v898
    %2357 = vmatpush1.bf16.msra.mxu0 %v897
    %2358 = vmatprep.subr.bf16.mxu0 %v894
    %2359 = vmatpush1.bf16.msra.mxu0 %v893
    %2360 = vmatprep.subr.bf16.mxu0 %v890
    %2361 = vmatpush1.bf16.msra.mxu0 %v889
    %2362 = vmatprep.subr.bf16.mxu0 %v886
    %2363 = vmatpush1.bf16.msra.mxu0 %v885
    %2364 = vmatprep.subr.bf16.mxu0 %v882
    %2365 = vmatpush1.bf16.msra.mxu0 %v881
    %2366 = vmatprep.subr.bf16.mxu0 %v878
    %2367 = vmatpush1.bf16.msra.mxu0 %v877
    %2368 = vmatprep.subr.bf16.mxu0 %v938
    %2369 = vmatpush2.bf16.msra.mxu0 %v937
    %2370 = vmatprep.subr.bf16.mxu0 %v934
    %2371 = vmatpush2.bf16.msra.mxu0 %v933
    %2372 = vmatprep.subr.bf16.mxu0 %v930
    %2373 = vmatpush2.bf16.msra.mxu0 %v929
    %2374 = vmatprep.subr.bf16.mxu0 %v926
    %2375 = vmatpush2.bf16.msra.mxu0 %v925
    %2376 = vmatprep.subr.bf16.mxu0 %v922
    %2377 = vmatpush2.bf16.msra.mxu0 %v921
    %2378 = vmatprep.subr.bf16.mxu0 %v918
    %2379 = vmatpush2.bf16.msra.mxu0 %v917
    %2380 = vmatprep.subr.bf16.mxu0 %v914
    %2381 = vmatpush2.bf16.msra.mxu0 %v913
    %2382 = vmatprep.subr.bf16.mxu0 %v910
    %2383 = vmatpush2.bf16.msra.mxu0 %v909
    %2384 = vmatprep.mubr.bf16.mxu0 %v2310
    %2385 = vmatmul.mubr.bf16.gmra.mxu0 %v2309
    %v2386 = vpop.f32.mrf.mxu0
    %v2387 = vadd.f32 %v402, %v2386
    %v2388 = vpop.f32.mrf.mxu0
    %v2389 = vadd.f32 %v406, %v2388
    %v2390 = vpop.f32.mrf.mxu0
    %v2391 = vpop.f32.mrf.mxu0
    %2392 = vdwg.mxu0
    %v2393 = vxor.u32 %v2346, 2147483648
    %v2394 = vmul.f32 %v2393, 1.442695
    %v2395 = vpow.pop %v2394
    %v2396 = vadd.f32 %v2395, 1.0
    %v2397 = vrcp.pop %v2396
    %v2398 = vmul.f32 1.0, %v2397
    %v2399 = vxor.u32 %v2348, 2147483648
    %v2400 = vmul.f32 %v2399, 1.442695
    %v2401 = vpow.pop %v2400
    %v2402 = vadd.f32 %v2401, 1.0
    %v2403 = vrcp.pop %v2402
    %v2404 = vmul.f32 1.0, %v2403
    %v2405 = vtanh.pop %v2387
    %v2406 = vxor.u32 %v2389, 2147483648
    %v2407 = vmul.f32 %v2406, 1.442695
    %v2408 = vpow.pop %v2407
    %v2409 = vadd.f32 %v2408, 1.0
    %v2410 = vrcp.pop %v2409
    %v2411 = vmul.f32 1.0, %v2410
    %v2412 = vmul.f32 %v2404, %v2196
    %v2413 = vmul.f32 %v2398, %v2405
    %v2414 = vadd.f32 %v2412, %v2413
    %v2415 = vtanh.pop %v2414
    %v2416 = vmul.f32 %v2411, %v2415
    %2417 = vmatprep.subr.bf16.mxu0 %v536
    %2418 = vmatpush1.bf16.msra.mxu0 %v535
    %2419 = vmatprep.subr.bf16.mxu0 %v532
    %2420 = vmatpush1.bf16.msra.mxu0 %v531
    %2421 = vmatprep.subr.bf16.mxu0 %v528
    %2422 = vmatpush1.bf16.msra.mxu0 %v527
    %2423 = vmatprep.subr.bf16.mxu0 %v524
    %2424 = vmatpush1.bf16.msra.mxu0 %v523
    %2425 = vmatprep.subr.bf16.mxu0 %v520
    %2426 = vmatpush1.bf16.msra.mxu0 %v519
    %2427 = vmatprep.subr.bf16.mxu0 %v516
    %2428 = vmatpush1.bf16.msra.mxu0 %v515
    %2429 = vmatprep.subr.bf16.mxu0 %v512
    %2430 = vmatpush1.bf16.msra.mxu0 %v511
    %2431 = vmatprep.subr.bf16.mxu0 %v508
    %2432 = vmatpush1.bf16.msra.mxu0 %v507
    %2433 = vmatprep.subr.bf16.mxu0 0
    %2434 = vmatpush2.bf16.msra.mxu0 0
    %2435 = vmatprep.subr.bf16.mxu0 0
    %2436 = vmatpush2.bf16.msra.mxu0 0
    %2437 = vmatprep.subr.bf16.mxu0 0
    %2438 = vmatpush2.bf16.msra.mxu0 0
    %2439 = vmatprep.subr.bf16.mxu0 0
    %2440 = vmatpush2.bf16.msra.mxu0 0
    %2441 = vmatprep.subr.bf16.mxu0 0
    %2442 = vmatpush2.bf16.msra.mxu0 0
    %2443 = vmatprep.subr.bf16.mxu0 0
    %2444 = vmatpush2.bf16.msra.mxu0 0
    %2445 = vmatprep.subr.bf16.mxu0 0
    %2446 = vmatpush2.bf16.msra.mxu0 0
    %2447 = vmatprep.subr.bf16.mxu0 0
    %2448 = vmatpush2.bf16.msra.mxu0 0
    %2449 = vmatprep.mubr.bf16.mxu0 0
    %2450 = vmatmul.mubr.bf16.gmra.mxu0 %v2309
    %v2451 = vpop.f32.mrf.mxu0
    %v2452 = vadd.f32 0.0, %v2451
    %v2453 = vpop.f32.mrf.mxu0
    %v2454 = vadd.f32 0.0, %v2453
    %v2455 = vpop.f32.mrf.mxu0
    %v2456 = vpop.f32.mrf.mxu0
    %2457 = vdwg.mxu0
    %2458 = vmatprep.subr.bf16.mxu0 %v538
    %2459 = vmatpush1.bf16.msra.mxu0 %v537
    %2460 = vmatprep.subr.bf16.mxu0 %v534
    %2461 = vmatpush1.bf16.msra.mxu0 %v533
    %2462 = vmatprep.subr.bf16.mxu0 %v530
    %2463 = vmatpush1.bf16.msra.mxu0 %v529
    %2464 = vmatprep.subr.bf16.mxu0 %v526
    %2465 = vmatpush1.bf16.msra.mxu0 %v525
    %2466 = vmatprep.subr.bf16.mxu0 %v522
    %2467 = vmatpush1.bf16.msra.mxu0 %v521
    %2468 = vmatprep.subr.bf16.mxu0 %v518
    %2469 = vmatpush1.bf16.msra.mxu0 %v517
    %2470 = vmatprep.subr.bf16.mxu0 %v514
    %2471 = vmatpush1.bf16.msra.mxu0 %v513
    %2472 = vmatprep.subr.bf16.mxu0 %v510
    %2473 = vmatpush1.bf16.msra.mxu0 %v509
    %2474 = vmatprep.subr.bf16.mxu0 0
    %2475 = vmatpush2.bf16.msra.mxu0 0
    %2476 = vmatprep.subr.bf16.mxu0 0
    %2477 = vmatpush2.bf16.msra.mxu0 0
    %2478 = vmatprep.subr.bf16.mxu0 0
    %2479 = vmatpush2.bf16.msra.mxu0 0
    %2480 = vmatprep.subr.bf16.mxu0 0
    %2481 = vmatpush2.bf16.msra.mxu0 0
    %2482 = vmatprep.subr.bf16.mxu0 0
    %2483 = vmatpush2.bf16.msra.mxu0 0
    %2484 = vmatprep.subr.bf16.mxu0 0
    %2485 = vmatpush2.bf16.msra.mxu0 0
    %2486 = vmatprep.subr.bf16.mxu0 0
    %2487 = vmatpush2.bf16.msra.mxu0 0
    %2488 = vmatprep.subr.bf16.mxu0 0
    %2489 = vmatpush2.bf16.msra.mxu0 0
    %2490 = vmatprep.mubr.bf16.mxu0 0
    %2491 = vmatmul.mubr.bf16.gmra.mxu0 %v2309
    %v2492 = vpop.f32.mrf.mxu0
    %v2493 = vadd.f32 0.0, %v2492
    %v2494 = vpop.f32.mrf.mxu0
    %v2495 = vadd.f32 0.0, %v2494
    %v2496 = vpop.f32.mrf.mxu0
    %v2497 = vpop.f32.mrf.mxu0
    %2498 = vdwg.mxu0
    %v2499 = vadd.f32 %v216, %v2452
    %v2500 = vadd.f32 %v218, %v2454
    %v2501 = vadd.f32 %v289, %v2493
    %v2502 = vadd.f32 %v291, %v2495
    %v2503 = vxor.u32 %v2499, 2147483648
    %v2504 = vmul.f32 %v2503, 1.442695
    %v2505 = vpow.pop %v2504
    %v2506 = vadd.f32 %v2505, 1.0
    %v2507 = vrcp.pop %v2506
    %v2508 = vmul.f32 1.0, %v2507
    %v2509 = vxor.u32 %v2500, 2147483648
    %v2510 = vmul.f32 %v2509, 1.442695
    %v2511 = vpow.pop %v2510
    %v2512 = vadd.f32 %v2511, 1.0
    %v2513 = vrcp.pop %v2512
    %v2514 = vmul.f32 1.0, %v2513
    %v2515 = vtanh.pop %v2501
    %v2516 = vxor.u32 %v2502, 2147483648
    %v2517 = vmul.f32 %v2516, 1.442695
    %v2518 = vpow.pop %v2517
    %v2519 = vadd.f32 %v2518, 1.0
    %v2520 = vrcp.pop %v2519
    %v2521 = vmul.f32 1.0, %v2520
    %v2522 = vmul.f32 %v2514, %v2306
    %v2523 = vmul.f32 %v2508, %v2515
    %v2524 = vadd.f32 %v2522, %v2523
    %v2525 = vtanh.pop %v2524
    %v2526 = vmul.f32 %v2521, %v2525
    %v2527 = vpack.c.bf16 %v2526, %v2526
    %v2528 = vpack.c.bf16 %v2416, %v2416
    %2529 = vmatprep.subr.bf16.mxu0 %v904
    %2530 = vmatpush1.bf16.msra.mxu0 %v903
    %2531 = vmatprep.subr.bf16.mxu0 %v900
    %2532 = vmatpush1.bf16.msra.mxu0 %v899
    %2533 = vmatprep.subr.bf16.mxu0 %v896
    %2534 = vmatpush1.bf16.msra.mxu0 %v895
    %2535 = vmatprep.subr.bf16.mxu0 %v892
    %2536 = vmatpush1.bf16.msra.mxu0 %v891
    %2537 = vmatprep.subr.bf16.mxu0 %v888
    %2538 = vmatpush1.bf16.msra.mxu0 %v887
    %2539 = vmatprep.subr.bf16.mxu0 %v884
    %2540 = vmatpush1.bf16.msra.mxu0 %v883
    %2541 = vmatprep.subr.bf16.mxu0 %v880
    %2542 = vmatpush1.bf16.msra.mxu0 %v879
    %2543 = vmatprep.subr.bf16.mxu0 %v876
    %2544 = vmatpush1.bf16.msra.mxu0 %v875
    %2545 = vmatprep.subr.bf16.mxu0 %v936
    %2546 = vmatpush2.bf16.msra.mxu0 %v935
    %2547 = vmatprep.subr.bf16.mxu0 %v932
    %2548 = vmatpush2.bf16.msra.mxu0 %v931
    %2549 = vmatprep.subr.bf16.mxu0 %v928
    %2550 = vmatpush2.bf16.msra.mxu0 %v927
    %2551 = vmatprep.subr.bf16.mxu0 %v924
    %2552 = vmatpush2.bf16.msra.mxu0 %v923
    %2553 = vmatprep.subr.bf16.mxu0 %v920
    %2554 = vmatpush2.bf16.msra.mxu0 %v919
    %2555 = vmatprep.subr.bf16.mxu0 %v916
    %2556 = vmatpush2.bf16.msra.mxu0 %v915
    %2557 = vmatprep.subr.bf16.mxu0 %v912
    %2558 = vmatpush2.bf16.msra.mxu0 %v911
    %2559 = vmatprep.subr.bf16.mxu0 %v908
    %2560 = vmatpush2.bf16.msra.mxu0 %v907
    %2561 = vmatprep.mubr.bf16.mxu0 %v2528
    %2562 = vmatmul.mubr.bf16.gmra.mxu0 %v2527
    %v2563 = vpop.f32.mrf.mxu0
    %v2564 = vadd.f32 %v394, %v2563
    %v2565 = vpop.f32.mrf.mxu0
    %v2566 = vadd.f32 %v398, %v2565
    %v2567 = vpop.f32.mrf.mxu0
    %v2568 = vpop.f32.mrf.mxu0
    %2569 = vdwg.mxu0
    %2570 = vmatprep.subr.bf16.mxu0 %v906
    %2571 = vmatpush1.bf16.msra.mxu0 %v905
    %2572 = vmatprep.subr.bf16.mxu0 %v902
    %2573 = vmatpush1.bf16.msra.mxu0 %v901
    %2574 = vmatprep.subr.bf16.mxu0 %v898
    %2575 = vmatpush1.bf16.msra.mxu0 %v897
    %2576 = vmatprep.subr.bf16.mxu0 %v894
    %2577 = vmatpush1.bf16.msra.mxu0 %v893
    %2578 = vmatprep.subr.bf16.mxu0 %v890
    %2579 = vmatpush1.bf16.msra.mxu0 %v889
    %2580 = vmatprep.subr.bf16.mxu0 %v886
    %2581 = vmatpush1.bf16.msra.mxu0 %v885
    %2582 = vmatprep.subr.bf16.mxu0 %v882
    %2583 = vmatpush1.bf16.msra.mxu0 %v881
    %2584 = vmatprep.subr.bf16.mxu0 %v878
    %2585 = vmatpush1.bf16.msra.mxu0 %v877
    %2586 = vmatprep.subr.bf16.mxu0 %v938
    %2587 = vmatpush2.bf16.msra.mxu0 %v937
    %2588 = vmatprep.subr.bf16.mxu0 %v934
    %2589 = vmatpush2.bf16.msra.mxu0 %v933
    %2590 = vmatprep.subr.bf16.mxu0 %v930
    %2591 = vmatpush2.bf16.msra.mxu0 %v929
    %2592 = vmatprep.subr.bf16.mxu0 %v926
    %2593 = vmatpush2.bf16.msra.mxu0 %v925
    %2594 = vmatprep.subr.bf16.mxu0 %v922
    %2595 = vmatpush2.bf16.msra.mxu0 %v921
    %2596 = vmatprep.subr.bf16.mxu0 %v918
    %2597 = vmatpush2.bf16.msra.mxu0 %v917
    %2598 = vmatprep.subr.bf16.mxu0 %v914
    %2599 = vmatpush2.bf16.msra.mxu0 %v913
    %2600 = vmatprep.subr.bf16.mxu0 %v910
    %2601 = vmatpush2.bf16.msra.mxu0 %v909
    %2602 = vmatprep.mubr.bf16.mxu0 %v2528
    %2603 = vmatmul.mubr.bf16.gmra.mxu0 %v2527
    %v2604 = vpop.f32.mrf.mxu0
    %v2605 = vadd.f32 %v402, %v2604
    %v2606 = vpop.f32.mrf.mxu0
    %v2607 = vadd.f32 %v406, %v2606
    %v2608 = vpop.f32.mrf.mxu0
    %v2609 = vpop.f32.mrf.mxu0
    %2610 = vdwg.mxu0
    %v2611 = vxor.u32 %v2564, 2147483648
    %v2612 = vmul.f32 %v2611, 1.442695
    %v2613 = vpow.pop %v2612
    %v2614 = vadd.f32 %v2613, 1.0
    %v2615 = vrcp.pop %v2614
    %v2616 = vmul.f32 1.0, %v2615
    %v2617 = vxor.u32 %v2566, 2147483648
    %v2618 = vmul.f32 %v2617, 1.442695
    %v2619 = vpow.pop %v2618
    %v2620 = vadd.f32 %v2619, 1.0
    %v2621 = vrcp.pop %v2620
    %v2622 = vmul.f32 1.0, %v2621
    %v2623 = vtanh.pop %v2605
    %v2624 = vxor.u32 %v2607, 2147483648
    %v2625 = vmul.f32 %v2624, 1.442695
    %v2626 = vpow.pop %v2625
    %v2627 = vadd.f32 %v2626, 1.0
    %v2628 = vrcp.pop %v2627
    %v2629 = vmul.f32 1.0, %v2628
    %v2630 = vmul.f32 %v2622, %v2414
    %v2631 = vmul.f32 %v2616, %v2623
    %v2632 = vadd.f32 %v2630, %v2631
    %v2633 = vtanh.pop %v2632
    %v2634 = vmul.f32 %v2629, %v2633
    %v2635 = vmax.f32 %v2634, 0.0
    %v2636 = vld [vmem:[%s6] sm:$0x1]
    %v2638 = vlaneseq
    %v2639 = vshrl.u32 %v2638, 7
    %v2640 = vsub.s32 0, %v2639
    %v2641 = vrot.slane %v2636, %v2640
    %v2643 = vmul.f32 %v2635, %v2641
    %2644 = vadd.xlane.f32.xlu0 %v2643
    %v2645 = vpop.xlane.xlu0 %2644
    %v2646 = vld [vmem:[#allocation2] sm:$0x1]
    %v2648 = vlaneseq
    %v2649 = vshrl.u32 %v2648, 7
    %v2650 = vsub.s32 0, %v2649
    %v2651 = vrot.slane %v2646, %v2650
    %v2653 = vadd.f32 %v2645, %v2651
    %v2654 = vxor.u32 %v2653, 2147483648
    %v2655 = vmul.f32 %v2654, 1.442695
    %v2656 = vpow.pop %v2655
    %v2657 = vadd.f32 %v2656, 1.0
    %v2658 = vrcp.pop %v2657
    %v2659 = vmul.f32 1.0, %v2658
    %vm2660 = vcmask 7168
    %2661 = vst.msk [vmem:[%s8] sm:$0xff] %vm2660, %v2659
    // Predicated region
    $region42: #{tpu_custom_call.1} parent=1 // pred_check
      _
    $region43: #{tpu_custom_call.1} parent=1 // pred_check_branch
      %2663 = sbr.rel (0) target = $region45
    $region44: #{tpu_custom_call.1} parent=1 // pred_region
      _
    $region45: #{tpu_custom_call.1} parent=1 // pred_fallthru
      _
    // Predicated region
    $region46: #{tpu_custom_call.1} parent=1 // pred_check
      _
    $region47: #{tpu_custom_call.1} parent=1 // pred_check_branch
      %2665 = sbr.rel (0) target = $region49
    $region48: #{tpu_custom_call.1} parent=1 // pred_region
      _
    $region49: #{tpu_custom_call.1} parent=1 // pred_fallthru
      _
    %2666 = vsyncpa [#allocation4], 1
    %2667 = vsyncpa [#allocation6], 1

</llo_original>
